<compile_context>
chip_gen: v7x
topology: tpu7x:2x2x1
jax: 0.10.0
libtpu: 0.0.40
codegen_flags: <defaults>
</compile_context>

<pallas_src>
import jax
import jax.numpy as jnp
from jax.experimental import pallas as pl
from jax.experimental.pallas import tpu as pltpu

IN_DIM = 768
HID1 = 512
HID2 = 128
LANE = 128
SUBLANE = 16  # keep batch tiles multiples of 16 (bf16 sublane packing inside)


def _round_up(x, m):
    return (x + m - 1) // m * m


def mlp_kernel(x_ref, w1_ref, b1_ref, w2_ref, b2_ref, w3_ref, b3_ref, o_ref):
    # x arrives f32 from HBM; cast to bf16 on the VPU here (overlaps with MXU)
    # instead of paying a separate wrapper-side HBM cast pass.
    x = x_ref[...].astype(jnp.bfloat16)
    # fc1: bf16 MXU matmul with f32 accumulation; bias + ReLU in f32
    h = jnp.dot(x, w1_ref[...], preferred_element_type=jnp.float32)
    h = jnp.maximum(h + b1_ref[...], 0.0)
    # fc2
    h = jnp.dot(h.astype(jnp.bfloat16), w2_ref[...],
                preferred_element_type=jnp.float32)
    h = jnp.maximum(h + b2_ref[...], 0.0)
    # out (padded to a 128-lane-dense width; padded columns are zero)
    h = jnp.dot(h.astype(jnp.bfloat16), w3_ref[...],
                preferred_element_type=jnp.float32)
    o_ref[...] = jnp.maximum(h + b3_ref[...], 0.0).astype(o_ref.dtype)


def pack_params(params):
    """One-time packing: bf16 weights, f32 bias rows, layer-3 padded to 128 lanes."""
    num_elements = params["w3"].shape[1]
    n_pad = _round_up(num_elements, LANE)
    w3 = jnp.zeros((HID2, n_pad), jnp.float32).at[:, :num_elements].set(params["w3"])
    b3 = jnp.zeros((n_pad,), jnp.float32).at[:num_elements].set(params["b3"])
    return dict(
        w1=params["w1"].astype(jnp.bfloat16),
        b1=params["b1"].reshape(1, HID1).astype(jnp.float32),
        w2=params["w2"].astype(jnp.bfloat16),
        b2=params["b2"].reshape(1, HID2).astype(jnp.float32),
        w3=w3.astype(jnp.bfloat16),
        b3=b3.reshape(1, n_pad).astype(jnp.float32),
    )


def _device_kind():
    try:
        return jax.devices()[0].device_kind.lower()
    except Exception:
        return ""


def _tuning():
    kind = _device_kind()
    if "v7" in kind:
        # 64 MiB VMEM per TC, 2 TCs share HBM: 1024-row tile per TC
        # (=> 2048 rows per chip step) keeps VMEM well under budget.
        return dict(batch_tile=1024, vmem_limit=48 << 20, two_cores=True)
    if "v6" in kind:
        # 128 MiB VMEM, single TC: big tiles amortize the ~0.35us/step overhead.
        return dict(batch_tile=2048, vmem_limit=64 << 20, two_cores=False)
    # v5e / unknown: conservative tile; raise the 16 MiB scoped-VMEM default.
    return dict(batch_tile=1024, vmem_limit=32 << 20, two_cores=False)


def _choose_batch_tile(B, batch_tile, two_cores):
    tb = min(batch_tile, _round_up(B, SUBLANE))
    tb = max(SUBLANE, (tb // SUBLANE) * SUBLANE)
    # Only split for >=2 "parallel" grid steps on chips with 2 TensorCores (v7x);
    # on single-TC v5e/v6e splitting just adds step overhead.
    if two_cores and pl.cdiv(B, tb) < 2 and tb >= 2 * SUBLANE:
        tb = max(SUBLANE, _round_up(tb // 2, SUBLANE))
    return tb


def _build_call(B, tb, n_pad, vmem_limit, single_buffer_weights):
    weight_kw = {}
    if single_buffer_weights:
        # Constant index_map => resident across grid steps; no need to
        # double-buffer the weights/biases (frees ~1 MiB of VMEM).
        weight_kw = dict(pipeline_mode=pl.Buffered(1))
    grid = (pl.cdiv(B, tb),)
    return pl.pallas_call(
        mlp_kernel,
        out_shape=jax.ShapeDtypeStruct((B, n_pad), jnp.float32),
        grid_spec=pl.GridSpec(
            grid=grid,
            in_specs=[
                pl.BlockSpec((tb, IN_DIM), lambda i: (i, 0)),                 # x (f32)
                pl.BlockSpec((IN_DIM, HID1), lambda i: (0, 0), **weight_kw),  # w1
                pl.BlockSpec((1, HID1), lambda i: (0, 0), **weight_kw),       # b1
                pl.BlockSpec((HID1, HID2), lambda i: (0, 0), **weight_kw),    # w2
                pl.BlockSpec((1, HID2), lambda i: (0, 0), **weight_kw),       # b2
                pl.BlockSpec((HID2, n_pad), lambda i: (0, 0), **weight_kw),   # w3 (padded)
                pl.BlockSpec((1, n_pad), lambda i: (0, 0), **weight_kw),      # b3 (padded)
            ],
            out_specs=pl.BlockSpec((tb, n_pad), lambda i: (i, 0)),
        ),
        compiler_params=pltpu.CompilerParams(
            dimension_semantics=("parallel",),
            vmem_limit_bytes=vmem_limit,
        ),
    )


def third_model_forward(x, packed, num_elements, *, batch_tile=None,
                        slice_output=True):
    """x: [B, 768] float32. packed: output of pack_params().

    Returns [B, num_elements] f32 (or the lane-dense padded [B, 128] output if
    slice_output=False, which skips one HBM pass for consumers that can read it).
    """
    B, D = x.shape
    assert D == IN_DIM
    n_pad = packed["w3"].shape[1]

    tune = _tuning()
    tb = _choose_batch_tile(
        B, batch_tile if batch_tile is not None else tune["batch_tile"],
        tune["two_cores"])

    args = (jnp.asarray(x, jnp.float32), packed["w1"], packed["b1"],
            packed["w2"], packed["b2"], packed["w3"], packed["b3"])
    try:
        out = _build_call(B, tb, n_pad, tune["vmem_limit"], True)(*args)
    except Exception:
        # Fallback if pipeline_mode=pl.Buffered(1) isn't supported by this
        # JAX/Mosaic version: default (double-buffered) resident weights.
        out = _build_call(B, tb, n_pad, tune["vmem_limit"], False)(*args)

    if slice_output and n_pad != num_elements:
        out = out[:, :num_elements]
    return out


def init_params(key, num_elements):
    """Deterministic init mimicking nn.Linear's default U(-1/sqrt(fan_in), +)."""
    ks = jax.random.split(key, 6)

    def linear(kw, kb, fan_in, fan_out):
        bound = 1.0 / (fan_in ** 0.5)
        w = jax.random.uniform(kw, (fan_in, fan_out), jnp.float32, -bound, bound)
        b = jax.random.uniform(kb, (fan_out,), jnp.float32, -bound, bound)
        return w, b

    w1, b1 = linear(ks[0], ks[1], IN_DIM, HID1)
    w2, b2 = linear(ks[2], ks[3], HID1, HID2)
    w3, b3 = linear(ks[4], ks[5], HID2, num_elements)
    return dict(w1=w1, b1=b1, w2=w2, b2=b2, w3=w3, b3=b3)


def reference_forward(x, p):
    # Same numerics as the kernel: bf16 operands, f32 accumulation, f32 epilogue.
    # (bf16 operands are an intentional precision choice; accumulation is f32.)
    bf = jnp.bfloat16
    h = jnp.dot(x.astype(bf), p["w1"].astype(bf), preferred_element_type=jnp.float32)
    h = jnp.maximum(h + p["b1"], 0.0)
    h = jnp.dot(h.astype(bf), p["w2"].astype(bf), preferred_element_type=jnp.float32)
    h = jnp.maximum(h + p["b2"], 0.0)
    h = jnp.dot(h.astype(bf), p["w3"].astype(bf), preferred_element_type=jnp.float32)
    return jnp.maximum(h + p["b3"], 0.0)


if __name__ == "__main__":
    # TODO(synk): the SentenceTransformer embedding in __init__ is unused in
    # forward(); the input here is the already-embedded 768-dim vector batch.
    key = jax.random.PRNGKey(0)
    k_x, k_p = jax.random.split(key)

    batch = 8
    num_elements = 32
    x = jax.random.normal(k_x, (batch, IN_DIM), jnp.float32)
    params = init_params(k_p, num_elements)
    packed = pack_params(params)

    out = third_model_forward(x, packed, num_elements)
    out = jax.block_until_ready(out)

    ref = reference_forward(x, params)
    assert out.shape == (batch, num_elements)
    assert jnp.allclose(out, ref, atol=1e-2, rtol=1e-2), "mismatch vs reference"
    print("KERNEL_OK")
</pallas_src>

<mosaic_0001>
module attributes {stable_mosaic.version = 11 : i64} {
  func.func @mlp_kernel(%arg0: i32, %arg1: memref<16x768xf32, #tpu.memory_space<vmem>>, %arg2: memref<768x512xbf16, #tpu.memory_space<vmem>>, %arg3: memref<1x512xf32, #tpu.memory_space<vmem>>, %arg4: memref<512x128xbf16, #tpu.memory_space<vmem>>, %arg5: memref<1x128xf32, #tpu.memory_space<vmem>>, %arg6: memref<128x128xbf16, #tpu.memory_space<vmem>>, %arg7: memref<1x128xf32, #tpu.memory_space<vmem>>, %arg8: memref<16x128xf32, #tpu.memory_space<vmem>>) attributes {dimension_semantics = [#tpu.dimension_semantics<parallel>], iteration_bounds = array<i64: 1>, scalar_prefetch = 0 : i64, scratch_operands = 0 : i64, tpu.core_type = #tpu.core_type<tc>, window_params = [{transform_indices = @transform_0, window_bounds = array<i64: 16, 768>}, {pipeline_mode = #tpu.pipeline_mode<synchronous>, transform_indices = @transform_1, window_bounds = array<i64: 768, 512>}, {pipeline_mode = #tpu.pipeline_mode<synchronous>, transform_indices = @transform_2, window_bounds = array<i64: 1, 512>}, {pipeline_mode = #tpu.pipeline_mode<synchronous>, transform_indices = @transform_3, window_bounds = array<i64: 512, 128>}, {pipeline_mode = #tpu.pipeline_mode<synchronous>, transform_indices = @transform_4, window_bounds = array<i64: 1, 128>}, {pipeline_mode = #tpu.pipeline_mode<synchronous>, transform_indices = @transform_5, window_bounds = array<i64: 128, 128>}, {pipeline_mode = #tpu.pipeline_mode<synchronous>, transform_indices = @transform_6, window_bounds = array<i64: 1, 128>}, {transform_indices = @transform_7, window_bounds = array<i64: 16, 128>}]} {
    %c0 = arith.constant 0 : index
    %c0_0 = arith.constant 0 : index
    %0 = vector.load %arg1[%c0, %c0_0] : memref<16x768xf32, #tpu.memory_space<vmem>>, vector<16x768xf32>
    %1 = arith.truncf %0 : vector<16x768xf32> to vector<16x768xbf16>
    %c0_1 = arith.constant 0 : index
    %c0_2 = arith.constant 0 : index
    %2 = vector.load %arg2[%c0_1, %c0_2] : memref<768x512xbf16, #tpu.memory_space<vmem>>, vector<768x512xbf16>
    %cst = arith.constant dense<0.000000e+00> : vector<16x512xf32>
    %3 = tpu.matmul %1, %2, %cst {dimension_numbers = #tpu.dot_dimension_numbers<[1], [0], [0], [1], [0, 0, 1, 1], [], []>} : vector<16x768xbf16>, vector<768x512xbf16>, vector<16x512xf32> -> vector<16x512xf32>
    %c0_3 = arith.constant 0 : index
    %c0_4 = arith.constant 0 : index
    %4 = vector.load %arg3[%c0_3, %c0_4] : memref<1x512xf32, #tpu.memory_space<vmem>>, vector<1x512xf32>
    %5 = vector.broadcast %4 : vector<1x512xf32> to vector<16x512xf32>
    %6 = arith.addf %3, %5 : vector<16x512xf32>
    %cst_5 = arith.constant 0.000000e+00 : f32
    %7 = vector.broadcast %cst_5 : f32 to vector<16x512xf32>
    %8 = arith.maximumf %6, %7 : vector<16x512xf32>
    %9 = arith.truncf %8 : vector<16x512xf32> to vector<16x512xbf16>
    %c0_6 = arith.constant 0 : index
    %c0_7 = arith.constant 0 : index
    %10 = vector.load %arg4[%c0_6, %c0_7] : memref<512x128xbf16, #tpu.memory_space<vmem>>, vector<512x128xbf16>
    %cst_8 = arith.constant dense<0.000000e+00> : vector<16x128xf32>
    %11 = tpu.matmul %9, %10, %cst_8 {dimension_numbers = #tpu.dot_dimension_numbers<[1], [0], [0], [1], [0, 0, 1, 1], [], []>} : vector<16x512xbf16>, vector<512x128xbf16>, vector<16x128xf32> -> vector<16x128xf32>
    %c0_9 = arith.constant 0 : index
    %c0_10 = arith.constant 0 : index
    %12 = vector.load %arg5[%c0_9, %c0_10] : memref<1x128xf32, #tpu.memory_space<vmem>>, vector<1x128xf32>
    %13 = vector.broadcast %12 : vector<1x128xf32> to vector<16x128xf32>
    %14 = arith.addf %11, %13 : vector<16x128xf32>
    %cst_11 = arith.constant 0.000000e+00 : f32
    %15 = vector.broadcast %cst_11 : f32 to vector<16x128xf32>
    %16 = arith.maximumf %14, %15 : vector<16x128xf32>
    %17 = arith.truncf %16 : vector<16x128xf32> to vector<16x128xbf16>
    %c0_12 = arith.constant 0 : index
    %c0_13 = arith.constant 0 : index
    %18 = vector.load %arg6[%c0_12, %c0_13] : memref<128x128xbf16, #tpu.memory_space<vmem>>, vector<128x128xbf16>
    %cst_14 = arith.constant dense<0.000000e+00> : vector<16x128xf32>
    %19 = tpu.matmul %17, %18, %cst_14 {dimension_numbers = #tpu.dot_dimension_numbers<[1], [0], [0], [1], [0, 0, 1, 1], [], []>} : vector<16x128xbf16>, vector<128x128xbf16>, vector<16x128xf32> -> vector<16x128xf32>
    %c0_15 = arith.constant 0 : index
    %c0_16 = arith.constant 0 : index
    %20 = vector.load %arg7[%c0_15, %c0_16] : memref<1x128xf32, #tpu.memory_space<vmem>>, vector<1x128xf32>
    %21 = vector.broadcast %20 : vector<1x128xf32> to vector<16x128xf32>
    %22 = arith.addf %19, %21 : vector<16x128xf32>
    %cst_17 = arith.constant 0.000000e+00 : f32
    %23 = vector.broadcast %cst_17 : f32 to vector<16x128xf32>
    %24 = arith.maximumf %22, %23 : vector<16x128xf32>
    %c0_18 = arith.constant 0 : index
    %c0_19 = arith.constant 0 : index
    %25 = vector.load %arg8[%c0_18, %c0_19] : memref<16x128xf32, #tpu.memory_space<vmem>>, vector<16x128xf32>
    tpu.vector_store %arg8[%c0_18, %c0_19], %24 {strides = array<i32>} : memref<16x128xf32, #tpu.memory_space<vmem>>, vector<16x128xf32>,
    return
  }
  func.func @transform_0(%arg0: i32) -> (i32, i32) {
    %c0_i32 = arith.constant 0 : i32
    %c0_i32_0 = arith.constant 0 : i32
    return %arg0, %c0_i32 : i32, i32
  }
  func.func @transform_1(%arg0: i32) -> (i32, i32) {
    %c0_i32 = arith.constant 0 : i32
    %c0_i32_0 = arith.constant 0 : i32
    %c0_i32_1 = arith.constant 0 : i32
    return %c0_i32, %c0_i32_0 : i32, i32
  }
  func.func @transform_2(%arg0: i32) -> (i32, i32) {
    %c0_i32 = arith.constant 0 : i32
    %c0_i32_0 = arith.constant 0 : i32
    %c0_i32_1 = arith.constant 0 : i32
    return %c0_i32, %c0_i32_0 : i32, i32
  }
  func.func @transform_3(%arg0: i32) -> (i32, i32) {
    %c0_i32 = arith.constant 0 : i32
    %c0_i32_0 = arith.constant 0 : i32
    %c0_i32_1 = arith.constant 0 : i32
    return %c0_i32, %c0_i32_0 : i32, i32
  }
  func.func @transform_4(%arg0: i32) -> (i32, i32) {
    %c0_i32 = arith.constant 0 : i32
    %c0_i32_0 = arith.constant 0 : i32
    %c0_i32_1 = arith.constant 0 : i32
    return %c0_i32, %c0_i32_0 : i32, i32
  }
  func.func @transform_5(%arg0: i32) -> (i32, i32) {
    %c0_i32 = arith.constant 0 : i32
    %c0_i32_0 = arith.constant 0 : i32
    %c0_i32_1 = arith.constant 0 : i32
    return %c0_i32, %c0_i32_0 : i32, i32
  }
  func.func @transform_6(%arg0: i32) -> (i32, i32) {
    %c0_i32 = arith.constant 0 : i32
    %c0_i32_0 = arith.constant 0 : i32
    %c0_i32_1 = arith.constant 0 : i32
    return %c0_i32, %c0_i32_0 : i32, i32
  }
  func.func @transform_7(%arg0: i32) -> (i32, i32) {
    %c0_i32 = arith.constant 0 : i32
    %c0_i32_0 = arith.constant 0 : i32
    return %arg0, %c0_i32 : i32, i32
  }
}

module attributes {stable_mosaic.version = 11 : i64} {
  func.func @mlp_kernel(%arg0: i32, %arg1: memref<16x768xf32, #tpu.memory_space<vmem>>, %arg2: memref<768x512xbf16, #tpu.memory_space<vmem>>, %arg3: memref<1x512xf32, #tpu.memory_space<vmem>>, %arg4: memref<512x128xbf16, #tpu.memory_space<vmem>>, %arg5: memref<1x128xf32, #tpu.memory_space<vmem>>, %arg6: memref<128x128xbf16, #tpu.memory_space<vmem>>, %arg7: memref<1x128xf32, #tpu.memory_space<vmem>>, %arg8: memref<16x128xf32, #tpu.memory_space<vmem>>) attributes {dimension_semantics = [#tpu.dimension_semantics<parallel>], iteration_bounds = array<i64: 1>, scalar_prefetch = 0 : i64, scratch_operands = 0 : i64, tpu.core_type = #tpu.core_type<tc>, window_params = [{transform_indices = @transform_0, window_bounds = array<i64: 16, 768>}, {pipeline_mode = #tpu.pipeline_mode<synchronous>, transform_indices = @transform_1, window_bounds = array<i64: 768, 512>}, {pipeline_mode = #tpu.pipeline_mode<synchronous>, transform_indices = @transform_2, window_bounds = array<i64: 1, 512>}, {pipeline_mode = #tpu.pipeline_mode<synchronous>, transform_indices = @transform_3, window_bounds = array<i64: 512, 128>}, {pipeline_mode = #tpu.pipeline_mode<synchronous>, transform_indices = @transform_4, window_bounds = array<i64: 1, 128>}, {pipeline_mode = #tpu.pipeline_mode<synchronous>, transform_indices = @transform_5, window_bounds = array<i64: 128, 128>}, {pipeline_mode = #tpu.pipeline_mode<synchronous>, transform_indices = @transform_6, window_bounds = array<i64: 1, 128>}, {transform_indices = @transform_7, window_bounds = array<i64: 16, 128>}]} {
    %c0 = arith.constant 0 : index
    %c0_0 = arith.constant 0 : index
    %0 = vector.load %arg1[%c0, %c0_0] : memref<16x768xf32, #tpu.memory_space<vmem>>, vector<16x768xf32>
    %1 = arith.truncf %0 : vector<16x768xf32> to vector<16x768xbf16>
    %c0_1 = arith.constant 0 : index
    %c0_2 = arith.constant 0 : index
    %2 = vector.load %arg2[%c0_1, %c0_2] : memref<768x512xbf16, #tpu.memory_space<vmem>>, vector<768x512xbf16>
    %cst = arith.constant dense<0.000000e+00> : vector<16x512xf32>
    %3 = tpu.matmul %1, %2, %cst {dimension_numbers = #tpu.dot_dimension_numbers<[1], [0], [0], [1], [0, 0, 1, 1], [], []>} : vector<16x768xbf16>, vector<768x512xbf16>, vector<16x512xf32> -> vector<16x512xf32>
    %c0_3 = arith.constant 0 : index
    %c0_4 = arith.constant 0 : index
    %4 = vector.load %arg3[%c0_3, %c0_4] : memref<1x512xf32, #tpu.memory_space<vmem>>, vector<1x512xf32>
    %5 = vector.broadcast %4 : vector<1x512xf32> to vector<16x512xf32>
    %6 = arith.addf %3, %5 : vector<16x512xf32>
    %cst_5 = arith.constant 0.000000e+00 : f32
    %7 = vector.broadcast %cst_5 : f32 to vector<16x512xf32>
    %8 = arith.maximumf %6, %7 : vector<16x512xf32>
    %9 = arith.truncf %8 : vector<16x512xf32> to vector<16x512xbf16>
    %c0_6 = arith.constant 0 : index
    %c0_7 = arith.constant 0 : index
    %10 = vector.load %arg4[%c0_6, %c0_7] : memref<512x128xbf16, #tpu.memory_space<vmem>>, vector<512x128xbf16>
    %cst_8 = arith.constant dense<0.000000e+00> : vector<16x128xf32>
    %11 = tpu.matmul %9, %10, %cst_8 {dimension_numbers = #tpu.dot_dimension_numbers<[1], [0], [0], [1], [0, 0, 1, 1], [], []>} : vector<16x512xbf16>, vector<512x128xbf16>, vector<16x128xf32> -> vector<16x128xf32>
    %c0_9 = arith.constant 0 : index
    %c0_10 = arith.constant 0 : index
    %12 = vector.load %arg5[%c0_9, %c0_10] : memref<1x128xf32, #tpu.memory_space<vmem>>, vector<1x128xf32>
    %13 = vector.broadcast %12 : vector<1x128xf32> to vector<16x128xf32>
    %14 = arith.addf %11, %13 : vector<16x128xf32>
    %cst_11 = arith.constant 0.000000e+00 : f32
    %15 = vector.broadcast %cst_11 : f32 to vector<16x128xf32>
    %16 = arith.maximumf %14, %15 : vector<16x128xf32>
    %17 = arith.truncf %16 : vector<16x128xf32> to vector<16x128xbf16>
    %c0_12 = arith.constant 0 : index
    %c0_13 = arith.constant 0 : index
    %18 = vector.load %arg6[%c0_12, %c0_13] : memref<128x128xbf16, #tpu.memory_space<vmem>>, vector<128x128xbf16>
    %cst_14 = arith.constant dense<0.000000e+00> : vector<16x128xf32>
    %19 = tpu.matmul %17, %18, %cst_14 {dimension_numbers = #tpu.dot_dimension_numbers<[1], [0], [0], [1], [0, 0, 1, 1], [], []>} : vector<16x128xbf16>, vector<128x128xbf16>, vector<16x128xf32> -> vector<16x128xf32>
    %c0_15 = arith.constant 0 : index
    %c0_16 = arith.constant 0 : index
    %20 = vector.load %arg7[%c0_15, %c0_16] : memref<1x128xf32, #tpu.memory_space<vmem>>, vector<1x128xf32>
    %21 = vector.broadcast %20 : vector<1x128xf32> to vector<16x128xf32>
    %22 = arith.addf %19, %21 : vector<16x128xf32>
    %cst_17 = arith.constant 0.000000e+00 : f32
    %23 = vector.broadcast %cst_17 : f32 to vector<16x128xf32>
    %24 = arith.maximumf %22, %23 : vector<16x128xf32>
    %c0_18 = arith.constant 0 : index
    %c0_19 = arith.constant 0 : index
    %25 = vector.load %arg8[%c0_18, %c0_19] : memref<16x128xf32, #tpu.memory_space<vmem>>, vector<16x128xf32>
    tpu.vector_store %arg8[%c0_18, %c0_19], %24 {strides = array<i32>} : memref<16x128xf32, #tpu.memory_space<vmem>>, vector<16x128xf32>,
    return
  }
  func.func @transform_0(%arg0: i32) -> (i32, i32) {
    %c0_i32 = arith.constant 0 : i32
    %c0_i32_0 = arith.constant 0 : i32
    return %arg0, %c0_i32 : i32, i32
  }
  func.func @transform_1(%arg0: i32) -> (i32, i32) {
    %c0_i32 = arith.constant 0 : i32
    %c0_i32_0 = arith.constant 0 : i32
    %c0_i32_1 = arith.constant 0 : i32
    return %c0_i32, %c0_i32_0 : i32, i32
  }
  func.func @transform_2(%arg0: i32) -> (i32, i32) {
    %c0_i32 = arith.constant 0 : i32
    %c0_i32_0 = arith.constant 0 : i32
    %c0_i32_1 = arith.constant 0 : i32
    return %c0_i32, %c0_i32_0 : i32, i32
  }
  func.func @transform_3(%arg0: i32) -> (i32, i32) {
    %c0_i32 = arith.constant 0 : i32
    %c0_i32_0 = arith.constant 0 : i32
    %c0_i32_1 = arith.constant 0 : i32
    return %c0_i32, %c0_i32_0 : i32, i32
  }
  func.func @transform_4(%arg0: i32) -> (i32, i32) {
    %c0_i32 = arith.constant 0 : i32
    %c0_i32_0 = arith.constant 0 : i32
    %c0_i32_1 = arith.constant 0 : i32
    return %c0_i32, %c0_i32_0 : i32, i32
  }
  func.func @transform_5(%arg0: i32) -> (i32, i32) {
    %c0_i32 = arith.constant 0 : i32
    %c0_i32_0 = arith.constant 0 : i32
    %c0_i32_1 = arith.constant 0 : i32
    return %c0_i32, %c0_i32_0 : i32, i32
  }
  func.func @transform_6(%arg0: i32) -> (i32, i32) {
    %c0_i32 = arith.constant 0 : i32
    %c0_i32_0 = arith.constant 0 : i32
    %c0_i32_1 = arith.constant 0 : i32
    return %c0_i32, %c0_i32_0 : i32, i32
  }
  func.func @transform_7(%arg0: i32) -> (i32, i32) {
    %c0_i32 = arith.constant 0 : i32
    %c0_i32_0 = arith.constant 0 : i32
    return %arg0, %c0_i32 : i32, i32
  }
}

</mosaic_0001>

<llo_original>
// kernel: tpu_custom_call.1
$region0: #{tpu_custom_call.1}
  #allocation0 [shape = 'u32[]', space=smem, size = 0x4, offset = 0x4, fixed_abs, tag = 'smem constant byte address 0x4 - core index']
  #allocation1 [shape = 'u32[144,128]{1,0:T(1,128)}', space=vmem, size = 0x12000, scoped, tag = 'internal scratch']
  %s0 = inlined_call_operand.hbm [shape: f32[8,768], index: 0, kind: input, shape index: {}]
  %s1 = inlined_call_operand.hbm [shape: bf16[768,512], index: 1, kind: input, shape index: {}]
  %s2 = inlined_call_operand.vmem [shape: f32[1,512], index: 2, kind: input, shape index: {}]
  %s3 = inlined_call_operand.hbm [shape: bf16[512,128], index: 3, kind: input, shape index: {}]
  %s4 = inlined_call_operand.vmem [shape: f32[1,128], index: 4, kind: input, shape index: {}]
  %s5 = inlined_call_operand.hbm [shape: bf16[128,128], index: 5, kind: input, shape index: {}]
  %s6 = inlined_call_operand.vmem [shape: f32[1,128], index: 6, kind: input, shape index: {}]
  %s7 = inlined_call_operand.hbm [shape: f32[8,128], index: 7, kind: output, shape index: {}]
  %s8 = sld [smem:[#allocation0]]
  $region54: #{tpu_custom_call.1} parent=0
    _
  %s10 = ssub.s32 1, %s8
  %s11 = scalar_select 0, %s10, %s8
  $region1: #{tpu_custom_call.1} parent=0
    #allocation2 [shape = 'u8[49152]{0}', space=vmem, size = 0xc000, scoped, tag = 'input window, operand 0, single buffered']
    #allocation3 [shape = 's32[1]{0}', space=sflag, size = 0x4, scoped, tag = 'scoped memory for tpu_custom_call.1']
    #allocation4 [shape = 's32[1]{0}', space=sflag, size = 0x4, scoped, tag = 'scoped memory for tpu_custom_call.1']
    #allocation5 [shape = 'u8[786432]{0}', space=vmem, size = 0xc0000, scoped, tag = 'input window, operand 1, single buffered']
    #allocation6 [shape = 's32[1]{0}', space=sflag, size = 0x4, scoped, tag = 'scoped memory for tpu_custom_call.1']
    #allocation7 [shape = 'u8[131072]{0}', space=vmem, size = 0x20000, scoped, tag = 'input window, operand 3, single buffered']
    #allocation8 [shape = 'u8[32768]{0}', space=vmem, size = 0x8000, scoped, tag = 'input window, operand 5, single buffered']
    #allocation9 [shape = 's32[1]{0}', space=sflag, size = 0x4, scoped, tag = 'scoped memory for tpu_custom_call.1']
    #allocation10 [shape = 'u8[8192]{0}', space=vmem, size = 0x2000, scoped, tag = 'output window, operand 0, single buffered']
    %12 = vsyncpa [#allocation3], 0
    %13 = vsyncpa [#allocation6], 0
    %14 = vsyncpa [#allocation9], 0
    %15 = vsyncpa [#allocation4], 0
    // Predicated region
    $region2: #{tpu_custom_call.1} parent=1 // pred_check
      _
    $region3: #{tpu_custom_call.1} parent=1 // pred_check_branch
      %17 = sbr.rel (0) target = $region5
    $region4: #{tpu_custom_call.1} parent=1 // pred_region
      %s19 = ssub.s32 1536, 768
      %20 = vsyncadd [#allocation3], %s19
      %s21 = sshll.u32 [#allocation2], 4
      %s22 = int_to_ptr.vmem [resolvable:$true] %s21
      %27 = dma.hbm_to_vmem [thread:$0]  %s0, 768, %s22, [#allocation3], 768, 768, 48
    $region5: #{tpu_custom_call.1} parent=1 // pred_fallthru
      _
    // Predicated region
    $region6: #{tpu_custom_call.1} parent=1 // pred_check
      _
    $region7: #{tpu_custom_call.1} parent=1 // pred_check_branch
      %29 = sbr.rel (0) target = $region9
    $region8: #{tpu_custom_call.1} parent=1 // pred_region
      %s31 = ssub.s32 24576, 24576
      %32 = vsyncadd [#allocation6], %s31
      %s33 = sshll.u32 [#allocation5], 4
      %s34 = int_to_ptr.vmem [resolvable:$true] %s33
      %39 = dma.hbm_to_vmem [thread:$0]  %s1, 24576, %s34, [#allocation6], 256, 256, 16
    $region9: #{tpu_custom_call.1} parent=1 // pred_fallthru
      _
    // Predicated region
    $region10: #{tpu_custom_call.1} parent=1 // pred_check
      _
    $region11: #{tpu_custom_call.1} parent=1 // pred_check_branch
      %41 = sbr.rel (0) target = $region13
    $region12: #{tpu_custom_call.1} parent=1 // pred_region
      _
    $region13: #{tpu_custom_call.1} parent=1 // pred_fallthru
      _
    // Predicated region
    $region14: #{tpu_custom_call.1} parent=1 // pred_check
      _
    $region15: #{tpu_custom_call.1} parent=1 // pred_check_branch
      %43 = sbr.rel (0) target = $region17
    $region16: #{tpu_custom_call.1} parent=1 // pred_region
      %s45 = ssub.s32 4096, 4096
      %46 = vsyncadd [#allocation6], %s45
      %s47 = sshll.u32 [#allocation7], 4
      %s48 = int_to_ptr.vmem [resolvable:$true] %s47
      %53 = dma.hbm_to_vmem [thread:$0]  %s3, 4096, %s48, [#allocation6], 64, 64, 4
    $region17: #{tpu_custom_call.1} parent=1 // pred_fallthru
      _
    // Predicated region
    $region18: #{tpu_custom_call.1} parent=1 // pred_check
      _
    $region19: #{tpu_custom_call.1} parent=1 // pred_check_branch
      %55 = sbr.rel (0) target = $region21
    $region20: #{tpu_custom_call.1} parent=1 // pred_region
      _
    $region21: #{tpu_custom_call.1} parent=1 // pred_fallthru
      _
    // Predicated region
    $region22: #{tpu_custom_call.1} parent=1 // pred_check
      _
    $region23: #{tpu_custom_call.1} parent=1 // pred_check_branch
      %57 = sbr.rel (0) target = $region25
    $region24: #{tpu_custom_call.1} parent=1 // pred_region
      %s59 = ssub.s32 1024, 1024
      %60 = vsyncadd [#allocation9], %s59
      %s61 = sshll.u32 [#allocation8], 4
      %s62 = int_to_ptr.vmem [resolvable:$true] %s61
      %67 = dma.hbm_to_vmem [thread:$0]  %s5, 1024, %s62, [#allocation9], 64, 64, 4
    $region25: #{tpu_custom_call.1} parent=1 // pred_fallthru
      _
    // Predicated region
    $region26: #{tpu_custom_call.1} parent=1 // pred_check
      _
    $region27: #{tpu_custom_call.1} parent=1 // pred_check_branch
      %69 = sbr.rel (0) target = $region29
    $region28: #{tpu_custom_call.1} parent=1 // pred_region
      _
    $region29: #{tpu_custom_call.1} parent=1 // pred_fallthru
      _
    // Predicated region
    $region30: #{tpu_custom_call.1} parent=1 // pred_check
      _
    $region31: #{tpu_custom_call.1} parent=1 // pred_check_branch
      %71 = sbr.rel (0) target = $region33
    $region32: #{tpu_custom_call.1} parent=1 // pred_region
      %72 = dma.done [#allocation3], 1536
    $region33: #{tpu_custom_call.1} parent=1 // pred_fallthru
      _
    // Predicated region
    $region34: #{tpu_custom_call.1} parent=1 // pred_check
      _
    $region35: #{tpu_custom_call.1} parent=1 // pred_check_branch
      %74 = sbr.rel (0) target = $region37
    $region36: #{tpu_custom_call.1} parent=1 // pred_region
      %75 = dma.done [#allocation6], 24576
    $region37: #{tpu_custom_call.1} parent=1 // pred_fallthru
      _
    // Predicated region
    $region38: #{tpu_custom_call.1} parent=1 // pred_check
      _
    $region39: #{tpu_custom_call.1} parent=1 // pred_check_branch
      %77 = sbr.rel (0) target = $region41
    $region40: #{tpu_custom_call.1} parent=1 // pred_region
      %78 = dma.done [#allocation6], 4096
    $region41: #{tpu_custom_call.1} parent=1 // pred_fallthru
      _
    // Predicated region
    $region42: #{tpu_custom_call.1} parent=1 // pred_check
      _
    $region43: #{tpu_custom_call.1} parent=1 // pred_check_branch
      %80 = sbr.rel (0) target = $region45
    $region44: #{tpu_custom_call.1} parent=1 // pred_region
      %81 = dma.done [#allocation9], 1024
    $region45: #{tpu_custom_call.1} parent=1 // pred_fallthru
      _
    %v83 = vld [vmem:[#allocation2] sm:$0xff]
    %v84 = vld [vmem:[#allocation2 + $0x8] sm:$0xff]
    %v85 = vld [vmem:[#allocation2 + $0x10] sm:$0xff]
    %v86 = vld [vmem:[#allocation2 + $0x18] sm:$0xff]
    %v87 = vld [vmem:[#allocation2 + $0x20] sm:$0xff]
    %v88 = vld [vmem:[#allocation2 + $0x28] sm:$0xff]
    %v89 = vld [vmem:[#allocation2 + $0x30] sm:$0xff]
    %v90 = vld [vmem:[#allocation2 + $0x38] sm:$0xff]
    %v91 = vld [vmem:[#allocation2 + $0x40] sm:$0xff]
    %v92 = vld [vmem:[#allocation2 + $0x48] sm:$0xff]
    %v93 = vld [vmem:[#allocation2 + $0x50] sm:$0xff]
    %v94 = vld [vmem:[#allocation2 + $0x58] sm:$0xff]
    %v95 = vpack.c.bf16 %v89, %v83
    %v96 = vpack.c.bf16 %v90, %v84
    %v97 = vpack.c.bf16 %v91, %v85
    %v98 = vpack.c.bf16 %v92, %v86
    %v99 = vpack.c.bf16 %v93, %v87
    %v100 = vpack.c.bf16 %v94, %v88
    %v101 = vld [vmem:[#allocation5] sm:$0xff]
    %v102 = vld [vmem:[#allocation5 + $0x8] sm:$0xff]
    %v103 = vld [vmem:[#allocation5 + $0x10] sm:$0xff]
    %v104 = vld [vmem:[#allocation5 + $0x18] sm:$0xff]
    %v105 = vld [vmem:[#allocation5 + $0x20] sm:$0xff]
    %v106 = vld [vmem:[#allocation5 + $0x28] sm:$0xff]
    %v107 = vld [vmem:[#allocation5 + $0x30] sm:$0xff]
    %v108 = vld [vmem:[#allocation5 + $0x38] sm:$0xff]
    %v109 = vld [vmem:[#allocation5 + $0x40] sm:$0xff]
    %v110 = vld [vmem:[#allocation5 + $0x48] sm:$0xff]
    %v111 = vld [vmem:[#allocation5 + $0x50] sm:$0xff]
    %v112 = vld [vmem:[#allocation5 + $0x58] sm:$0xff]
    %v113 = vld [vmem:[#allocation5 + $0x60] sm:$0xff]
    %v114 = vld [vmem:[#allocation5 + $0x68] sm:$0xff]
    %v115 = vld [vmem:[#allocation5 + $0x70] sm:$0xff]
    %v116 = vld [vmem:[#allocation5 + $0x78] sm:$0xff]
    %v117 = vld [vmem:[#allocation5 + $0x80] sm:$0xff]
    %v118 = vld [vmem:[#allocation5 + $0x88] sm:$0xff]
    %v119 = vld [vmem:[#allocation5 + $0x90] sm:$0xff]
    %v120 = vld [vmem:[#allocation5 + $0x98] sm:$0xff]
    %v121 = vld [vmem:[#allocation5 + $0xa0] sm:$0xff]
    %v122 = vld [vmem:[#allocation5 + $0xa8] sm:$0xff]
    %v123 = vld [vmem:[#allocation5 + $0xb0] sm:$0xff]
    %v124 = vld [vmem:[#allocation5 + $0xb8] sm:$0xff]
    %v125 = vld [vmem:[#allocation5 + $0xc0] sm:$0xff]
    %v126 = vld [vmem:[#allocation5 + $0xc8] sm:$0xff]
    %v127 = vld [vmem:[#allocation5 + $0xd0] sm:$0xff]
    %v128 = vld [vmem:[#allocation5 + $0xd8] sm:$0xff]
    %v129 = vld [vmem:[#allocation5 + $0xe0] sm:$0xff]
    %v130 = vld [vmem:[#allocation5 + $0xe8] sm:$0xff]
    %v131 = vld [vmem:[#allocation5 + $0xf0] sm:$0xff]
    %v132 = vld [vmem:[#allocation5 + $0xf8] sm:$0xff]
    %v133 = vld [vmem:[#allocation5 + $0x100] sm:$0xff]
    %v134 = vld [vmem:[#allocation5 + $0x108] sm:$0xff]
    %v135 = vld [vmem:[#allocation5 + $0x110] sm:$0xff]
    %v136 = vld [vmem:[#allocation5 + $0x118] sm:$0xff]
    %v137 = vld [vmem:[#allocation5 + $0x120] sm:$0xff]
    %v138 = vld [vmem:[#allocation5 + $0x128] sm:$0xff]
    %v139 = vld [vmem:[#allocation5 + $0x130] sm:$0xff]
    %v140 = vld [vmem:[#allocation5 + $0x138] sm:$0xff]
    %v141 = vld [vmem:[#allocation5 + $0x140] sm:$0xff]
    %v142 = vld [vmem:[#allocation5 + $0x148] sm:$0xff]
    %v143 = vld [vmem:[#allocation5 + $0x150] sm:$0xff]
    %v144 = vld [vmem:[#allocation5 + $0x158] sm:$0xff]
    %v145 = vld [vmem:[#allocation5 + $0x160] sm:$0xff]
    %v146 = vld [vmem:[#allocation5 + $0x168] sm:$0xff]
    %v147 = vld [vmem:[#allocation5 + $0x170] sm:$0xff]
    %v148 = vld [vmem:[#allocation5 + $0x178] sm:$0xff]
    %v149 = vld [vmem:[#allocation5 + $0x180] sm:$0xff]
    %v150 = vld [vmem:[#allocation5 + $0x188] sm:$0xff]
    %v151 = vld [vmem:[#allocation5 + $0x190] sm:$0xff]
    %v152 = vld [vmem:[#allocation5 + $0x198] sm:$0xff]
    %v153 = vld [vmem:[#allocation5 + $0x1a0] sm:$0xff]
    %v154 = vld [vmem:[#allocation5 + $0x1a8] sm:$0xff]
    %v155 = vld [vmem:[#allocation5 + $0x1b0] sm:$0xff]
    %v156 = vld [vmem:[#allocation5 + $0x1b8] sm:$0xff]
    %v157 = vld [vmem:[#allocation5 + $0x1c0] sm:$0xff]
    %v158 = vld [vmem:[#allocation5 + $0x1c8] sm:$0xff]
    %v159 = vld [vmem:[#allocation5 + $0x1d0] sm:$0xff]
    %v160 = vld [vmem:[#allocation5 + $0x1d8] sm:$0xff]
    %v161 = vld [vmem:[#allocation5 + $0x1e0] sm:$0xff]
    %v162 = vld [vmem:[#allocation5 + $0x1e8] sm:$0xff]
    %v163 = vld [vmem:[#allocation5 + $0x1f0] sm:$0xff]
    %v164 = vld [vmem:[#allocation5 + $0x1f8] sm:$0xff]
    %v165 = vld [vmem:[#allocation5 + $0x200] sm:$0xff]
    %v166 = vld [vmem:[#allocation5 + $0x208] sm:$0xff]
    %v167 = vld [vmem:[#allocation5 + $0x210] sm:$0xff]
    %v168 = vld [vmem:[#allocation5 + $0x218] sm:$0xff]
    %v169 = vld [vmem:[#allocation5 + $0x220] sm:$0xff]
    %v170 = vld [vmem:[#allocation5 + $0x228] sm:$0xff]
    %v171 = vld [vmem:[#allocation5 + $0x230] sm:$0xff]
    %v172 = vld [vmem:[#allocation5 + $0x238] sm:$0xff]
    %v173 = vld [vmem:[#allocation5 + $0x240] sm:$0xff]
    %v174 = vld [vmem:[#allocation5 + $0x248] sm:$0xff]
    %v175 = vld [vmem:[#allocation5 + $0x250] sm:$0xff]
    %v176 = vld [vmem:[#allocation5 + $0x258] sm:$0xff]
    %v177 = vld [vmem:[#allocation5 + $0x260] sm:$0xff]
    %v178 = vld [vmem:[#allocation5 + $0x268] sm:$0xff]
    %v179 = vld [vmem:[#allocation5 + $0x270] sm:$0xff]
    %v180 = vld [vmem:[#allocation5 + $0x278] sm:$0xff]
    %v181 = vld [vmem:[#allocation5 + $0x280] sm:$0xff]
    %v182 = vld [vmem:[#allocation5 + $0x288] sm:$0xff]
    %v183 = vld [vmem:[#allocation5 + $0x290] sm:$0xff]
    %v184 = vld [vmem:[#allocation5 + $0x298] sm:$0xff]
    %v185 = vld [vmem:[#allocation5 + $0x2a0] sm:$0xff]
    %v186 = vld [vmem:[#allocation5 + $0x2a8] sm:$0xff]
    %v187 = vld [vmem:[#allocation5 + $0x2b0] sm:$0xff]
    %v188 = vld [vmem:[#allocation5 + $0x2b8] sm:$0xff]
    %v189 = vld [vmem:[#allocation5 + $0x2c0] sm:$0xff]
    %v190 = vld [vmem:[#allocation5 + $0x2c8] sm:$0xff]
    %v191 = vld [vmem:[#allocation5 + $0x2d0] sm:$0xff]
    %v192 = vld [vmem:[#allocation5 + $0x2d8] sm:$0xff]
    %v193 = vld [vmem:[#allocation5 + $0x2e0] sm:$0xff]
    %v194 = vld [vmem:[#allocation5 + $0x2e8] sm:$0xff]
    %v195 = vld [vmem:[#allocation5 + $0x2f0] sm:$0xff]
    %v196 = vld [vmem:[#allocation5 + $0x2f8] sm:$0xff]
    %v197 = vld [vmem:[#allocation5 + $0x300] sm:$0xff]
    %v198 = vld [vmem:[#allocation5 + $0x308] sm:$0xff]
    %v199 = vld [vmem:[#allocation5 + $0x310] sm:$0xff]
    %v200 = vld [vmem:[#allocation5 + $0x318] sm:$0xff]
    %v201 = vld [vmem:[#allocation5 + $0x320] sm:$0xff]
    %v202 = vld [vmem:[#allocation5 + $0x328] sm:$0xff]
    %v203 = vld [vmem:[#allocation5 + $0x330] sm:$0xff]
    %v204 = vld [vmem:[#allocation5 + $0x338] sm:$0xff]
    %v205 = vld [vmem:[#allocation5 + $0x340] sm:$0xff]
    %v206 = vld [vmem:[#allocation5 + $0x348] sm:$0xff]
    %v207 = vld [vmem:[#allocation5 + $0x350] sm:$0xff]
    %v208 = vld [vmem:[#allocation5 + $0x358] sm:$0xff]
    %v209 = vld [vmem:[#allocation5 + $0x360] sm:$0xff]
    %v210 = vld [vmem:[#allocation5 + $0x368] sm:$0xff]
    %v211 = vld [vmem:[#allocation5 + $0x370] sm:$0xff]
    %v212 = vld [vmem:[#allocation5 + $0x378] sm:$0xff]
    %v213 = vld [vmem:[#allocation5 + $0x380] sm:$0xff]
    %v214 = vld [vmem:[#allocation5 + $0x388] sm:$0xff]
    %v215 = vld [vmem:[#allocation5 + $0x390] sm:$0xff]
    %v216 = vld [vmem:[#allocation5 + $0x398] sm:$0xff]
    %v217 = vld [vmem:[#allocation5 + $0x3a0] sm:$0xff]
    %v218 = vld [vmem:[#allocation5 + $0x3a8] sm:$0xff]
    %v219 = vld [vmem:[#allocation5 + $0x3b0] sm:$0xff]
    %v220 = vld [vmem:[#allocation5 + $0x3b8] sm:$0xff]
    %v221 = vld [vmem:[#allocation5 + $0x3c0] sm:$0xff]
    %v222 = vld [vmem:[#allocation5 + $0x3c8] sm:$0xff]
    %v223 = vld [vmem:[#allocation5 + $0x3d0] sm:$0xff]
    %v224 = vld [vmem:[#allocation5 + $0x3d8] sm:$0xff]
    %v225 = vld [vmem:[#allocation5 + $0x3e0] sm:$0xff]
    %v226 = vld [vmem:[#allocation5 + $0x3e8] sm:$0xff]
    %v227 = vld [vmem:[#allocation5 + $0x3f0] sm:$0xff]
    %v228 = vld [vmem:[#allocation5 + $0x3f8] sm:$0xff]
    %v229 = vld [vmem:[#allocation5 + $0x400] sm:$0xff]
    %v230 = vld [vmem:[#allocation5 + $0x408] sm:$0xff]
    %v231 = vld [vmem:[#allocation5 + $0x410] sm:$0xff]
    %v232 = vld [vmem:[#allocation5 + $0x418] sm:$0xff]
    %v233 = vld [vmem:[#allocation5 + $0x420] sm:$0xff]
    %v234 = vld [vmem:[#allocation5 + $0x428] sm:$0xff]
    %v235 = vld [vmem:[#allocation5 + $0x430] sm:$0xff]
    %v236 = vld [vmem:[#allocation5 + $0x438] sm:$0xff]
    %v237 = vld [vmem:[#allocation5 + $0x440] sm:$0xff]
    %v238 = vld [vmem:[#allocation5 + $0x448] sm:$0xff]
    %v239 = vld [vmem:[#allocation5 + $0x450] sm:$0xff]
    %v240 = vld [vmem:[#allocation5 + $0x458] sm:$0xff]
    %v241 = vld [vmem:[#allocation5 + $0x460] sm:$0xff]
    %v242 = vld [vmem:[#allocation5 + $0x468] sm:$0xff]
    %v243 = vld [vmem:[#allocation5 + $0x470] sm:$0xff]
    %v244 = vld [vmem:[#allocation5 + $0x478] sm:$0xff]
    %v245 = vld [vmem:[#allocation5 + $0x480] sm:$0xff]
    %v246 = vld [vmem:[#allocation5 + $0x488] sm:$0xff]
    %v247 = vld [vmem:[#allocation5 + $0x490] sm:$0xff]
    %v248 = vld [vmem:[#allocation5 + $0x498] sm:$0xff]
    %v249 = vld [vmem:[#allocation5 + $0x4a0] sm:$0xff]
    %v250 = vld [vmem:[#allocation5 + $0x4a8] sm:$0xff]
    %v251 = vld [vmem:[#allocation5 + $0x4b0] sm:$0xff]
    %v252 = vld [vmem:[#allocation5 + $0x4b8] sm:$0xff]
    %v253 = vld [vmem:[#allocation5 + $0x4c0] sm:$0xff]
    %v254 = vld [vmem:[#allocation5 + $0x4c8] sm:$0xff]
    %v255 = vld [vmem:[#allocation5 + $0x4d0] sm:$0xff]
    %v256 = vld [vmem:[#allocation5 + $0x4d8] sm:$0xff]
    %v257 = vld [vmem:[#allocation5 + $0x4e0] sm:$0xff]
    %v258 = vld [vmem:[#allocation5 + $0x4e8] sm:$0xff]
    %v259 = vld [vmem:[#allocation5 + $0x4f0] sm:$0xff]
    %v260 = vld [vmem:[#allocation5 + $0x4f8] sm:$0xff]
    %v261 = vld [vmem:[#allocation5 + $0x500] sm:$0xff]
    %v262 = vld [vmem:[#allocation5 + $0x508] sm:$0xff]
    %v263 = vld [vmem:[#allocation5 + $0x510] sm:$0xff]
    %v264 = vld [vmem:[#allocation5 + $0x518] sm:$0xff]
    %v265 = vld [vmem:[#allocation5 + $0x520] sm:$0xff]
    %v266 = vld [vmem:[#allocation5 + $0x528] sm:$0xff]
    %v267 = vld [vmem:[#allocation5 + $0x530] sm:$0xff]
    %v268 = vld [vmem:[#allocation5 + $0x538] sm:$0xff]
    %v269 = vld [vmem:[#allocation5 + $0x540] sm:$0xff]
    %v270 = vld [vmem:[#allocation5 + $0x548] sm:$0xff]
    %v271 = vld [vmem:[#allocation5 + $0x550] sm:$0xff]
    %v272 = vld [vmem:[#allocation5 + $0x558] sm:$0xff]
    %v273 = vld [vmem:[#allocation5 + $0x560] sm:$0xff]
    %v274 = vld [vmem:[#allocation5 + $0x568] sm:$0xff]
    %v275 = vld [vmem:[#allocation5 + $0x570] sm:$0xff]
    %v276 = vld [vmem:[#allocation5 + $0x578] sm:$0xff]
    %v277 = vld [vmem:[#allocation5 + $0x580] sm:$0xff]
    %v278 = vld [vmem:[#allocation5 + $0x588] sm:$0xff]
    %v279 = vld [vmem:[#allocation5 + $0x590] sm:$0xff]
    %v280 = vld [vmem:[#allocation5 + $0x598] sm:$0xff]
    %v281 = vld [vmem:[#allocation5 + $0x5a0] sm:$0xff]
    %v282 = vld [vmem:[#allocation5 + $0x5a8] sm:$0xff]
    %v283 = vld [vmem:[#allocation5 + $0x5b0] sm:$0xff]
    %v284 = vld [vmem:[#allocation5 + $0x5b8] sm:$0xff]
    %v285 = vld [vmem:[#allocation5 + $0x5c0] sm:$0xff]
    %v286 = vld [vmem:[#allocation5 + $0x5c8] sm:$0xff]
    %v287 = vld [vmem:[#allocation5 + $0x5d0] sm:$0xff]
    %v288 = vld [vmem:[#allocation5 + $0x5d8] sm:$0xff]
    %v289 = vld [vmem:[#allocation5 + $0x5e0] sm:$0xff]
    %v290 = vld [vmem:[#allocation5 + $0x5e8] sm:$0xff]
    %v291 = vld [vmem:[#allocation5 + $0x5f0] sm:$0xff]
    %v292 = vld [vmem:[#allocation5 + $0x5f8] sm:$0xff]
    %v293 = vld [vmem:[%s2] sm:$0xf]
    %v295 = vlaneseq
    %v296 = vshrl.u32 %v295, 7
    %v297 = vsub.s32 0, %v296
    %v298 = vrot.slane %v293, %v297
    %v299 = vlaneseq
    %v300 = vshrl.u32 %v299, 7
    %v301 = vsub.s32 1, %v300
    %v302 = vrot.slane %v293, %v301
    %v303 = vlaneseq
    %v304 = vshrl.u32 %v303, 7
    %v305 = vsub.s32 2, %v304
    %v306 = vrot.slane %v293, %v305
    %v307 = vlaneseq
    %v308 = vshrl.u32 %v307, 7
    %v309 = vsub.s32 3, %v308
    %v310 = vrot.slane %v293, %v309
    %v507 = vunpack.c.l.b16 %v101
    %v508 = vunpack.c.h.b16 %v101
    %v509 = vunpack.c.l.b16 %v102
    %v510 = vunpack.c.h.b16 %v102
    %v511 = vunpack.c.l.b16 %v103
    %v512 = vunpack.c.h.b16 %v103
    %v513 = vunpack.c.l.b16 %v104
    %v514 = vunpack.c.h.b16 %v104
    %v515 = vunpack.c.l.b16 %v105
    %v516 = vunpack.c.h.b16 %v105
    %v517 = vunpack.c.l.b16 %v106
    %v518 = vunpack.c.h.b16 %v106
    %v519 = vunpack.c.l.b16 %v107
    %v520 = vunpack.c.h.b16 %v107
    %v521 = vunpack.c.l.b16 %v108
    %v522 = vunpack.c.h.b16 %v108
    %v523 = vunpack.c.l.b16 %v109
    %v524 = vunpack.c.h.b16 %v109
    %v525 = vunpack.c.l.b16 %v110
    %v526 = vunpack.c.h.b16 %v110
    %v527 = vunpack.c.l.b16 %v111
    %v528 = vunpack.c.h.b16 %v111
    %v529 = vunpack.c.l.b16 %v112
    %v530 = vunpack.c.h.b16 %v112
    %v531 = vunpack.c.l.b16 %v113
    %v532 = vunpack.c.h.b16 %v113
    %v533 = vunpack.c.l.b16 %v114
    %v534 = vunpack.c.h.b16 %v114
    %v535 = vunpack.c.l.b16 %v115
    %v536 = vunpack.c.h.b16 %v115
    %v537 = vunpack.c.l.b16 %v116
    %v538 = vunpack.c.h.b16 %v116
    %v539 = vunpack.c.l.b16 %v117
    %v540 = vunpack.c.h.b16 %v117
    %v541 = vunpack.c.l.b16 %v118
    %v542 = vunpack.c.h.b16 %v118
    %v543 = vunpack.c.l.b16 %v119
    %v544 = vunpack.c.h.b16 %v119
    %v545 = vunpack.c.l.b16 %v120
    %v546 = vunpack.c.h.b16 %v120
    %v547 = vunpack.c.l.b16 %v121
    %v548 = vunpack.c.h.b16 %v121
    %v549 = vunpack.c.l.b16 %v122
    %v550 = vunpack.c.h.b16 %v122
    %v551 = vunpack.c.l.b16 %v123
    %v552 = vunpack.c.h.b16 %v123
    %v553 = vunpack.c.l.b16 %v124
    %v554 = vunpack.c.h.b16 %v124
    %v555 = vunpack.c.l.b16 %v125
    %v556 = vunpack.c.h.b16 %v125
    %v557 = vunpack.c.l.b16 %v126
    %v558 = vunpack.c.h.b16 %v126
    %v559 = vunpack.c.l.b16 %v127
    %v560 = vunpack.c.h.b16 %v127
    %v561 = vunpack.c.l.b16 %v128
    %v562 = vunpack.c.h.b16 %v128
    %v563 = vunpack.c.l.b16 %v129
    %v564 = vunpack.c.h.b16 %v129
    %v565 = vunpack.c.l.b16 %v130
    %v566 = vunpack.c.h.b16 %v130
    %v567 = vunpack.c.l.b16 %v131
    %v568 = vunpack.c.h.b16 %v131
    %v569 = vunpack.c.l.b16 %v132
    %v570 = vunpack.c.h.b16 %v132
    %v571 = vunpack.c.l.b16 %v133
    %v572 = vunpack.c.h.b16 %v133
    %v573 = vunpack.c.l.b16 %v134
    %v574 = vunpack.c.h.b16 %v134
    %v575 = vunpack.c.l.b16 %v135
    %v576 = vunpack.c.h.b16 %v135
    %v577 = vunpack.c.l.b16 %v136
    %v578 = vunpack.c.h.b16 %v136
    %v579 = vunpack.c.l.b16 %v137
    %v580 = vunpack.c.h.b16 %v137
    %v581 = vunpack.c.l.b16 %v138
    %v582 = vunpack.c.h.b16 %v138
    %v583 = vunpack.c.l.b16 %v139
    %v584 = vunpack.c.h.b16 %v139
    %v585 = vunpack.c.l.b16 %v140
    %v586 = vunpack.c.h.b16 %v140
    %v587 = vunpack.c.l.b16 %v141
    %v588 = vunpack.c.h.b16 %v141
    %v589 = vunpack.c.l.b16 %v142
    %v590 = vunpack.c.h.b16 %v142
    %v591 = vunpack.c.l.b16 %v143
    %v592 = vunpack.c.h.b16 %v143
    %v593 = vunpack.c.l.b16 %v144
    %v594 = vunpack.c.h.b16 %v144
    %v595 = vunpack.c.l.b16 %v145
    %v596 = vunpack.c.h.b16 %v145
    %v597 = vunpack.c.l.b16 %v146
    %v598 = vunpack.c.h.b16 %v146
    %v599 = vunpack.c.l.b16 %v147
    %v600 = vunpack.c.h.b16 %v147
    %v601 = vunpack.c.l.b16 %v148
    %v602 = vunpack.c.h.b16 %v148
    %v603 = vunpack.c.l.b16 %v149
    %v604 = vunpack.c.h.b16 %v149
    %v605 = vunpack.c.l.b16 %v150
    %v606 = vunpack.c.h.b16 %v150
    %v607 = vunpack.c.l.b16 %v151
    %v608 = vunpack.c.h.b16 %v151
    %v609 = vunpack.c.l.b16 %v152
    %v610 = vunpack.c.h.b16 %v152
    %v611 = vunpack.c.l.b16 %v153
    %v612 = vunpack.c.h.b16 %v153
    %v613 = vunpack.c.l.b16 %v154
    %v614 = vunpack.c.h.b16 %v154
    %v615 = vunpack.c.l.b16 %v155
    %v616 = vunpack.c.h.b16 %v155
    %v617 = vunpack.c.l.b16 %v156
    %v618 = vunpack.c.h.b16 %v156
    %v619 = vunpack.c.l.b16 %v157
    %v620 = vunpack.c.h.b16 %v157
    %v621 = vunpack.c.l.b16 %v158
    %v622 = vunpack.c.h.b16 %v158
    %v623 = vunpack.c.l.b16 %v159
    %v624 = vunpack.c.h.b16 %v159
    %v625 = vunpack.c.l.b16 %v160
    %v626 = vunpack.c.h.b16 %v160
    %v627 = vunpack.c.l.b16 %v161
    %v628 = vunpack.c.h.b16 %v161
    %v629 = vunpack.c.l.b16 %v162
    %v630 = vunpack.c.h.b16 %v162
    %v631 = vunpack.c.l.b16 %v163
    %v632 = vunpack.c.h.b16 %v163
    %v633 = vunpack.c.l.b16 %v164
    %v634 = vunpack.c.h.b16 %v164
    %v635 = vunpack.c.l.b16 %v165
    %v636 = vunpack.c.h.b16 %v165
    %v637 = vunpack.c.l.b16 %v166
    %v638 = vunpack.c.h.b16 %v166
    %v639 = vunpack.c.l.b16 %v167
    %v640 = vunpack.c.h.b16 %v167
    %v641 = vunpack.c.l.b16 %v168
    %v642 = vunpack.c.h.b16 %v168
    %v643 = vunpack.c.l.b16 %v169
    %v644 = vunpack.c.h.b16 %v169
    %v645 = vunpack.c.l.b16 %v170
    %v646 = vunpack.c.h.b16 %v170
    %v647 = vunpack.c.l.b16 %v171
    %v648 = vunpack.c.h.b16 %v171
    %v649 = vunpack.c.l.b16 %v172
    %v650 = vunpack.c.h.b16 %v172
    %v651 = vunpack.c.l.b16 %v173
    %v652 = vunpack.c.h.b16 %v173
    %v653 = vunpack.c.l.b16 %v174
    %v654 = vunpack.c.h.b16 %v174
    %v655 = vunpack.c.l.b16 %v175
    %v656 = vunpack.c.h.b16 %v175
    %v657 = vunpack.c.l.b16 %v176
    %v658 = vunpack.c.h.b16 %v176
    %v659 = vunpack.c.l.b16 %v177
    %v660 = vunpack.c.h.b16 %v177
    %v661 = vunpack.c.l.b16 %v178
    %v662 = vunpack.c.h.b16 %v178
    %v663 = vunpack.c.l.b16 %v179
    %v664 = vunpack.c.h.b16 %v179
    %v665 = vunpack.c.l.b16 %v180
    %v666 = vunpack.c.h.b16 %v180
    %v667 = vunpack.c.l.b16 %v181
    %v668 = vunpack.c.h.b16 %v181
    %v669 = vunpack.c.l.b16 %v182
    %v670 = vunpack.c.h.b16 %v182
    %v671 = vunpack.c.l.b16 %v183
    %v672 = vunpack.c.h.b16 %v183
    %v673 = vunpack.c.l.b16 %v184
    %v674 = vunpack.c.h.b16 %v184
    %v675 = vunpack.c.l.b16 %v185
    %v676 = vunpack.c.h.b16 %v185
    %v677 = vunpack.c.l.b16 %v186
    %v678 = vunpack.c.h.b16 %v186
    %v679 = vunpack.c.l.b16 %v187
    %v680 = vunpack.c.h.b16 %v187
    %v681 = vunpack.c.l.b16 %v188
    %v682 = vunpack.c.h.b16 %v188
    %v683 = vunpack.c.l.b16 %v189
    %v684 = vunpack.c.h.b16 %v189
    %v685 = vunpack.c.l.b16 %v190
    %v686 = vunpack.c.h.b16 %v190
    %v687 = vunpack.c.l.b16 %v191
    %v688 = vunpack.c.h.b16 %v191
    %v689 = vunpack.c.l.b16 %v192
    %v690 = vunpack.c.h.b16 %v192
    %v691 = vunpack.c.l.b16 %v193
    %v692 = vunpack.c.h.b16 %v193
    %v693 = vunpack.c.l.b16 %v194
    %v694 = vunpack.c.h.b16 %v194
    %v695 = vunpack.c.l.b16 %v195
    %v696 = vunpack.c.h.b16 %v195
    %v697 = vunpack.c.l.b16 %v196
    %v698 = vunpack.c.h.b16 %v196
    %v699 = vunpack.c.l.b16 %v197
    %v700 = vunpack.c.h.b16 %v197
    %v701 = vunpack.c.l.b16 %v198
    %v702 = vunpack.c.h.b16 %v198
    %v703 = vunpack.c.l.b16 %v199
    %v704 = vunpack.c.h.b16 %v199
    %v705 = vunpack.c.l.b16 %v200
    %v706 = vunpack.c.h.b16 %v200
    %v707 = vunpack.c.l.b16 %v201
    %v708 = vunpack.c.h.b16 %v201
    %v709 = vunpack.c.l.b16 %v202
    %v710 = vunpack.c.h.b16 %v202
    %v711 = vunpack.c.l.b16 %v203
    %v712 = vunpack.c.h.b16 %v203
    %v713 = vunpack.c.l.b16 %v204
    %v714 = vunpack.c.h.b16 %v204
    %v715 = vunpack.c.l.b16 %v205
    %v716 = vunpack.c.h.b16 %v205
    %v717 = vunpack.c.l.b16 %v206
    %v718 = vunpack.c.h.b16 %v206
    %v719 = vunpack.c.l.b16 %v207
    %v720 = vunpack.c.h.b16 %v207
    %v721 = vunpack.c.l.b16 %v208
    %v722 = vunpack.c.h.b16 %v208
    %v723 = vunpack.c.l.b16 %v209
    %v724 = vunpack.c.h.b16 %v209
    %v725 = vunpack.c.l.b16 %v210
    %v726 = vunpack.c.h.b16 %v210
    %v727 = vunpack.c.l.b16 %v211
    %v728 = vunpack.c.h.b16 %v211
    %v729 = vunpack.c.l.b16 %v212
    %v730 = vunpack.c.h.b16 %v212
    %v731 = vunpack.c.l.b16 %v213
    %v732 = vunpack.c.h.b16 %v213
    %v733 = vunpack.c.l.b16 %v214
    %v734 = vunpack.c.h.b16 %v214
    %v735 = vunpack.c.l.b16 %v215
    %v736 = vunpack.c.h.b16 %v215
    %v737 = vunpack.c.l.b16 %v216
    %v738 = vunpack.c.h.b16 %v216
    %v739 = vunpack.c.l.b16 %v217
    %v740 = vunpack.c.h.b16 %v217
    %v741 = vunpack.c.l.b16 %v218
    %v742 = vunpack.c.h.b16 %v218
    %v743 = vunpack.c.l.b16 %v219
    %v744 = vunpack.c.h.b16 %v219
    %v745 = vunpack.c.l.b16 %v220
    %v746 = vunpack.c.h.b16 %v220
    %v747 = vunpack.c.l.b16 %v221
    %v748 = vunpack.c.h.b16 %v221
    %v749 = vunpack.c.l.b16 %v222
    %v750 = vunpack.c.h.b16 %v222
    %v751 = vunpack.c.l.b16 %v223
    %v752 = vunpack.c.h.b16 %v223
    %v753 = vunpack.c.l.b16 %v224
    %v754 = vunpack.c.h.b16 %v224
    %v755 = vunpack.c.l.b16 %v225
    %v756 = vunpack.c.h.b16 %v225
    %v757 = vunpack.c.l.b16 %v226
    %v758 = vunpack.c.h.b16 %v226
    %v759 = vunpack.c.l.b16 %v227
    %v760 = vunpack.c.h.b16 %v227
    %v761 = vunpack.c.l.b16 %v228
    %v762 = vunpack.c.h.b16 %v228
    %v763 = vunpack.c.l.b16 %v229
    %v764 = vunpack.c.h.b16 %v229
    %v765 = vunpack.c.l.b16 %v230
    %v766 = vunpack.c.h.b16 %v230
    %v767 = vunpack.c.l.b16 %v231
    %v768 = vunpack.c.h.b16 %v231
    %v769 = vunpack.c.l.b16 %v232
    %v770 = vunpack.c.h.b16 %v232
    %v771 = vunpack.c.l.b16 %v233
    %v772 = vunpack.c.h.b16 %v233
    %v773 = vunpack.c.l.b16 %v234
    %v774 = vunpack.c.h.b16 %v234
    %v775 = vunpack.c.l.b16 %v235
    %v776 = vunpack.c.h.b16 %v235
    %v777 = vunpack.c.l.b16 %v236
    %v778 = vunpack.c.h.b16 %v236
    %v779 = vunpack.c.l.b16 %v237
    %v780 = vunpack.c.h.b16 %v237
    %v781 = vunpack.c.l.b16 %v238
    %v782 = vunpack.c.h.b16 %v238
    %v783 = vunpack.c.l.b16 %v239
    %v784 = vunpack.c.h.b16 %v239
    %v785 = vunpack.c.l.b16 %v240
    %v786 = vunpack.c.h.b16 %v240
    %v787 = vunpack.c.l.b16 %v241
    %v788 = vunpack.c.h.b16 %v241
    %v789 = vunpack.c.l.b16 %v242
    %v790 = vunpack.c.h.b16 %v242
    %v791 = vunpack.c.l.b16 %v243
    %v792 = vunpack.c.h.b16 %v243
    %v793 = vunpack.c.l.b16 %v244
    %v794 = vunpack.c.h.b16 %v244
    %v795 = vunpack.c.l.b16 %v245
    %v796 = vunpack.c.h.b16 %v245
    %v797 = vunpack.c.l.b16 %v246
    %v798 = vunpack.c.h.b16 %v246
    %v799 = vunpack.c.l.b16 %v247
    %v800 = vunpack.c.h.b16 %v247
    %v801 = vunpack.c.l.b16 %v248
    %v802 = vunpack.c.h.b16 %v248
    %v803 = vunpack.c.l.b16 %v249
    %v804 = vunpack.c.h.b16 %v249
    %v805 = vunpack.c.l.b16 %v250
    %v806 = vunpack.c.h.b16 %v250
    %v807 = vunpack.c.l.b16 %v251
    %v808 = vunpack.c.h.b16 %v251
    %v809 = vunpack.c.l.b16 %v252
    %v810 = vunpack.c.h.b16 %v252
    %v811 = vunpack.c.l.b16 %v253
    %v812 = vunpack.c.h.b16 %v253
    %v813 = vunpack.c.l.b16 %v254
    %v814 = vunpack.c.h.b16 %v254
    %v815 = vunpack.c.l.b16 %v255
    %v816 = vunpack.c.h.b16 %v255
    %v817 = vunpack.c.l.b16 %v256
    %v818 = vunpack.c.h.b16 %v256
    %v819 = vunpack.c.l.b16 %v257
    %v820 = vunpack.c.h.b16 %v257
    %v821 = vunpack.c.l.b16 %v258
    %v822 = vunpack.c.h.b16 %v258
    %v823 = vunpack.c.l.b16 %v259
    %v824 = vunpack.c.h.b16 %v259
    %v825 = vunpack.c.l.b16 %v260
    %v826 = vunpack.c.h.b16 %v260
    %v827 = vunpack.c.l.b16 %v261
    %v828 = vunpack.c.h.b16 %v261
    %v829 = vunpack.c.l.b16 %v262
    %v830 = vunpack.c.h.b16 %v262
    %v831 = vunpack.c.l.b16 %v263
    %v832 = vunpack.c.h.b16 %v263
    %v833 = vunpack.c.l.b16 %v264
    %v834 = vunpack.c.h.b16 %v264
    %v835 = vunpack.c.l.b16 %v265
    %v836 = vunpack.c.h.b16 %v265
    %v837 = vunpack.c.l.b16 %v266
    %v838 = vunpack.c.h.b16 %v266
    %v839 = vunpack.c.l.b16 %v267
    %v840 = vunpack.c.h.b16 %v267
    %v841 = vunpack.c.l.b16 %v268
    %v842 = vunpack.c.h.b16 %v268
    %v843 = vunpack.c.l.b16 %v269
    %v844 = vunpack.c.h.b16 %v269
    %v845 = vunpack.c.l.b16 %v270
    %v846 = vunpack.c.h.b16 %v270
    %v847 = vunpack.c.l.b16 %v271
    %v848 = vunpack.c.h.b16 %v271
    %v849 = vunpack.c.l.b16 %v272
    %v850 = vunpack.c.h.b16 %v272
    %v851 = vunpack.c.l.b16 %v273
    %v852 = vunpack.c.h.b16 %v273
    %v853 = vunpack.c.l.b16 %v274
    %v854 = vunpack.c.h.b16 %v274
    %v855 = vunpack.c.l.b16 %v275
    %v856 = vunpack.c.h.b16 %v275
    %v857 = vunpack.c.l.b16 %v276
    %v858 = vunpack.c.h.b16 %v276
    %v859 = vunpack.c.l.b16 %v277
    %v860 = vunpack.c.h.b16 %v277
    %v861 = vunpack.c.l.b16 %v278
    %v862 = vunpack.c.h.b16 %v278
    %v863 = vunpack.c.l.b16 %v279
    %v864 = vunpack.c.h.b16 %v279
    %v865 = vunpack.c.l.b16 %v280
    %v866 = vunpack.c.h.b16 %v280
    %v867 = vunpack.c.l.b16 %v281
    %v868 = vunpack.c.h.b16 %v281
    %v869 = vunpack.c.l.b16 %v282
    %v870 = vunpack.c.h.b16 %v282
    %v871 = vunpack.c.l.b16 %v283
    %v872 = vunpack.c.h.b16 %v283
    %v873 = vunpack.c.l.b16 %v284
    %v874 = vunpack.c.h.b16 %v284
    %v875 = vunpack.c.l.b16 %v285
    %v876 = vunpack.c.h.b16 %v285
    %v877 = vunpack.c.l.b16 %v286
    %v878 = vunpack.c.h.b16 %v286
    %v879 = vunpack.c.l.b16 %v287
    %v880 = vunpack.c.h.b16 %v287
    %v881 = vunpack.c.l.b16 %v288
    %v882 = vunpack.c.h.b16 %v288
    %v883 = vunpack.c.l.b16 %v289
    %v884 = vunpack.c.h.b16 %v289
    %v885 = vunpack.c.l.b16 %v290
    %v886 = vunpack.c.h.b16 %v290
    %v887 = vunpack.c.l.b16 %v291
    %v888 = vunpack.c.h.b16 %v291
    %v889 = vunpack.c.l.b16 %v292
    %v890 = vunpack.c.h.b16 %v292
    %v891 = vpack.c.b16 %v511, %v507
    %v892 = vpack.c.b16 %v512, %v508
    %v893 = vpack.c.b16 %v513, %v509
    %v894 = vpack.c.b16 %v514, %v510
    %v895 = vpack.c.b16 %v519, %v515
    %v896 = vpack.c.b16 %v520, %v516
    %v897 = vpack.c.b16 %v521, %v517
    %v898 = vpack.c.b16 %v522, %v518
    %v899 = vpack.c.b16 %v527, %v523
    %v900 = vpack.c.b16 %v528, %v524
    %v901 = vpack.c.b16 %v529, %v525
    %v902 = vpack.c.b16 %v530, %v526
    %v903 = vpack.c.b16 %v535, %v531
    %v904 = vpack.c.b16 %v536, %v532
    %v905 = vpack.c.b16 %v537, %v533
    %v906 = vpack.c.b16 %v538, %v534
    %v907 = vpack.c.b16 %v543, %v539
    %v908 = vpack.c.b16 %v544, %v540
    %v909 = vpack.c.b16 %v545, %v541
    %v910 = vpack.c.b16 %v546, %v542
    %v911 = vpack.c.b16 %v551, %v547
    %v912 = vpack.c.b16 %v552, %v548
    %v913 = vpack.c.b16 %v553, %v549
    %v914 = vpack.c.b16 %v554, %v550
    %v915 = vpack.c.b16 %v559, %v555
    %v916 = vpack.c.b16 %v560, %v556
    %v917 = vpack.c.b16 %v561, %v557
    %v918 = vpack.c.b16 %v562, %v558
    %v919 = vpack.c.b16 %v567, %v563
    %v920 = vpack.c.b16 %v568, %v564
    %v921 = vpack.c.b16 %v569, %v565
    %v922 = vpack.c.b16 %v570, %v566
    %v923 = vpack.c.b16 %v575, %v571
    %v924 = vpack.c.b16 %v576, %v572
    %v925 = vpack.c.b16 %v577, %v573
    %v926 = vpack.c.b16 %v578, %v574
    %v927 = vpack.c.b16 %v583, %v579
    %v928 = vpack.c.b16 %v584, %v580
    %v929 = vpack.c.b16 %v585, %v581
    %v930 = vpack.c.b16 %v586, %v582
    %v931 = vpack.c.b16 %v591, %v587
    %v932 = vpack.c.b16 %v592, %v588
    %v933 = vpack.c.b16 %v593, %v589
    %v934 = vpack.c.b16 %v594, %v590
    %v935 = vpack.c.b16 %v599, %v595
    %v936 = vpack.c.b16 %v600, %v596
    %v937 = vpack.c.b16 %v601, %v597
    %v938 = vpack.c.b16 %v602, %v598
    %v939 = vpack.c.b16 %v607, %v603
    %v940 = vpack.c.b16 %v608, %v604
    %v941 = vpack.c.b16 %v609, %v605
    %v942 = vpack.c.b16 %v610, %v606
    %v943 = vpack.c.b16 %v615, %v611
    %v944 = vpack.c.b16 %v616, %v612
    %v945 = vpack.c.b16 %v617, %v613
    %v946 = vpack.c.b16 %v618, %v614
    %v947 = vpack.c.b16 %v623, %v619
    %v948 = vpack.c.b16 %v624, %v620
    %v949 = vpack.c.b16 %v625, %v621
    %v950 = vpack.c.b16 %v626, %v622
    %v951 = vpack.c.b16 %v631, %v627
    %v952 = vpack.c.b16 %v632, %v628
    %v953 = vpack.c.b16 %v633, %v629
    %v954 = vpack.c.b16 %v634, %v630
    %v955 = vpack.c.b16 %v639, %v635
    %v956 = vpack.c.b16 %v640, %v636
    %v957 = vpack.c.b16 %v641, %v637
    %v958 = vpack.c.b16 %v642, %v638
    %v959 = vpack.c.b16 %v647, %v643
    %v960 = vpack.c.b16 %v648, %v644
    %v961 = vpack.c.b16 %v649, %v645
    %v962 = vpack.c.b16 %v650, %v646
    %v963 = vpack.c.b16 %v655, %v651
    %v964 = vpack.c.b16 %v656, %v652
    %v965 = vpack.c.b16 %v657, %v653
    %v966 = vpack.c.b16 %v658, %v654
    %v967 = vpack.c.b16 %v663, %v659
    %v968 = vpack.c.b16 %v664, %v660
    %v969 = vpack.c.b16 %v665, %v661
    %v970 = vpack.c.b16 %v666, %v662
    %v971 = vpack.c.b16 %v671, %v667
    %v972 = vpack.c.b16 %v672, %v668
    %v973 = vpack.c.b16 %v673, %v669
    %v974 = vpack.c.b16 %v674, %v670
    %v975 = vpack.c.b16 %v679, %v675
    %v976 = vpack.c.b16 %v680, %v676
    %v977 = vpack.c.b16 %v681, %v677
    %v978 = vpack.c.b16 %v682, %v678
    %v979 = vpack.c.b16 %v687, %v683
    %v980 = vpack.c.b16 %v688, %v684
    %v981 = vpack.c.b16 %v689, %v685
    %v982 = vpack.c.b16 %v690, %v686
    %v983 = vpack.c.b16 %v695, %v691
    %v984 = vpack.c.b16 %v696, %v692
    %v985 = vpack.c.b16 %v697, %v693
    %v986 = vpack.c.b16 %v698, %v694
    %v987 = vpack.c.b16 %v703, %v699
    %v988 = vpack.c.b16 %v704, %v700
    %v989 = vpack.c.b16 %v705, %v701
    %v990 = vpack.c.b16 %v706, %v702
    %v991 = vpack.c.b16 %v711, %v707
    %v992 = vpack.c.b16 %v712, %v708
    %v993 = vpack.c.b16 %v713, %v709
    %v994 = vpack.c.b16 %v714, %v710
    %v995 = vpack.c.b16 %v719, %v715
    %v996 = vpack.c.b16 %v720, %v716
    %v997 = vpack.c.b16 %v721, %v717
    %v998 = vpack.c.b16 %v722, %v718
    %v999 = vpack.c.b16 %v727, %v723
    %v1000 = vpack.c.b16 %v728, %v724
    %v1001 = vpack.c.b16 %v729, %v725
    %v1002 = vpack.c.b16 %v730, %v726
    %v1003 = vpack.c.b16 %v735, %v731
    %v1004 = vpack.c.b16 %v736, %v732
    %v1005 = vpack.c.b16 %v737, %v733
    %v1006 = vpack.c.b16 %v738, %v734
    %v1007 = vpack.c.b16 %v743, %v739
    %v1008 = vpack.c.b16 %v744, %v740
    %v1009 = vpack.c.b16 %v745, %v741
    %v1010 = vpack.c.b16 %v746, %v742
    %v1011 = vpack.c.b16 %v751, %v747
    %v1012 = vpack.c.b16 %v752, %v748
    %v1013 = vpack.c.b16 %v753, %v749
    %v1014 = vpack.c.b16 %v754, %v750
    %v1015 = vpack.c.b16 %v759, %v755
    %v1016 = vpack.c.b16 %v760, %v756
    %v1017 = vpack.c.b16 %v761, %v757
    %v1018 = vpack.c.b16 %v762, %v758
    %v1019 = vpack.c.b16 %v767, %v763
    %v1020 = vpack.c.b16 %v768, %v764
    %v1021 = vpack.c.b16 %v769, %v765
    %v1022 = vpack.c.b16 %v770, %v766
    %v1023 = vpack.c.b16 %v775, %v771
    %v1024 = vpack.c.b16 %v776, %v772
    %v1025 = vpack.c.b16 %v777, %v773
    %v1026 = vpack.c.b16 %v778, %v774
    %v1027 = vpack.c.b16 %v783, %v779
    %v1028 = vpack.c.b16 %v784, %v780
    %v1029 = vpack.c.b16 %v785, %v781
    %v1030 = vpack.c.b16 %v786, %v782
    %v1031 = vpack.c.b16 %v791, %v787
    %v1032 = vpack.c.b16 %v792, %v788
    %v1033 = vpack.c.b16 %v793, %v789
    %v1034 = vpack.c.b16 %v794, %v790
    %v1035 = vpack.c.b16 %v799, %v795
    %v1036 = vpack.c.b16 %v800, %v796
    %v1037 = vpack.c.b16 %v801, %v797
    %v1038 = vpack.c.b16 %v802, %v798
    %v1039 = vpack.c.b16 %v807, %v803
    %v1040 = vpack.c.b16 %v808, %v804
    %v1041 = vpack.c.b16 %v809, %v805
    %v1042 = vpack.c.b16 %v810, %v806
    %v1043 = vpack.c.b16 %v815, %v811
    %v1044 = vpack.c.b16 %v816, %v812
    %v1045 = vpack.c.b16 %v817, %v813
    %v1046 = vpack.c.b16 %v818, %v814
    %v1047 = vpack.c.b16 %v823, %v819
    %v1048 = vpack.c.b16 %v824, %v820
    %v1049 = vpack.c.b16 %v825, %v821
    %v1050 = vpack.c.b16 %v826, %v822
    %v1051 = vpack.c.b16 %v831, %v827
    %v1052 = vpack.c.b16 %v832, %v828
    %v1053 = vpack.c.b16 %v833, %v829
    %v1054 = vpack.c.b16 %v834, %v830
    %v1055 = vpack.c.b16 %v839, %v835
    %v1056 = vpack.c.b16 %v840, %v836
    %v1057 = vpack.c.b16 %v841, %v837
    %v1058 = vpack.c.b16 %v842, %v838
    %v1059 = vpack.c.b16 %v847, %v843
    %v1060 = vpack.c.b16 %v848, %v844
    %v1061 = vpack.c.b16 %v849, %v845
    %v1062 = vpack.c.b16 %v850, %v846
    %v1063 = vpack.c.b16 %v855, %v851
    %v1064 = vpack.c.b16 %v856, %v852
    %v1065 = vpack.c.b16 %v857, %v853
    %v1066 = vpack.c.b16 %v858, %v854
    %v1067 = vpack.c.b16 %v863, %v859
    %v1068 = vpack.c.b16 %v864, %v860
    %v1069 = vpack.c.b16 %v865, %v861
    %v1070 = vpack.c.b16 %v866, %v862
    %v1071 = vpack.c.b16 %v871, %v867
    %v1072 = vpack.c.b16 %v872, %v868
    %v1073 = vpack.c.b16 %v873, %v869
    %v1074 = vpack.c.b16 %v874, %v870
    %v1075 = vpack.c.b16 %v879, %v875
    %v1076 = vpack.c.b16 %v880, %v876
    %v1077 = vpack.c.b16 %v881, %v877
    %v1078 = vpack.c.b16 %v882, %v878
    %v1079 = vpack.c.b16 %v887, %v883
    %v1080 = vpack.c.b16 %v888, %v884
    %v1081 = vpack.c.b16 %v889, %v885
    %v1082 = vpack.c.b16 %v890, %v886
    %1275 = vmatprep.subr.bf16.mxu0 %v892
    %1276 = vmatpush1.bf16.msra.mxu0 %v891
    %1277 = vmatprep.subr.bf16.mxu0 %v896
    %1278 = vmatpush1.bf16.msra.mxu0 %v895
    %1279 = vmatprep.subr.bf16.mxu0 %v900
    %1280 = vmatpush1.bf16.msra.mxu0 %v899
    %1281 = vmatprep.subr.bf16.mxu0 %v904
    %1282 = vmatpush1.bf16.msra.mxu0 %v903
    %1283 = vmatprep.subr.bf16.mxu0 %v908
    %1284 = vmatpush1.bf16.msra.mxu0 %v907
    %1285 = vmatprep.subr.bf16.mxu0 %v912
    %1286 = vmatpush1.bf16.msra.mxu0 %v911
    %1287 = vmatprep.subr.bf16.mxu0 %v916
    %1288 = vmatpush1.bf16.msra.mxu0 %v915
    %1289 = vmatprep.subr.bf16.mxu0 %v920
    %1290 = vmatpush1.bf16.msra.mxu0 %v919
    %1291 = vmatprep.subr.bf16.mxu0 %v924
    %1292 = vmatpush1.bf16.msra.mxu0 %v923
    %1293 = vmatprep.subr.bf16.mxu0 %v928
    %1294 = vmatpush1.bf16.msra.mxu0 %v927
    %1295 = vmatprep.subr.bf16.mxu0 %v932
    %1296 = vmatpush1.bf16.msra.mxu0 %v931
    %1297 = vmatprep.subr.bf16.mxu0 %v936
    %1298 = vmatpush1.bf16.msra.mxu0 %v935
    %1299 = vmatprep.subr.bf16.mxu0 %v940
    %1300 = vmatpush1.bf16.msra.mxu0 %v939
    %1301 = vmatprep.subr.bf16.mxu0 %v944
    %1302 = vmatpush1.bf16.msra.mxu0 %v943
    %1303 = vmatprep.subr.bf16.mxu0 %v948
    %1304 = vmatpush1.bf16.msra.mxu0 %v947
    %1305 = vmatprep.subr.bf16.mxu0 %v952
    %1306 = vmatpush1.bf16.msra.mxu0 %v951
    %1307 = vmatprep.mubr.bf16.mxu0 %v96
    %1308 = vmatmul.mubr.bf16.gmra.mrb[0].mxu0 %v95
    %v1309 = vpop.f32.mrb[0].mxu0
    %v1310 = vadd.f32 %v298, %v1309
    %v1311 = vpop.f32.mrb[0].mxu0
    %v1312 = vadd.f32 %v302, %v1311
    %v1313 = vpop.f32.mrb[0].mxu0
    %v1314 = vadd.f32 %v298, %v1313
    %v1315 = vpop.f32.mrb[0].mxu0
    %v1316 = vadd.f32 %v302, %v1315
    %1317 = vdwg.mxu0
    %1318 = vmatprep.subr.bf16.mxu0 %v956
    %1319 = vmatpush1.bf16.msra.mxu0 %v955
    %1320 = vmatprep.subr.bf16.mxu0 %v960
    %1321 = vmatpush1.bf16.msra.mxu0 %v959
    %1322 = vmatprep.subr.bf16.mxu0 %v964
    %1323 = vmatpush1.bf16.msra.mxu0 %v963
    %1324 = vmatprep.subr.bf16.mxu0 %v968
    %1325 = vmatpush1.bf16.msra.mxu0 %v967
    %1326 = vmatprep.subr.bf16.mxu0 %v972
    %1327 = vmatpush1.bf16.msra.mxu0 %v971
    %1328 = vmatprep.subr.bf16.mxu0 %v976
    %1329 = vmatpush1.bf16.msra.mxu0 %v975
    %1330 = vmatprep.subr.bf16.mxu0 %v980
    %1331 = vmatpush1.bf16.msra.mxu0 %v979
    %1332 = vmatprep.subr.bf16.mxu0 %v984
    %1333 = vmatpush1.bf16.msra.mxu0 %v983
    %1334 = vmatprep.subr.bf16.mxu0 %v988
    %1335 = vmatpush1.bf16.msra.mxu0 %v987
    %1336 = vmatprep.subr.bf16.mxu0 %v992
    %1337 = vmatpush1.bf16.msra.mxu0 %v991
    %1338 = vmatprep.subr.bf16.mxu0 %v996
    %1339 = vmatpush1.bf16.msra.mxu0 %v995
    %1340 = vmatprep.subr.bf16.mxu0 %v1000
    %1341 = vmatpush1.bf16.msra.mxu0 %v999
    %1342 = vmatprep.subr.bf16.mxu0 %v1004
    %1343 = vmatpush1.bf16.msra.mxu0 %v1003
    %1344 = vmatprep.subr.bf16.mxu0 %v1008
    %1345 = vmatpush1.bf16.msra.mxu0 %v1007
    %1346 = vmatprep.subr.bf16.mxu0 %v1012
    %1347 = vmatpush1.bf16.msra.mxu0 %v1011
    %1348 = vmatprep.subr.bf16.mxu0 %v1016
    %1349 = vmatpush1.bf16.msra.mxu0 %v1015
    %1350 = vmatprep.mubr.bf16.mxu0 %v98
    %1351 = vmatmul.mubr.bf16.gmra.mrb[0].mxu0 %v97
    %v1352 = vpop.f32.mrb[0].mxu0
    %v1353 = vadd.f32 %v1310, %v1352
    %v1354 = vpop.f32.mrb[0].mxu0
    %v1355 = vadd.f32 %v1312, %v1354
    %v1356 = vpop.f32.mrb[0].mxu0
    %v1357 = vadd.f32 %v1314, %v1356
    %v1358 = vpop.f32.mrb[0].mxu0
    %v1359 = vadd.f32 %v1316, %v1358
    %1360 = vdwg.mxu0
    %1361 = vmatprep.subr.bf16.mxu0 %v1020
    %1362 = vmatpush1.bf16.msra.mxu0 %v1019
    %1363 = vmatprep.subr.bf16.mxu0 %v1024
    %1364 = vmatpush1.bf16.msra.mxu0 %v1023
    %1365 = vmatprep.subr.bf16.mxu0 %v1028
    %1366 = vmatpush1.bf16.msra.mxu0 %v1027
    %1367 = vmatprep.subr.bf16.mxu0 %v1032
    %1368 = vmatpush1.bf16.msra.mxu0 %v1031
    %1369 = vmatprep.subr.bf16.mxu0 %v1036
    %1370 = vmatpush1.bf16.msra.mxu0 %v1035
    %1371 = vmatprep.subr.bf16.mxu0 %v1040
    %1372 = vmatpush1.bf16.msra.mxu0 %v1039
    %1373 = vmatprep.subr.bf16.mxu0 %v1044
    %1374 = vmatpush1.bf16.msra.mxu0 %v1043
    %1375 = vmatprep.subr.bf16.mxu0 %v1048
    %1376 = vmatpush1.bf16.msra.mxu0 %v1047
    %1377 = vmatprep.subr.bf16.mxu0 %v1052
    %1378 = vmatpush1.bf16.msra.mxu0 %v1051
    %1379 = vmatprep.subr.bf16.mxu0 %v1056
    %1380 = vmatpush1.bf16.msra.mxu0 %v1055
    %1381 = vmatprep.subr.bf16.mxu0 %v1060
    %1382 = vmatpush1.bf16.msra.mxu0 %v1059
    %1383 = vmatprep.subr.bf16.mxu0 %v1064
    %1384 = vmatpush1.bf16.msra.mxu0 %v1063
    %1385 = vmatprep.subr.bf16.mxu0 %v1068
    %1386 = vmatpush1.bf16.msra.mxu0 %v1067
    %1387 = vmatprep.subr.bf16.mxu0 %v1072
    %1388 = vmatpush1.bf16.msra.mxu0 %v1071
    %1389 = vmatprep.subr.bf16.mxu0 %v1076
    %1390 = vmatpush1.bf16.msra.mxu0 %v1075
    %1391 = vmatprep.subr.bf16.mxu0 %v1080
    %1392 = vmatpush1.bf16.msra.mxu0 %v1079
    %1393 = vmatprep.mubr.bf16.mxu0 %v100
    %1394 = vmatmul.mubr.bf16.gmra.mrb[0].mxu0 %v99
    %v1395 = vpop.f32.mrb[0].mxu0
    %v1396 = vadd.f32 %v1353, %v1395
    %v1397 = vpop.f32.mrb[0].mxu0
    %v1398 = vadd.f32 %v1355, %v1397
    %v1399 = vpop.f32.mrb[0].mxu0
    %v1400 = vadd.f32 %v1357, %v1399
    %v1401 = vpop.f32.mrb[0].mxu0
    %v1402 = vadd.f32 %v1359, %v1401
    %1403 = vdwg.mxu0
    %1404 = vmatprep.subr.bf16.mxu0 %v894
    %1405 = vmatpush1.bf16.msra.mxu0 %v893
    %1406 = vmatprep.subr.bf16.mxu0 %v898
    %1407 = vmatpush1.bf16.msra.mxu0 %v897
    %1408 = vmatprep.subr.bf16.mxu0 %v902
    %1409 = vmatpush1.bf16.msra.mxu0 %v901
    %1410 = vmatprep.subr.bf16.mxu0 %v906
    %1411 = vmatpush1.bf16.msra.mxu0 %v905
    %1412 = vmatprep.subr.bf16.mxu0 %v910
    %1413 = vmatpush1.bf16.msra.mxu0 %v909
    %1414 = vmatprep.subr.bf16.mxu0 %v914
    %1415 = vmatpush1.bf16.msra.mxu0 %v913
    %1416 = vmatprep.subr.bf16.mxu0 %v918
    %1417 = vmatpush1.bf16.msra.mxu0 %v917
    %1418 = vmatprep.subr.bf16.mxu0 %v922
    %1419 = vmatpush1.bf16.msra.mxu0 %v921
    %1420 = vmatprep.subr.bf16.mxu0 %v926
    %1421 = vmatpush1.bf16.msra.mxu0 %v925
    %1422 = vmatprep.subr.bf16.mxu0 %v930
    %1423 = vmatpush1.bf16.msra.mxu0 %v929
    %1424 = vmatprep.subr.bf16.mxu0 %v934
    %1425 = vmatpush1.bf16.msra.mxu0 %v933
    %1426 = vmatprep.subr.bf16.mxu0 %v938
    %1427 = vmatpush1.bf16.msra.mxu0 %v937
    %1428 = vmatprep.subr.bf16.mxu0 %v942
    %1429 = vmatpush1.bf16.msra.mxu0 %v941
    %1430 = vmatprep.subr.bf16.mxu0 %v946
    %1431 = vmatpush1.bf16.msra.mxu0 %v945
    %1432 = vmatprep.subr.bf16.mxu0 %v950
    %1433 = vmatpush1.bf16.msra.mxu0 %v949
    %1434 = vmatprep.subr.bf16.mxu0 %v954
    %1435 = vmatpush1.bf16.msra.mxu0 %v953
    %1436 = vmatprep.mubr.bf16.mxu0 %v96
    %1437 = vmatmul.mubr.bf16.gmra.mrb[0].mxu0 %v95
    %v1438 = vpop.f32.mrb[0].mxu0
    %v1439 = vadd.f32 %v306, %v1438
    %v1440 = vpop.f32.mrb[0].mxu0
    %v1441 = vadd.f32 %v310, %v1440
    %v1442 = vpop.f32.mrb[0].mxu0
    %v1443 = vadd.f32 %v306, %v1442
    %v1444 = vpop.f32.mrb[0].mxu0
    %v1445 = vadd.f32 %v310, %v1444
    %1446 = vdwg.mxu0
    %1447 = vmatprep.subr.bf16.mxu0 %v958
    %1448 = vmatpush1.bf16.msra.mxu0 %v957
    %1449 = vmatprep.subr.bf16.mxu0 %v962
    %1450 = vmatpush1.bf16.msra.mxu0 %v961
    %1451 = vmatprep.subr.bf16.mxu0 %v966
    %1452 = vmatpush1.bf16.msra.mxu0 %v965
    %1453 = vmatprep.subr.bf16.mxu0 %v970
    %1454 = vmatpush1.bf16.msra.mxu0 %v969
    %1455 = vmatprep.subr.bf16.mxu0 %v974
    %1456 = vmatpush1.bf16.msra.mxu0 %v973
    %1457 = vmatprep.subr.bf16.mxu0 %v978
    %1458 = vmatpush1.bf16.msra.mxu0 %v977
    %1459 = vmatprep.subr.bf16.mxu0 %v982
    %1460 = vmatpush1.bf16.msra.mxu0 %v981
    %1461 = vmatprep.subr.bf16.mxu0 %v986
    %1462 = vmatpush1.bf16.msra.mxu0 %v985
    %1463 = vmatprep.subr.bf16.mxu0 %v990
    %1464 = vmatpush1.bf16.msra.mxu0 %v989
    %1465 = vmatprep.subr.bf16.mxu0 %v994
    %1466 = vmatpush1.bf16.msra.mxu0 %v993
    %1467 = vmatprep.subr.bf16.mxu0 %v998
    %1468 = vmatpush1.bf16.msra.mxu0 %v997
    %1469 = vmatprep.subr.bf16.mxu0 %v1002
    %1470 = vmatpush1.bf16.msra.mxu0 %v1001
    %1471 = vmatprep.subr.bf16.mxu0 %v1006
    %1472 = vmatpush1.bf16.msra.mxu0 %v1005
    %1473 = vmatprep.subr.bf16.mxu0 %v1010
    %1474 = vmatpush1.bf16.msra.mxu0 %v1009
    %1475 = vmatprep.subr.bf16.mxu0 %v1014
    %1476 = vmatpush1.bf16.msra.mxu0 %v1013
    %1477 = vmatprep.subr.bf16.mxu0 %v1018
    %1478 = vmatpush1.bf16.msra.mxu0 %v1017
    %1479 = vmatprep.mubr.bf16.mxu0 %v98
    %1480 = vmatmul.mubr.bf16.gmra.mrb[0].mxu0 %v97
    %v1481 = vpop.f32.mrb[0].mxu0
    %v1482 = vadd.f32 %v1439, %v1481
    %v1483 = vpop.f32.mrb[0].mxu0
    %v1484 = vadd.f32 %v1441, %v1483
    %v1485 = vpop.f32.mrb[0].mxu0
    %v1486 = vadd.f32 %v1443, %v1485
    %v1487 = vpop.f32.mrb[0].mxu0
    %v1488 = vadd.f32 %v1445, %v1487
    %1489 = vdwg.mxu0
    %1490 = vmatprep.subr.bf16.mxu0 %v1022
    %1491 = vmatpush1.bf16.msra.mxu0 %v1021
    %1492 = vmatprep.subr.bf16.mxu0 %v1026
    %1493 = vmatpush1.bf16.msra.mxu0 %v1025
    %1494 = vmatprep.subr.bf16.mxu0 %v1030
    %1495 = vmatpush1.bf16.msra.mxu0 %v1029
    %1496 = vmatprep.subr.bf16.mxu0 %v1034
    %1497 = vmatpush1.bf16.msra.mxu0 %v1033
    %1498 = vmatprep.subr.bf16.mxu0 %v1038
    %1499 = vmatpush1.bf16.msra.mxu0 %v1037
    %1500 = vmatprep.subr.bf16.mxu0 %v1042
    %1501 = vmatpush1.bf16.msra.mxu0 %v1041
    %1502 = vmatprep.subr.bf16.mxu0 %v1046
    %1503 = vmatpush1.bf16.msra.mxu0 %v1045
    %1504 = vmatprep.subr.bf16.mxu0 %v1050
    %1505 = vmatpush1.bf16.msra.mxu0 %v1049
    %1506 = vmatprep.subr.bf16.mxu0 %v1054
    %1507 = vmatpush1.bf16.msra.mxu0 %v1053
    %1508 = vmatprep.subr.bf16.mxu0 %v1058
    %1509 = vmatpush1.bf16.msra.mxu0 %v1057
    %1510 = vmatprep.subr.bf16.mxu0 %v1062
    %1511 = vmatpush1.bf16.msra.mxu0 %v1061
    %1512 = vmatprep.subr.bf16.mxu0 %v1066
    %1513 = vmatpush1.bf16.msra.mxu0 %v1065
    %1514 = vmatprep.subr.bf16.mxu0 %v1070
    %1515 = vmatpush1.bf16.msra.mxu0 %v1069
    %1516 = vmatprep.subr.bf16.mxu0 %v1074
    %1517 = vmatpush1.bf16.msra.mxu0 %v1073
    %1518 = vmatprep.subr.bf16.mxu0 %v1078
    %1519 = vmatpush1.bf16.msra.mxu0 %v1077
    %1520 = vmatprep.subr.bf16.mxu0 %v1082
    %1521 = vmatpush1.bf16.msra.mxu0 %v1081
    %1522 = vmatprep.mubr.bf16.mxu0 %v100
    %1523 = vmatmul.mubr.bf16.gmra.mrb[0].mxu0 %v99
    %v1524 = vpop.f32.mrb[0].mxu0
    %v1525 = vadd.f32 %v1482, %v1524
    %v1526 = vpop.f32.mrb[0].mxu0
    %v1527 = vadd.f32 %v1484, %v1526
    %v1528 = vpop.f32.mrb[0].mxu0
    %v1529 = vadd.f32 %v1486, %v1528
    %v1530 = vpop.f32.mrb[0].mxu0
    %v1531 = vadd.f32 %v1488, %v1530
    %1532 = vdwg.mxu0
    %v1533 = vmax.f32 %v1396, 0.0
    %v1534 = vmax.f32 %v1398, 0.0
    %v1535 = vmax.f32 %v1525, 0.0
    %v1536 = vmax.f32 %v1527, 0.0
    %v1537 = vmax.f32 %v1400, 0.0
    %v1538 = vmax.f32 %v1402, 0.0
    %v1539 = vmax.f32 %v1529, 0.0
    %v1540 = vmax.f32 %v1531, 0.0
    %v1541 = vpack.c.bf16 %v1537, %v1533
    %v1542 = vpack.c.bf16 %v1538, %v1534
    %v1543 = vpack.c.bf16 %v1539, %v1535
    %v1544 = vpack.c.bf16 %v1540, %v1536
    %v1545 = vld [vmem:[#allocation7] sm:$0xf]
    %v1546 = vld [vmem:[#allocation7 + $0x4] sm:$0xf]
    %v1547 = vld [vmem:[#allocation7 + $0x8] sm:$0xf]
    %v1548 = vld [vmem:[#allocation7 + $0xc] sm:$0xf]
    %v1549 = vld [vmem:[#allocation7 + $0x10] sm:$0xf]
    %v1550 = vld [vmem:[#allocation7 + $0x14] sm:$0xf]
    %v1551 = vld [vmem:[#allocation7 + $0x18] sm:$0xf]
    %v1552 = vld [vmem:[#allocation7 + $0x1c] sm:$0xf]
    %v1553 = vld [vmem:[#allocation7 + $0x20] sm:$0xf]
    %v1554 = vld [vmem:[#allocation7 + $0x24] sm:$0xf]
    %v1555 = vld [vmem:[#allocation7 + $0x28] sm:$0xf]
    %v1556 = vld [vmem:[#allocation7 + $0x2c] sm:$0xf]
    %v1557 = vld [vmem:[#allocation7 + $0x30] sm:$0xf]
    %v1558 = vld [vmem:[#allocation7 + $0x34] sm:$0xf]
    %v1559 = vld [vmem:[#allocation7 + $0x38] sm:$0xf]
    %v1560 = vld [vmem:[#allocation7 + $0x3c] sm:$0xf]
    %v1561 = vld [vmem:[#allocation7 + $0x40] sm:$0xf]
    %v1562 = vld [vmem:[#allocation7 + $0x44] sm:$0xf]
    %v1563 = vld [vmem:[#allocation7 + $0x48] sm:$0xf]
    %v1564 = vld [vmem:[#allocation7 + $0x4c] sm:$0xf]
    %v1565 = vld [vmem:[#allocation7 + $0x50] sm:$0xf]
    %v1566 = vld [vmem:[#allocation7 + $0x54] sm:$0xf]
    %v1567 = vld [vmem:[#allocation7 + $0x58] sm:$0xf]
    %v1568 = vld [vmem:[#allocation7 + $0x5c] sm:$0xf]
    %v1569 = vld [vmem:[#allocation7 + $0x60] sm:$0xf]
    %v1570 = vld [vmem:[#allocation7 + $0x64] sm:$0xf]
    %v1571 = vld [vmem:[#allocation7 + $0x68] sm:$0xf]
    %v1572 = vld [vmem:[#allocation7 + $0x6c] sm:$0xf]
    %v1573 = vld [vmem:[#allocation7 + $0x70] sm:$0xf]
    %v1574 = vld [vmem:[#allocation7 + $0x74] sm:$0xf]
    %v1575 = vld [vmem:[#allocation7 + $0x78] sm:$0xf]
    %v1576 = vld [vmem:[#allocation7 + $0x7c] sm:$0xf]
    %v1577 = vld [vmem:[#allocation7 + $0x80] sm:$0xf]
    %v1578 = vld [vmem:[#allocation7 + $0x84] sm:$0xf]
    %v1579 = vld [vmem:[#allocation7 + $0x88] sm:$0xf]
    %v1580 = vld [vmem:[#allocation7 + $0x8c] sm:$0xf]
    %v1581 = vld [vmem:[#allocation7 + $0x90] sm:$0xf]
    %v1582 = vld [vmem:[#allocation7 + $0x94] sm:$0xf]
    %v1583 = vld [vmem:[#allocation7 + $0x98] sm:$0xf]
    %v1584 = vld [vmem:[#allocation7 + $0x9c] sm:$0xf]
    %v1585 = vld [vmem:[#allocation7 + $0xa0] sm:$0xf]
    %v1586 = vld [vmem:[#allocation7 + $0xa4] sm:$0xf]
    %v1587 = vld [vmem:[#allocation7 + $0xa8] sm:$0xf]
    %v1588 = vld [vmem:[#allocation7 + $0xac] sm:$0xf]
    %v1589 = vld [vmem:[#allocation7 + $0xb0] sm:$0xf]
    %v1590 = vld [vmem:[#allocation7 + $0xb4] sm:$0xf]
    %v1591 = vld [vmem:[#allocation7 + $0xb8] sm:$0xf]
    %v1592 = vld [vmem:[#allocation7 + $0xbc] sm:$0xf]
    %v1593 = vld [vmem:[#allocation7 + $0xc0] sm:$0xf]
    %v1594 = vld [vmem:[#allocation7 + $0xc4] sm:$0xf]
    %v1595 = vld [vmem:[#allocation7 + $0xc8] sm:$0xf]
    %v1596 = vld [vmem:[#allocation7 + $0xcc] sm:$0xf]
    %v1597 = vld [vmem:[#allocation7 + $0xd0] sm:$0xf]
    %v1598 = vld [vmem:[#allocation7 + $0xd4] sm:$0xf]
    %v1599 = vld [vmem:[#allocation7 + $0xd8] sm:$0xf]
    %v1600 = vld [vmem:[#allocation7 + $0xdc] sm:$0xf]
    %v1601 = vld [vmem:[#allocation7 + $0xe0] sm:$0xf]
    %v1602 = vld [vmem:[#allocation7 + $0xe4] sm:$0xf]
    %v1603 = vld [vmem:[#allocation7 + $0xe8] sm:$0xf]
    %v1604 = vld [vmem:[#allocation7 + $0xec] sm:$0xf]
    %v1605 = vld [vmem:[#allocation7 + $0xf0] sm:$0xf]
    %v1606 = vld [vmem:[#allocation7 + $0xf4] sm:$0xf]
    %v1607 = vld [vmem:[#allocation7 + $0xf8] sm:$0xf]
    %v1608 = vld [vmem:[#allocation7 + $0xfc] sm:$0xf]
    %v1609 = vld [vmem:[%s4] sm:$0x1]
    %v1611 = vlaneseq
    %v1612 = vshrl.u32 %v1611, 7
    %v1613 = vsub.s32 0, %v1612
    %v1614 = vrot.slane %v1609, %v1613
    %v1680 = vunpack.c.l.b16 %v1545
    %v1681 = vunpack.c.l.b16 %v1546
    %v1682 = vunpack.c.l.b16 %v1547
    %v1683 = vunpack.c.l.b16 %v1548
    %v1684 = vunpack.c.l.b16 %v1549
    %v1685 = vunpack.c.l.b16 %v1550
    %v1686 = vunpack.c.l.b16 %v1551
    %v1687 = vunpack.c.l.b16 %v1552
    %v1688 = vunpack.c.l.b16 %v1553
    %v1689 = vunpack.c.l.b16 %v1554
    %v1690 = vunpack.c.l.b16 %v1555
    %v1691 = vunpack.c.l.b16 %v1556
    %v1692 = vunpack.c.l.b16 %v1557
    %v1693 = vunpack.c.l.b16 %v1558
    %v1694 = vunpack.c.l.b16 %v1559
    %v1695 = vunpack.c.l.b16 %v1560
    %v1696 = vunpack.c.l.b16 %v1561
    %v1697 = vunpack.c.l.b16 %v1562
    %v1698 = vunpack.c.l.b16 %v1563
    %v1699 = vunpack.c.l.b16 %v1564
    %v1700 = vunpack.c.l.b16 %v1565
    %v1701 = vunpack.c.l.b16 %v1566
    %v1702 = vunpack.c.l.b16 %v1567
    %v1703 = vunpack.c.l.b16 %v1568
    %v1704 = vunpack.c.l.b16 %v1569
    %v1705 = vunpack.c.l.b16 %v1570
    %v1706 = vunpack.c.l.b16 %v1571
    %v1707 = vunpack.c.l.b16 %v1572
    %v1708 = vunpack.c.l.b16 %v1573
    %v1709 = vunpack.c.l.b16 %v1574
    %v1710 = vunpack.c.l.b16 %v1575
    %v1711 = vunpack.c.l.b16 %v1576
    %v1712 = vunpack.c.l.b16 %v1577
    %v1713 = vunpack.c.l.b16 %v1578
    %v1714 = vunpack.c.l.b16 %v1579
    %v1715 = vunpack.c.l.b16 %v1580
    %v1716 = vunpack.c.l.b16 %v1581
    %v1717 = vunpack.c.l.b16 %v1582
    %v1718 = vunpack.c.l.b16 %v1583
    %v1719 = vunpack.c.l.b16 %v1584
    %v1720 = vunpack.c.l.b16 %v1585
    %v1721 = vunpack.c.l.b16 %v1586
    %v1722 = vunpack.c.l.b16 %v1587
    %v1723 = vunpack.c.l.b16 %v1588
    %v1724 = vunpack.c.l.b16 %v1589
    %v1725 = vunpack.c.l.b16 %v1590
    %v1726 = vunpack.c.l.b16 %v1591
    %v1727 = vunpack.c.l.b16 %v1592
    %v1728 = vunpack.c.l.b16 %v1593
    %v1729 = vunpack.c.l.b16 %v1594
    %v1730 = vunpack.c.l.b16 %v1595
    %v1731 = vunpack.c.l.b16 %v1596
    %v1732 = vunpack.c.l.b16 %v1597
    %v1733 = vunpack.c.l.b16 %v1598
    %v1734 = vunpack.c.l.b16 %v1599
    %v1735 = vunpack.c.l.b16 %v1600
    %v1736 = vunpack.c.l.b16 %v1601
    %v1737 = vunpack.c.l.b16 %v1602
    %v1738 = vunpack.c.l.b16 %v1603
    %v1739 = vunpack.c.l.b16 %v1604
    %v1740 = vunpack.c.l.b16 %v1605
    %v1741 = vunpack.c.l.b16 %v1606
    %v1742 = vunpack.c.l.b16 %v1607
    %v1743 = vunpack.c.l.b16 %v1608
    %v1744 = vpack.c.b16 %v1681, %v1680
    %v1745 = vpack.c.b16 %v1683, %v1682
    %v1746 = vpack.c.b16 %v1685, %v1684
    %v1747 = vpack.c.b16 %v1687, %v1686
    %v1748 = vpack.c.b16 %v1689, %v1688
    %v1749 = vpack.c.b16 %v1691, %v1690
    %v1750 = vpack.c.b16 %v1693, %v1692
    %v1751 = vpack.c.b16 %v1695, %v1694
    %v1752 = vpack.c.b16 %v1697, %v1696
    %v1753 = vpack.c.b16 %v1699, %v1698
    %v1754 = vpack.c.b16 %v1701, %v1700
    %v1755 = vpack.c.b16 %v1703, %v1702
    %v1756 = vpack.c.b16 %v1705, %v1704
    %v1757 = vpack.c.b16 %v1707, %v1706
    %v1758 = vpack.c.b16 %v1709, %v1708
    %v1759 = vpack.c.b16 %v1711, %v1710
    %v1760 = vpack.c.b16 %v1713, %v1712
    %v1761 = vpack.c.b16 %v1715, %v1714
    %v1762 = vpack.c.b16 %v1717, %v1716
    %v1763 = vpack.c.b16 %v1719, %v1718
    %v1764 = vpack.c.b16 %v1721, %v1720
    %v1765 = vpack.c.b16 %v1723, %v1722
    %v1766 = vpack.c.b16 %v1725, %v1724
    %v1767 = vpack.c.b16 %v1727, %v1726
    %v1768 = vpack.c.b16 %v1729, %v1728
    %v1769 = vpack.c.b16 %v1731, %v1730
    %v1770 = vpack.c.b16 %v1733, %v1732
    %v1771 = vpack.c.b16 %v1735, %v1734
    %v1772 = vpack.c.b16 %v1737, %v1736
    %v1773 = vpack.c.b16 %v1739, %v1738
    %v1774 = vpack.c.b16 %v1741, %v1740
    %v1775 = vpack.c.b16 %v1743, %v1742
    %1808 = vmatprep.subr.bf16.mxu0 0
    %1809 = vmatpush1.bf16.msra.mxu0 %v1744
    %1810 = vmatprep.subr.bf16.mxu0 0
    %1811 = vmatpush1.bf16.msra.mxu0 %v1745
    %1812 = vmatprep.subr.bf16.mxu0 0
    %1813 = vmatpush1.bf16.msra.mxu0 %v1746
    %1814 = vmatprep.subr.bf16.mxu0 0
    %1815 = vmatpush1.bf16.msra.mxu0 %v1747
    %1816 = vmatprep.subr.bf16.mxu0 0
    %1817 = vmatpush1.bf16.msra.mxu0 %v1748
    %1818 = vmatprep.subr.bf16.mxu0 0
    %1819 = vmatpush1.bf16.msra.mxu0 %v1749
    %1820 = vmatprep.subr.bf16.mxu0 0
    %1821 = vmatpush1.bf16.msra.mxu0 %v1750
    %1822 = vmatprep.subr.bf16.mxu0 0
    %1823 = vmatpush1.bf16.msra.mxu0 %v1751
    %1824 = vmatprep.subr.bf16.mxu0 0
    %1825 = vmatpush1.bf16.msra.mxu0 %v1752
    %1826 = vmatprep.subr.bf16.mxu0 0
    %1827 = vmatpush1.bf16.msra.mxu0 %v1753
    %1828 = vmatprep.subr.bf16.mxu0 0
    %1829 = vmatpush1.bf16.msra.mxu0 %v1754
    %1830 = vmatprep.subr.bf16.mxu0 0
    %1831 = vmatpush1.bf16.msra.mxu0 %v1755
    %1832 = vmatprep.subr.bf16.mxu0 0
    %1833 = vmatpush1.bf16.msra.mxu0 %v1756
    %1834 = vmatprep.subr.bf16.mxu0 0
    %1835 = vmatpush1.bf16.msra.mxu0 %v1757
    %1836 = vmatprep.subr.bf16.mxu0 0
    %1837 = vmatpush1.bf16.msra.mxu0 %v1758
    %1838 = vmatprep.subr.bf16.mxu0 0
    %1839 = vmatpush1.bf16.msra.mxu0 %v1759
    %1840 = vmatprep.mubr.bf16.mxu0 %v1542
    %1841 = vmatmul.mubr.bf16.gmra.mrb[0].mxu0 %v1541
    %v1842 = vpop.f32.mrb[0].mxu0
    %v1843 = vadd.f32 %v1614, %v1842
    %v1844 = vpop.f32.mrb[0].mxu0
    %v1845 = vpop.f32.mrb[0].mxu0
    %v1846 = vadd.f32 %v1614, %v1845
    %v1847 = vpop.f32.mrb[0].mxu0
    %1848 = vdwg.mxu0
    %1849 = vmatprep.subr.bf16.mxu0 0
    %1850 = vmatpush1.bf16.msra.mxu0 %v1760
    %1851 = vmatprep.subr.bf16.mxu0 0
    %1852 = vmatpush1.bf16.msra.mxu0 %v1761
    %1853 = vmatprep.subr.bf16.mxu0 0
    %1854 = vmatpush1.bf16.msra.mxu0 %v1762
    %1855 = vmatprep.subr.bf16.mxu0 0
    %1856 = vmatpush1.bf16.msra.mxu0 %v1763
    %1857 = vmatprep.subr.bf16.mxu0 0
    %1858 = vmatpush1.bf16.msra.mxu0 %v1764
    %1859 = vmatprep.subr.bf16.mxu0 0
    %1860 = vmatpush1.bf16.msra.mxu0 %v1765
    %1861 = vmatprep.subr.bf16.mxu0 0
    %1862 = vmatpush1.bf16.msra.mxu0 %v1766
    %1863 = vmatprep.subr.bf16.mxu0 0
    %1864 = vmatpush1.bf16.msra.mxu0 %v1767
    %1865 = vmatprep.subr.bf16.mxu0 0
    %1866 = vmatpush1.bf16.msra.mxu0 %v1768
    %1867 = vmatprep.subr.bf16.mxu0 0
    %1868 = vmatpush1.bf16.msra.mxu0 %v1769
    %1869 = vmatprep.subr.bf16.mxu0 0
    %1870 = vmatpush1.bf16.msra.mxu0 %v1770
    %1871 = vmatprep.subr.bf16.mxu0 0
    %1872 = vmatpush1.bf16.msra.mxu0 %v1771
    %1873 = vmatprep.subr.bf16.mxu0 0
    %1874 = vmatpush1.bf16.msra.mxu0 %v1772
    %1875 = vmatprep.subr.bf16.mxu0 0
    %1876 = vmatpush1.bf16.msra.mxu0 %v1773
    %1877 = vmatprep.subr.bf16.mxu0 0
    %1878 = vmatpush1.bf16.msra.mxu0 %v1774
    %1879 = vmatprep.subr.bf16.mxu0 0
    %1880 = vmatpush1.bf16.msra.mxu0 %v1775
    %1881 = vmatprep.mubr.bf16.mxu0 %v1544
    %1882 = vmatmul.mubr.bf16.gmra.mrb[0].mxu0 %v1543
    %v1883 = vpop.f32.mrb[0].mxu0
    %v1884 = vadd.f32 %v1843, %v1883
    %v1885 = vpop.f32.mrb[0].mxu0
    %v1886 = vpop.f32.mrb[0].mxu0
    %v1887 = vadd.f32 %v1846, %v1886
    %v1888 = vpop.f32.mrb[0].mxu0
    %1889 = vdwg.mxu0
    %v1890 = vmax.f32 %v1884, 0.0
    %v1891 = vmax.f32 %v1887, 0.0
    %v1892 = vpack.c.bf16 %v1891, %v1890
    %v1893 = vld [vmem:[#allocation8] sm:$0xf]
    %v1894 = vld [vmem:[#allocation8 + $0x4] sm:$0xf]
    %v1895 = vld [vmem:[#allocation8 + $0x8] sm:$0xf]
    %v1896 = vld [vmem:[#allocation8 + $0xc] sm:$0xf]
    %v1897 = vld [vmem:[#allocation8 + $0x10] sm:$0xf]
    %v1898 = vld [vmem:[#allocation8 + $0x14] sm:$0xf]
    %v1899 = vld [vmem:[#allocation8 + $0x18] sm:$0xf]
    %v1900 = vld [vmem:[#allocation8 + $0x1c] sm:$0xf]
    %v1901 = vld [vmem:[#allocation8 + $0x20] sm:$0xf]
    %v1902 = vld [vmem:[#allocation8 + $0x24] sm:$0xf]
    %v1903 = vld [vmem:[#allocation8 + $0x28] sm:$0xf]
    %v1904 = vld [vmem:[#allocation8 + $0x2c] sm:$0xf]
    %v1905 = vld [vmem:[#allocation8 + $0x30] sm:$0xf]
    %v1906 = vld [vmem:[#allocation8 + $0x34] sm:$0xf]
    %v1907 = vld [vmem:[#allocation8 + $0x38] sm:$0xf]
    %v1908 = vld [vmem:[#allocation8 + $0x3c] sm:$0xf]
    %v1909 = vld [vmem:[%s6] sm:$0x1]
    %v1911 = vlaneseq
    %v1912 = vshrl.u32 %v1911, 7
    %v1913 = vsub.s32 0, %v1912
    %v1914 = vrot.slane %v1909, %v1913
    %v1932 = vunpack.c.l.b16 %v1893
    %v1933 = vunpack.c.l.b16 %v1894
    %v1934 = vunpack.c.l.b16 %v1895
    %v1935 = vunpack.c.l.b16 %v1896
    %v1936 = vunpack.c.l.b16 %v1897
    %v1937 = vunpack.c.l.b16 %v1898
    %v1938 = vunpack.c.l.b16 %v1899
    %v1939 = vunpack.c.l.b16 %v1900
    %v1940 = vunpack.c.l.b16 %v1901
    %v1941 = vunpack.c.l.b16 %v1902
    %v1942 = vunpack.c.l.b16 %v1903
    %v1943 = vunpack.c.l.b16 %v1904
    %v1944 = vunpack.c.l.b16 %v1905
    %v1945 = vunpack.c.l.b16 %v1906
    %v1946 = vunpack.c.l.b16 %v1907
    %v1947 = vunpack.c.l.b16 %v1908
    %v1948 = vpack.c.b16 %v1933, %v1932
    %v1949 = vpack.c.b16 %v1935, %v1934
    %v1950 = vpack.c.b16 %v1937, %v1936
    %v1951 = vpack.c.b16 %v1939, %v1938
    %v1952 = vpack.c.b16 %v1941, %v1940
    %v1953 = vpack.c.b16 %v1943, %v1942
    %v1954 = vpack.c.b16 %v1945, %v1944
    %v1955 = vpack.c.b16 %v1947, %v1946
    %1964 = vmatprep.subr.bf16.mxu0 0
    %1965 = vmatpush1.bf16.msra.mxu0 %v1948
    %1966 = vmatprep.subr.bf16.mxu0 0
    %1967 = vmatpush1.bf16.msra.mxu0 %v1949
    %1968 = vmatprep.subr.bf16.mxu0 0
    %1969 = vmatpush1.bf16.msra.mxu0 %v1950
    %1970 = vmatprep.subr.bf16.mxu0 0
    %1971 = vmatpush1.bf16.msra.mxu0 %v1951
    %1972 = vmatprep.subr.bf16.mxu0 0
    %1973 = vmatpush1.bf16.msra.mxu0 %v1952
    %1974 = vmatprep.subr.bf16.mxu0 0
    %1975 = vmatpush1.bf16.msra.mxu0 %v1953
    %1976 = vmatprep.subr.bf16.mxu0 0
    %1977 = vmatpush1.bf16.msra.mxu0 %v1954
    %1978 = vmatprep.subr.bf16.mxu0 0
    %1979 = vmatpush1.bf16.msra.mxu0 %v1955
    %1980 = vmatprep.subr.bf16.mxu0 0
    %1981 = vmatpush1.bf16.msra.mxu0 0
    %1982 = vmatprep.subr.bf16.mxu0 0
    %1983 = vmatpush1.bf16.msra.mxu0 0
    %1984 = vmatprep.subr.bf16.mxu0 0
    %1985 = vmatpush1.bf16.msra.mxu0 0
    %1986 = vmatprep.subr.bf16.mxu0 0
    %1987 = vmatpush1.bf16.msra.mxu0 0
    %1988 = vmatprep.subr.bf16.mxu0 0
    %1989 = vmatpush1.bf16.msra.mxu0 0
    %1990 = vmatprep.subr.bf16.mxu0 0
    %1991 = vmatpush1.bf16.msra.mxu0 0
    %1992 = vmatprep.subr.bf16.mxu0 0
    %1993 = vmatpush1.bf16.msra.mxu0 0
    %1994 = vmatprep.subr.bf16.mxu0 0
    %1995 = vmatpush1.bf16.msra.mxu0 0
    %1996 = vmatprep.mubr.bf16.mxu0 0
    %1997 = vmatmul.mubr.bf16.gmra.mrb[0].mxu0 %v1892
    %v1998 = vpop.f32.mrb[0].mxu0
    %v1999 = vadd.f32 %v1914, %v1998
    %v2000 = vpop.f32.mrb[0].mxu0
    %v2001 = vpop.f32.mrb[0].mxu0
    %v2002 = vadd.f32 %v1914, %v2001
    %v2003 = vpop.f32.mrb[0].mxu0
    %2004 = vdwg.mxu0
    %v2005 = vmax.f32 %v1999, 0.0
    %v2006 = vmax.f32 %v2002, 0.0
    %2007 = vst [vmem:[#allocation10] sm:$0xff] %v2005
    %2008 = vst [vmem:[#allocation10 + $0x8] sm:$0xff] %v2006
    // Predicated region
    $region46: #{tpu_custom_call.1} parent=1 // pred_check
      _
    $region47: #{tpu_custom_call.1} parent=1 // pred_check_branch
      %2010 = sbr.rel (0) target = $region49
    $region48: #{tpu_custom_call.1} parent=1 // pred_region
      %s2012 = ssub.s32 256, 128
      %2013 = vsyncadd [#allocation4], %s2012
      %s2014 = sshll.u32 [#allocation10], 4
      %s2015 = int_to_ptr.vmem [resolvable:$true] %s2014
      %2020 = dma.vmem_to_hbm [thread:$0]  %s2015, 128, %s7, [#allocation4], 128, 128, 8
    $region49: #{tpu_custom_call.1} parent=1 // pred_fallthru
      _
    // Predicated region
    $region50: #{tpu_custom_call.1} parent=1 // pred_check
      _
    $region51: #{tpu_custom_call.1} parent=1 // pred_check_branch
      %2022 = sbr.rel (0) target = $region53
    $region52: #{tpu_custom_call.1} parent=1 // pred_region
      %2023 = dma.done [#allocation4], 256
    $region53: #{tpu_custom_call.1} parent=1 // pred_fallthru
      _
    %2024 = vsyncpa [#allocation3], 1
    %2025 = vsyncpa [#allocation6], 1
    %2026 = vsyncpa [#allocation9], 1
    %2027 = vsyncpa [#allocation4], 1

// kernel: tpu_custom_call.1
$region0: #{tpu_custom_call.1}
  #allocation0 [shape = 'u32[]', space=smem, size = 0x4, offset = 0x4, fixed_abs, tag = 'smem constant byte address 0x4 - core index']
  #allocation1 [shape = 'u32[144,128]{1,0:T(1,128)}', space=vmem, size = 0x12000, scoped, tag = 'internal scratch']
  %s0 = inlined_call_operand.hbm [shape: f32[8,768], index: 0, kind: input, shape index: {}]
  %s1 = inlined_call_operand.hbm [shape: bf16[768,512], index: 1, kind: input, shape index: {}]
  %s2 = inlined_call_operand.vmem [shape: f32[1,512], index: 2, kind: input, shape index: {}]
  %s3 = inlined_call_operand.hbm [shape: bf16[512,128], index: 3, kind: input, shape index: {}]
  %s4 = inlined_call_operand.vmem [shape: f32[1,128], index: 4, kind: input, shape index: {}]
  %s5 = inlined_call_operand.hbm [shape: bf16[128,128], index: 5, kind: input, shape index: {}]
  %s6 = inlined_call_operand.vmem [shape: f32[1,128], index: 6, kind: input, shape index: {}]
  %s7 = inlined_call_operand.hbm [shape: f32[8,128], index: 7, kind: output, shape index: {}]
  %s8 = sld [smem:[#allocation0]]
  $region54: #{tpu_custom_call.1} parent=0
    _
  %s10 = ssub.s32 1, %s8
  %s11 = scalar_select 0, %s10, %s8
  $region1: #{tpu_custom_call.1} parent=0
    #allocation2 [shape = 'u8[49152]{0}', space=vmem, size = 0xc000, scoped, tag = 'input window, operand 0, single buffered']
    #allocation3 [shape = 's32[1]{0}', space=sflag, size = 0x4, scoped, tag = 'scoped memory for tpu_custom_call.1']
    #allocation4 [shape = 's32[1]{0}', space=sflag, size = 0x4, scoped, tag = 'scoped memory for tpu_custom_call.1']
    #allocation5 [shape = 'u8[786432]{0}', space=vmem, size = 0xc0000, scoped, tag = 'input window, operand 1, single buffered']
    #allocation6 [shape = 's32[1]{0}', space=sflag, size = 0x4, scoped, tag = 'scoped memory for tpu_custom_call.1']
    #allocation7 [shape = 'u8[131072]{0}', space=vmem, size = 0x20000, scoped, tag = 'input window, operand 3, single buffered']
    #allocation8 [shape = 'u8[32768]{0}', space=vmem, size = 0x8000, scoped, tag = 'input window, operand 5, single buffered']
    #allocation9 [shape = 's32[1]{0}', space=sflag, size = 0x4, scoped, tag = 'scoped memory for tpu_custom_call.1']
    #allocation10 [shape = 'u8[8192]{0}', space=vmem, size = 0x2000, scoped, tag = 'output window, operand 0, single buffered']
    %12 = vsyncpa [#allocation3], 0
    %13 = vsyncpa [#allocation6], 0
    %14 = vsyncpa [#allocation9], 0
    %15 = vsyncpa [#allocation4], 0
    // Predicated region
    $region2: #{tpu_custom_call.1} parent=1 // pred_check
      _
    $region3: #{tpu_custom_call.1} parent=1 // pred_check_branch
      %17 = sbr.rel (0) target = $region5
    $region4: #{tpu_custom_call.1} parent=1 // pred_region
      %s19 = ssub.s32 1536, 768
      %20 = vsyncadd [#allocation3], %s19
      %s21 = sshll.u32 [#allocation2], 4
      %s22 = int_to_ptr.vmem [resolvable:$true] %s21
      %27 = dma.hbm_to_vmem [thread:$0]  %s0, 768, %s22, [#allocation3], 768, 768, 48
    $region5: #{tpu_custom_call.1} parent=1 // pred_fallthru
      _
    // Predicated region
    $region6: #{tpu_custom_call.1} parent=1 // pred_check
      _
    $region7: #{tpu_custom_call.1} parent=1 // pred_check_branch
      %29 = sbr.rel (0) target = $region9
    $region8: #{tpu_custom_call.1} parent=1 // pred_region
      %s31 = ssub.s32 24576, 24576
      %32 = vsyncadd [#allocation6], %s31
      %s33 = sshll.u32 [#allocation5], 4
      %s34 = int_to_ptr.vmem [resolvable:$true] %s33
      %39 = dma.hbm_to_vmem [thread:$0]  %s1, 24576, %s34, [#allocation6], 256, 256, 16
    $region9: #{tpu_custom_call.1} parent=1 // pred_fallthru
      _
    // Predicated region
    $region10: #{tpu_custom_call.1} parent=1 // pred_check
      _
    $region11: #{tpu_custom_call.1} parent=1 // pred_check_branch
      %41 = sbr.rel (0) target = $region13
    $region12: #{tpu_custom_call.1} parent=1 // pred_region
      _
    $region13: #{tpu_custom_call.1} parent=1 // pred_fallthru
      _
    // Predicated region
    $region14: #{tpu_custom_call.1} parent=1 // pred_check
      _
    $region15: #{tpu_custom_call.1} parent=1 // pred_check_branch
      %43 = sbr.rel (0) target = $region17
    $region16: #{tpu_custom_call.1} parent=1 // pred_region
      %s45 = ssub.s32 4096, 4096
      %46 = vsyncadd [#allocation6], %s45
      %s47 = sshll.u32 [#allocation7], 4
      %s48 = int_to_ptr.vmem [resolvable:$true] %s47
      %53 = dma.hbm_to_vmem [thread:$0]  %s3, 4096, %s48, [#allocation6], 64, 64, 4
    $region17: #{tpu_custom_call.1} parent=1 // pred_fallthru
      _
    // Predicated region
    $region18: #{tpu_custom_call.1} parent=1 // pred_check
      _
    $region19: #{tpu_custom_call.1} parent=1 // pred_check_branch
      %55 = sbr.rel (0) target = $region21
    $region20: #{tpu_custom_call.1} parent=1 // pred_region
      _
    $region21: #{tpu_custom_call.1} parent=1 // pred_fallthru
      _
    // Predicated region
    $region22: #{tpu_custom_call.1} parent=1 // pred_check
      _
    $region23: #{tpu_custom_call.1} parent=1 // pred_check_branch
      %57 = sbr.rel (0) target = $region25
    $region24: #{tpu_custom_call.1} parent=1 // pred_region
      %s59 = ssub.s32 1024, 1024
      %60 = vsyncadd [#allocation9], %s59
      %s61 = sshll.u32 [#allocation8], 4
      %s62 = int_to_ptr.vmem [resolvable:$true] %s61
      %67 = dma.hbm_to_vmem [thread:$0]  %s5, 1024, %s62, [#allocation9], 64, 64, 4
    $region25: #{tpu_custom_call.1} parent=1 // pred_fallthru
      _
    // Predicated region
    $region26: #{tpu_custom_call.1} parent=1 // pred_check
      _
    $region27: #{tpu_custom_call.1} parent=1 // pred_check_branch
      %69 = sbr.rel (0) target = $region29
    $region28: #{tpu_custom_call.1} parent=1 // pred_region
      _
    $region29: #{tpu_custom_call.1} parent=1 // pred_fallthru
      _
    // Predicated region
    $region30: #{tpu_custom_call.1} parent=1 // pred_check
      _
    $region31: #{tpu_custom_call.1} parent=1 // pred_check_branch
      %71 = sbr.rel (0) target = $region33
    $region32: #{tpu_custom_call.1} parent=1 // pred_region
      %72 = dma.done [#allocation3], 1536
    $region33: #{tpu_custom_call.1} parent=1 // pred_fallthru
      _
    // Predicated region
    $region34: #{tpu_custom_call.1} parent=1 // pred_check
      _
    $region35: #{tpu_custom_call.1} parent=1 // pred_check_branch
      %74 = sbr.rel (0) target = $region37
    $region36: #{tpu_custom_call.1} parent=1 // pred_region
      %75 = dma.done [#allocation6], 24576
    $region37: #{tpu_custom_call.1} parent=1 // pred_fallthru
      _
    // Predicated region
    $region38: #{tpu_custom_call.1} parent=1 // pred_check
      _
    $region39: #{tpu_custom_call.1} parent=1 // pred_check_branch
      %77 = sbr.rel (0) target = $region41
    $region40: #{tpu_custom_call.1} parent=1 // pred_region
      %78 = dma.done [#allocation6], 4096
    $region41: #{tpu_custom_call.1} parent=1 // pred_fallthru
      _
    // Predicated region
    $region42: #{tpu_custom_call.1} parent=1 // pred_check
      _
    $region43: #{tpu_custom_call.1} parent=1 // pred_check_branch
      %80 = sbr.rel (0) target = $region45
    $region44: #{tpu_custom_call.1} parent=1 // pred_region
      %81 = dma.done [#allocation9], 1024
    $region45: #{tpu_custom_call.1} parent=1 // pred_fallthru
      _
    %v83 = vld [vmem:[#allocation2] sm:$0xff]
    %v84 = vld [vmem:[#allocation2 + $0x8] sm:$0xff]
    %v85 = vld [vmem:[#allocation2 + $0x10] sm:$0xff]
    %v86 = vld [vmem:[#allocation2 + $0x18] sm:$0xff]
    %v87 = vld [vmem:[#allocation2 + $0x20] sm:$0xff]
    %v88 = vld [vmem:[#allocation2 + $0x28] sm:$0xff]
    %v89 = vld [vmem:[#allocation2 + $0x30] sm:$0xff]
    %v90 = vld [vmem:[#allocation2 + $0x38] sm:$0xff]
    %v91 = vld [vmem:[#allocation2 + $0x40] sm:$0xff]
    %v92 = vld [vmem:[#allocation2 + $0x48] sm:$0xff]
    %v93 = vld [vmem:[#allocation2 + $0x50] sm:$0xff]
    %v94 = vld [vmem:[#allocation2 + $0x58] sm:$0xff]
    %v95 = vpack.c.bf16 %v89, %v83
    %v96 = vpack.c.bf16 %v90, %v84
    %v97 = vpack.c.bf16 %v91, %v85
    %v98 = vpack.c.bf16 %v92, %v86
    %v99 = vpack.c.bf16 %v93, %v87
    %v100 = vpack.c.bf16 %v94, %v88
    %v101 = vld [vmem:[#allocation5] sm:$0xff]
    %v102 = vld [vmem:[#allocation5 + $0x8] sm:$0xff]
    %v103 = vld [vmem:[#allocation5 + $0x10] sm:$0xff]
    %v104 = vld [vmem:[#allocation5 + $0x18] sm:$0xff]
    %v105 = vld [vmem:[#allocation5 + $0x20] sm:$0xff]
    %v106 = vld [vmem:[#allocation5 + $0x28] sm:$0xff]
    %v107 = vld [vmem:[#allocation5 + $0x30] sm:$0xff]
    %v108 = vld [vmem:[#allocation5 + $0x38] sm:$0xff]
    %v109 = vld [vmem:[#allocation5 + $0x40] sm:$0xff]
    %v110 = vld [vmem:[#allocation5 + $0x48] sm:$0xff]
    %v111 = vld [vmem:[#allocation5 + $0x50] sm:$0xff]
    %v112 = vld [vmem:[#allocation5 + $0x58] sm:$0xff]
    %v113 = vld [vmem:[#allocation5 + $0x60] sm:$0xff]
    %v114 = vld [vmem:[#allocation5 + $0x68] sm:$0xff]
    %v115 = vld [vmem:[#allocation5 + $0x70] sm:$0xff]
    %v116 = vld [vmem:[#allocation5 + $0x78] sm:$0xff]
    %v117 = vld [vmem:[#allocation5 + $0x80] sm:$0xff]
    %v118 = vld [vmem:[#allocation5 + $0x88] sm:$0xff]
    %v119 = vld [vmem:[#allocation5 + $0x90] sm:$0xff]
    %v120 = vld [vmem:[#allocation5 + $0x98] sm:$0xff]
    %v121 = vld [vmem:[#allocation5 + $0xa0] sm:$0xff]
    %v122 = vld [vmem:[#allocation5 + $0xa8] sm:$0xff]
    %v123 = vld [vmem:[#allocation5 + $0xb0] sm:$0xff]
    %v124 = vld [vmem:[#allocation5 + $0xb8] sm:$0xff]
    %v125 = vld [vmem:[#allocation5 + $0xc0] sm:$0xff]
    %v126 = vld [vmem:[#allocation5 + $0xc8] sm:$0xff]
    %v127 = vld [vmem:[#allocation5 + $0xd0] sm:$0xff]
    %v128 = vld [vmem:[#allocation5 + $0xd8] sm:$0xff]
    %v129 = vld [vmem:[#allocation5 + $0xe0] sm:$0xff]
    %v130 = vld [vmem:[#allocation5 + $0xe8] sm:$0xff]
    %v131 = vld [vmem:[#allocation5 + $0xf0] sm:$0xff]
    %v132 = vld [vmem:[#allocation5 + $0xf8] sm:$0xff]
    %v133 = vld [vmem:[#allocation5 + $0x100] sm:$0xff]
    %v134 = vld [vmem:[#allocation5 + $0x108] sm:$0xff]
    %v135 = vld [vmem:[#allocation5 + $0x110] sm:$0xff]
    %v136 = vld [vmem:[#allocation5 + $0x118] sm:$0xff]
    %v137 = vld [vmem:[#allocation5 + $0x120] sm:$0xff]
    %v138 = vld [vmem:[#allocation5 + $0x128] sm:$0xff]
    %v139 = vld [vmem:[#allocation5 + $0x130] sm:$0xff]
    %v140 = vld [vmem:[#allocation5 + $0x138] sm:$0xff]
    %v141 = vld [vmem:[#allocation5 + $0x140] sm:$0xff]
    %v142 = vld [vmem:[#allocation5 + $0x148] sm:$0xff]
    %v143 = vld [vmem:[#allocation5 + $0x150] sm:$0xff]
    %v144 = vld [vmem:[#allocation5 + $0x158] sm:$0xff]
    %v145 = vld [vmem:[#allocation5 + $0x160] sm:$0xff]
    %v146 = vld [vmem:[#allocation5 + $0x168] sm:$0xff]
    %v147 = vld [vmem:[#allocation5 + $0x170] sm:$0xff]
    %v148 = vld [vmem:[#allocation5 + $0x178] sm:$0xff]
    %v149 = vld [vmem:[#allocation5 + $0x180] sm:$0xff]
    %v150 = vld [vmem:[#allocation5 + $0x188] sm:$0xff]
    %v151 = vld [vmem:[#allocation5 + $0x190] sm:$0xff]
    %v152 = vld [vmem:[#allocation5 + $0x198] sm:$0xff]
    %v153 = vld [vmem:[#allocation5 + $0x1a0] sm:$0xff]
    %v154 = vld [vmem:[#allocation5 + $0x1a8] sm:$0xff]
    %v155 = vld [vmem:[#allocation5 + $0x1b0] sm:$0xff]
    %v156 = vld [vmem:[#allocation5 + $0x1b8] sm:$0xff]
    %v157 = vld [vmem:[#allocation5 + $0x1c0] sm:$0xff]
    %v158 = vld [vmem:[#allocation5 + $0x1c8] sm:$0xff]
    %v159 = vld [vmem:[#allocation5 + $0x1d0] sm:$0xff]
    %v160 = vld [vmem:[#allocation5 + $0x1d8] sm:$0xff]
    %v161 = vld [vmem:[#allocation5 + $0x1e0] sm:$0xff]
    %v162 = vld [vmem:[#allocation5 + $0x1e8] sm:$0xff]
    %v163 = vld [vmem:[#allocation5 + $0x1f0] sm:$0xff]
    %v164 = vld [vmem:[#allocation5 + $0x1f8] sm:$0xff]
    %v165 = vld [vmem:[#allocation5 + $0x200] sm:$0xff]
    %v166 = vld [vmem:[#allocation5 + $0x208] sm:$0xff]
    %v167 = vld [vmem:[#allocation5 + $0x210] sm:$0xff]
    %v168 = vld [vmem:[#allocation5 + $0x218] sm:$0xff]
    %v169 = vld [vmem:[#allocation5 + $0x220] sm:$0xff]
    %v170 = vld [vmem:[#allocation5 + $0x228] sm:$0xff]
    %v171 = vld [vmem:[#allocation5 + $0x230] sm:$0xff]
    %v172 = vld [vmem:[#allocation5 + $0x238] sm:$0xff]
    %v173 = vld [vmem:[#allocation5 + $0x240] sm:$0xff]
    %v174 = vld [vmem:[#allocation5 + $0x248] sm:$0xff]
    %v175 = vld [vmem:[#allocation5 + $0x250] sm:$0xff]
    %v176 = vld [vmem:[#allocation5 + $0x258] sm:$0xff]
    %v177 = vld [vmem:[#allocation5 + $0x260] sm:$0xff]
    %v178 = vld [vmem:[#allocation5 + $0x268] sm:$0xff]
    %v179 = vld [vmem:[#allocation5 + $0x270] sm:$0xff]
    %v180 = vld [vmem:[#allocation5 + $0x278] sm:$0xff]
    %v181 = vld [vmem:[#allocation5 + $0x280] sm:$0xff]
    %v182 = vld [vmem:[#allocation5 + $0x288] sm:$0xff]
    %v183 = vld [vmem:[#allocation5 + $0x290] sm:$0xff]
    %v184 = vld [vmem:[#allocation5 + $0x298] sm:$0xff]
    %v185 = vld [vmem:[#allocation5 + $0x2a0] sm:$0xff]
    %v186 = vld [vmem:[#allocation5 + $0x2a8] sm:$0xff]
    %v187 = vld [vmem:[#allocation5 + $0x2b0] sm:$0xff]
    %v188 = vld [vmem:[#allocation5 + $0x2b8] sm:$0xff]
    %v189 = vld [vmem:[#allocation5 + $0x2c0] sm:$0xff]
    %v190 = vld [vmem:[#allocation5 + $0x2c8] sm:$0xff]
    %v191 = vld [vmem:[#allocation5 + $0x2d0] sm:$0xff]
    %v192 = vld [vmem:[#allocation5 + $0x2d8] sm:$0xff]
    %v193 = vld [vmem:[#allocation5 + $0x2e0] sm:$0xff]
    %v194 = vld [vmem:[#allocation5 + $0x2e8] sm:$0xff]
    %v195 = vld [vmem:[#allocation5 + $0x2f0] sm:$0xff]
    %v196 = vld [vmem:[#allocation5 + $0x2f8] sm:$0xff]
    %v197 = vld [vmem:[#allocation5 + $0x300] sm:$0xff]
    %v198 = vld [vmem:[#allocation5 + $0x308] sm:$0xff]
    %v199 = vld [vmem:[#allocation5 + $0x310] sm:$0xff]
    %v200 = vld [vmem:[#allocation5 + $0x318] sm:$0xff]
    %v201 = vld [vmem:[#allocation5 + $0x320] sm:$0xff]
    %v202 = vld [vmem:[#allocation5 + $0x328] sm:$0xff]
    %v203 = vld [vmem:[#allocation5 + $0x330] sm:$0xff]
    %v204 = vld [vmem:[#allocation5 + $0x338] sm:$0xff]
    %v205 = vld [vmem:[#allocation5 + $0x340] sm:$0xff]
    %v206 = vld [vmem:[#allocation5 + $0x348] sm:$0xff]
    %v207 = vld [vmem:[#allocation5 + $0x350] sm:$0xff]
    %v208 = vld [vmem:[#allocation5 + $0x358] sm:$0xff]
    %v209 = vld [vmem:[#allocation5 + $0x360] sm:$0xff]
    %v210 = vld [vmem:[#allocation5 + $0x368] sm:$0xff]
    %v211 = vld [vmem:[#allocation5 + $0x370] sm:$0xff]
    %v212 = vld [vmem:[#allocation5 + $0x378] sm:$0xff]
    %v213 = vld [vmem:[#allocation5 + $0x380] sm:$0xff]
    %v214 = vld [vmem:[#allocation5 + $0x388] sm:$0xff]
    %v215 = vld [vmem:[#allocation5 + $0x390] sm:$0xff]
    %v216 = vld [vmem:[#allocation5 + $0x398] sm:$0xff]
    %v217 = vld [vmem:[#allocation5 + $0x3a0] sm:$0xff]
    %v218 = vld [vmem:[#allocation5 + $0x3a8] sm:$0xff]
    %v219 = vld [vmem:[#allocation5 + $0x3b0] sm:$0xff]
    %v220 = vld [vmem:[#allocation5 + $0x3b8] sm:$0xff]
    %v221 = vld [vmem:[#allocation5 + $0x3c0] sm:$0xff]
    %v222 = vld [vmem:[#allocation5 + $0x3c8] sm:$0xff]
    %v223 = vld [vmem:[#allocation5 + $0x3d0] sm:$0xff]
    %v224 = vld [vmem:[#allocation5 + $0x3d8] sm:$0xff]
    %v225 = vld [vmem:[#allocation5 + $0x3e0] sm:$0xff]
    %v226 = vld [vmem:[#allocation5 + $0x3e8] sm:$0xff]
    %v227 = vld [vmem:[#allocation5 + $0x3f0] sm:$0xff]
    %v228 = vld [vmem:[#allocation5 + $0x3f8] sm:$0xff]
    %v229 = vld [vmem:[#allocation5 + $0x400] sm:$0xff]
    %v230 = vld [vmem:[#allocation5 + $0x408] sm:$0xff]
    %v231 = vld [vmem:[#allocation5 + $0x410] sm:$0xff]
    %v232 = vld [vmem:[#allocation5 + $0x418] sm:$0xff]
    %v233 = vld [vmem:[#allocation5 + $0x420] sm:$0xff]
    %v234 = vld [vmem:[#allocation5 + $0x428] sm:$0xff]
    %v235 = vld [vmem:[#allocation5 + $0x430] sm:$0xff]
    %v236 = vld [vmem:[#allocation5 + $0x438] sm:$0xff]
    %v237 = vld [vmem:[#allocation5 + $0x440] sm:$0xff]
    %v238 = vld [vmem:[#allocation5 + $0x448] sm:$0xff]
    %v239 = vld [vmem:[#allocation5 + $0x450] sm:$0xff]
    %v240 = vld [vmem:[#allocation5 + $0x458] sm:$0xff]
    %v241 = vld [vmem:[#allocation5 + $0x460] sm:$0xff]
    %v242 = vld [vmem:[#allocation5 + $0x468] sm:$0xff]
    %v243 = vld [vmem:[#allocation5 + $0x470] sm:$0xff]
    %v244 = vld [vmem:[#allocation5 + $0x478] sm:$0xff]
    %v245 = vld [vmem:[#allocation5 + $0x480] sm:$0xff]
    %v246 = vld [vmem:[#allocation5 + $0x488] sm:$0xff]
    %v247 = vld [vmem:[#allocation5 + $0x490] sm:$0xff]
    %v248 = vld [vmem:[#allocation5 + $0x498] sm:$0xff]
    %v249 = vld [vmem:[#allocation5 + $0x4a0] sm:$0xff]
    %v250 = vld [vmem:[#allocation5 + $0x4a8] sm:$0xff]
    %v251 = vld [vmem:[#allocation5 + $0x4b0] sm:$0xff]
    %v252 = vld [vmem:[#allocation5 + $0x4b8] sm:$0xff]
    %v253 = vld [vmem:[#allocation5 + $0x4c0] sm:$0xff]
    %v254 = vld [vmem:[#allocation5 + $0x4c8] sm:$0xff]
    %v255 = vld [vmem:[#allocation5 + $0x4d0] sm:$0xff]
    %v256 = vld [vmem:[#allocation5 + $0x4d8] sm:$0xff]
    %v257 = vld [vmem:[#allocation5 + $0x4e0] sm:$0xff]
    %v258 = vld [vmem:[#allocation5 + $0x4e8] sm:$0xff]
    %v259 = vld [vmem:[#allocation5 + $0x4f0] sm:$0xff]
    %v260 = vld [vmem:[#allocation5 + $0x4f8] sm:$0xff]
    %v261 = vld [vmem:[#allocation5 + $0x500] sm:$0xff]
    %v262 = vld [vmem:[#allocation5 + $0x508] sm:$0xff]
    %v263 = vld [vmem:[#allocation5 + $0x510] sm:$0xff]
    %v264 = vld [vmem:[#allocation5 + $0x518] sm:$0xff]
    %v265 = vld [vmem:[#allocation5 + $0x520] sm:$0xff]
    %v266 = vld [vmem:[#allocation5 + $0x528] sm:$0xff]
    %v267 = vld [vmem:[#allocation5 + $0x530] sm:$0xff]
    %v268 = vld [vmem:[#allocation5 + $0x538] sm:$0xff]
    %v269 = vld [vmem:[#allocation5 + $0x540] sm:$0xff]
    %v270 = vld [vmem:[#allocation5 + $0x548] sm:$0xff]
    %v271 = vld [vmem:[#allocation5 + $0x550] sm:$0xff]
    %v272 = vld [vmem:[#allocation5 + $0x558] sm:$0xff]
    %v273 = vld [vmem:[#allocation5 + $0x560] sm:$0xff]
    %v274 = vld [vmem:[#allocation5 + $0x568] sm:$0xff]
    %v275 = vld [vmem:[#allocation5 + $0x570] sm:$0xff]
    %v276 = vld [vmem:[#allocation5 + $0x578] sm:$0xff]
    %v277 = vld [vmem:[#allocation5 + $0x580] sm:$0xff]
    %v278 = vld [vmem:[#allocation5 + $0x588] sm:$0xff]
    %v279 = vld [vmem:[#allocation5 + $0x590] sm:$0xff]
    %v280 = vld [vmem:[#allocation5 + $0x598] sm:$0xff]
    %v281 = vld [vmem:[#allocation5 + $0x5a0] sm:$0xff]
    %v282 = vld [vmem:[#allocation5 + $0x5a8] sm:$0xff]
    %v283 = vld [vmem:[#allocation5 + $0x5b0] sm:$0xff]
    %v284 = vld [vmem:[#allocation5 + $0x5b8] sm:$0xff]
    %v285 = vld [vmem:[#allocation5 + $0x5c0] sm:$0xff]
    %v286 = vld [vmem:[#allocation5 + $0x5c8] sm:$0xff]
    %v287 = vld [vmem:[#allocation5 + $0x5d0] sm:$0xff]
    %v288 = vld [vmem:[#allocation5 + $0x5d8] sm:$0xff]
    %v289 = vld [vmem:[#allocation5 + $0x5e0] sm:$0xff]
    %v290 = vld [vmem:[#allocation5 + $0x5e8] sm:$0xff]
    %v291 = vld [vmem:[#allocation5 + $0x5f0] sm:$0xff]
    %v292 = vld [vmem:[#allocation5 + $0x5f8] sm:$0xff]
    %v293 = vld [vmem:[%s2] sm:$0xf]
    %v295 = vlaneseq
    %v296 = vshrl.u32 %v295, 7
    %v297 = vsub.s32 0, %v296
    %v298 = vrot.slane %v293, %v297
    %v299 = vlaneseq
    %v300 = vshrl.u32 %v299, 7
    %v301 = vsub.s32 1, %v300
    %v302 = vrot.slane %v293, %v301
    %v303 = vlaneseq
    %v304 = vshrl.u32 %v303, 7
    %v305 = vsub.s32 2, %v304
    %v306 = vrot.slane %v293, %v305
    %v307 = vlaneseq
    %v308 = vshrl.u32 %v307, 7
    %v309 = vsub.s32 3, %v308
    %v310 = vrot.slane %v293, %v309
    %v507 = vunpack.c.l.b16 %v101
    %v508 = vunpack.c.h.b16 %v101
    %v509 = vunpack.c.l.b16 %v102
    %v510 = vunpack.c.h.b16 %v102
    %v511 = vunpack.c.l.b16 %v103
    %v512 = vunpack.c.h.b16 %v103
    %v513 = vunpack.c.l.b16 %v104
    %v514 = vunpack.c.h.b16 %v104
    %v515 = vunpack.c.l.b16 %v105
    %v516 = vunpack.c.h.b16 %v105
    %v517 = vunpack.c.l.b16 %v106
    %v518 = vunpack.c.h.b16 %v106
    %v519 = vunpack.c.l.b16 %v107
    %v520 = vunpack.c.h.b16 %v107
    %v521 = vunpack.c.l.b16 %v108
    %v522 = vunpack.c.h.b16 %v108
    %v523 = vunpack.c.l.b16 %v109
    %v524 = vunpack.c.h.b16 %v109
    %v525 = vunpack.c.l.b16 %v110
    %v526 = vunpack.c.h.b16 %v110
    %v527 = vunpack.c.l.b16 %v111
    %v528 = vunpack.c.h.b16 %v111
    %v529 = vunpack.c.l.b16 %v112
    %v530 = vunpack.c.h.b16 %v112
    %v531 = vunpack.c.l.b16 %v113
    %v532 = vunpack.c.h.b16 %v113
    %v533 = vunpack.c.l.b16 %v114
    %v534 = vunpack.c.h.b16 %v114
    %v535 = vunpack.c.l.b16 %v115
    %v536 = vunpack.c.h.b16 %v115
    %v537 = vunpack.c.l.b16 %v116
    %v538 = vunpack.c.h.b16 %v116
    %v539 = vunpack.c.l.b16 %v117
    %v540 = vunpack.c.h.b16 %v117
    %v541 = vunpack.c.l.b16 %v118
    %v542 = vunpack.c.h.b16 %v118
    %v543 = vunpack.c.l.b16 %v119
    %v544 = vunpack.c.h.b16 %v119
    %v545 = vunpack.c.l.b16 %v120
    %v546 = vunpack.c.h.b16 %v120
    %v547 = vunpack.c.l.b16 %v121
    %v548 = vunpack.c.h.b16 %v121
    %v549 = vunpack.c.l.b16 %v122
    %v550 = vunpack.c.h.b16 %v122
    %v551 = vunpack.c.l.b16 %v123
    %v552 = vunpack.c.h.b16 %v123
    %v553 = vunpack.c.l.b16 %v124
    %v554 = vunpack.c.h.b16 %v124
    %v555 = vunpack.c.l.b16 %v125
    %v556 = vunpack.c.h.b16 %v125
    %v557 = vunpack.c.l.b16 %v126
    %v558 = vunpack.c.h.b16 %v126
    %v559 = vunpack.c.l.b16 %v127
    %v560 = vunpack.c.h.b16 %v127
    %v561 = vunpack.c.l.b16 %v128
    %v562 = vunpack.c.h.b16 %v128
    %v563 = vunpack.c.l.b16 %v129
    %v564 = vunpack.c.h.b16 %v129
    %v565 = vunpack.c.l.b16 %v130
    %v566 = vunpack.c.h.b16 %v130
    %v567 = vunpack.c.l.b16 %v131
    %v568 = vunpack.c.h.b16 %v131
    %v569 = vunpack.c.l.b16 %v132
    %v570 = vunpack.c.h.b16 %v132
    %v571 = vunpack.c.l.b16 %v133
    %v572 = vunpack.c.h.b16 %v133
    %v573 = vunpack.c.l.b16 %v134
    %v574 = vunpack.c.h.b16 %v134
    %v575 = vunpack.c.l.b16 %v135
    %v576 = vunpack.c.h.b16 %v135
    %v577 = vunpack.c.l.b16 %v136
    %v578 = vunpack.c.h.b16 %v136
    %v579 = vunpack.c.l.b16 %v137
    %v580 = vunpack.c.h.b16 %v137
    %v581 = vunpack.c.l.b16 %v138
    %v582 = vunpack.c.h.b16 %v138
    %v583 = vunpack.c.l.b16 %v139
    %v584 = vunpack.c.h.b16 %v139
    %v585 = vunpack.c.l.b16 %v140
    %v586 = vunpack.c.h.b16 %v140
    %v587 = vunpack.c.l.b16 %v141
    %v588 = vunpack.c.h.b16 %v141
    %v589 = vunpack.c.l.b16 %v142
    %v590 = vunpack.c.h.b16 %v142
    %v591 = vunpack.c.l.b16 %v143
    %v592 = vunpack.c.h.b16 %v143
    %v593 = vunpack.c.l.b16 %v144
    %v594 = vunpack.c.h.b16 %v144
    %v595 = vunpack.c.l.b16 %v145
    %v596 = vunpack.c.h.b16 %v145
    %v597 = vunpack.c.l.b16 %v146
    %v598 = vunpack.c.h.b16 %v146
    %v599 = vunpack.c.l.b16 %v147
    %v600 = vunpack.c.h.b16 %v147
    %v601 = vunpack.c.l.b16 %v148
    %v602 = vunpack.c.h.b16 %v148
    %v603 = vunpack.c.l.b16 %v149
    %v604 = vunpack.c.h.b16 %v149
    %v605 = vunpack.c.l.b16 %v150
    %v606 = vunpack.c.h.b16 %v150
    %v607 = vunpack.c.l.b16 %v151
    %v608 = vunpack.c.h.b16 %v151
    %v609 = vunpack.c.l.b16 %v152
    %v610 = vunpack.c.h.b16 %v152
    %v611 = vunpack.c.l.b16 %v153
    %v612 = vunpack.c.h.b16 %v153
    %v613 = vunpack.c.l.b16 %v154
    %v614 = vunpack.c.h.b16 %v154
    %v615 = vunpack.c.l.b16 %v155
    %v616 = vunpack.c.h.b16 %v155
    %v617 = vunpack.c.l.b16 %v156
    %v618 = vunpack.c.h.b16 %v156
    %v619 = vunpack.c.l.b16 %v157
    %v620 = vunpack.c.h.b16 %v157
    %v621 = vunpack.c.l.b16 %v158
    %v622 = vunpack.c.h.b16 %v158
    %v623 = vunpack.c.l.b16 %v159
    %v624 = vunpack.c.h.b16 %v159
    %v625 = vunpack.c.l.b16 %v160
    %v626 = vunpack.c.h.b16 %v160
    %v627 = vunpack.c.l.b16 %v161
    %v628 = vunpack.c.h.b16 %v161
    %v629 = vunpack.c.l.b16 %v162
    %v630 = vunpack.c.h.b16 %v162
    %v631 = vunpack.c.l.b16 %v163
    %v632 = vunpack.c.h.b16 %v163
    %v633 = vunpack.c.l.b16 %v164
    %v634 = vunpack.c.h.b16 %v164
    %v635 = vunpack.c.l.b16 %v165
    %v636 = vunpack.c.h.b16 %v165
    %v637 = vunpack.c.l.b16 %v166
    %v638 = vunpack.c.h.b16 %v166
    %v639 = vunpack.c.l.b16 %v167
    %v640 = vunpack.c.h.b16 %v167
    %v641 = vunpack.c.l.b16 %v168
    %v642 = vunpack.c.h.b16 %v168
    %v643 = vunpack.c.l.b16 %v169
    %v644 = vunpack.c.h.b16 %v169
    %v645 = vunpack.c.l.b16 %v170
    %v646 = vunpack.c.h.b16 %v170
    %v647 = vunpack.c.l.b16 %v171
    %v648 = vunpack.c.h.b16 %v171
    %v649 = vunpack.c.l.b16 %v172
    %v650 = vunpack.c.h.b16 %v172
    %v651 = vunpack.c.l.b16 %v173
    %v652 = vunpack.c.h.b16 %v173
    %v653 = vunpack.c.l.b16 %v174
    %v654 = vunpack.c.h.b16 %v174
    %v655 = vunpack.c.l.b16 %v175
    %v656 = vunpack.c.h.b16 %v175
    %v657 = vunpack.c.l.b16 %v176
    %v658 = vunpack.c.h.b16 %v176
    %v659 = vunpack.c.l.b16 %v177
    %v660 = vunpack.c.h.b16 %v177
    %v661 = vunpack.c.l.b16 %v178
    %v662 = vunpack.c.h.b16 %v178
    %v663 = vunpack.c.l.b16 %v179
    %v664 = vunpack.c.h.b16 %v179
    %v665 = vunpack.c.l.b16 %v180
    %v666 = vunpack.c.h.b16 %v180
    %v667 = vunpack.c.l.b16 %v181
    %v668 = vunpack.c.h.b16 %v181
    %v669 = vunpack.c.l.b16 %v182
    %v670 = vunpack.c.h.b16 %v182
    %v671 = vunpack.c.l.b16 %v183
    %v672 = vunpack.c.h.b16 %v183
    %v673 = vunpack.c.l.b16 %v184
    %v674 = vunpack.c.h.b16 %v184
    %v675 = vunpack.c.l.b16 %v185
    %v676 = vunpack.c.h.b16 %v185
    %v677 = vunpack.c.l.b16 %v186
    %v678 = vunpack.c.h.b16 %v186
    %v679 = vunpack.c.l.b16 %v187
    %v680 = vunpack.c.h.b16 %v187
    %v681 = vunpack.c.l.b16 %v188
    %v682 = vunpack.c.h.b16 %v188
    %v683 = vunpack.c.l.b16 %v189
    %v684 = vunpack.c.h.b16 %v189
    %v685 = vunpack.c.l.b16 %v190
    %v686 = vunpack.c.h.b16 %v190
    %v687 = vunpack.c.l.b16 %v191
    %v688 = vunpack.c.h.b16 %v191
    %v689 = vunpack.c.l.b16 %v192
    %v690 = vunpack.c.h.b16 %v192
    %v691 = vunpack.c.l.b16 %v193
    %v692 = vunpack.c.h.b16 %v193
    %v693 = vunpack.c.l.b16 %v194
    %v694 = vunpack.c.h.b16 %v194
    %v695 = vunpack.c.l.b16 %v195
    %v696 = vunpack.c.h.b16 %v195
    %v697 = vunpack.c.l.b16 %v196
    %v698 = vunpack.c.h.b16 %v196
    %v699 = vunpack.c.l.b16 %v197
    %v700 = vunpack.c.h.b16 %v197
    %v701 = vunpack.c.l.b16 %v198
    %v702 = vunpack.c.h.b16 %v198
    %v703 = vunpack.c.l.b16 %v199
    %v704 = vunpack.c.h.b16 %v199
    %v705 = vunpack.c.l.b16 %v200
    %v706 = vunpack.c.h.b16 %v200
    %v707 = vunpack.c.l.b16 %v201
    %v708 = vunpack.c.h.b16 %v201
    %v709 = vunpack.c.l.b16 %v202
    %v710 = vunpack.c.h.b16 %v202
    %v711 = vunpack.c.l.b16 %v203
    %v712 = vunpack.c.h.b16 %v203
    %v713 = vunpack.c.l.b16 %v204
    %v714 = vunpack.c.h.b16 %v204
    %v715 = vunpack.c.l.b16 %v205
    %v716 = vunpack.c.h.b16 %v205
    %v717 = vunpack.c.l.b16 %v206
    %v718 = vunpack.c.h.b16 %v206
    %v719 = vunpack.c.l.b16 %v207
    %v720 = vunpack.c.h.b16 %v207
    %v721 = vunpack.c.l.b16 %v208
    %v722 = vunpack.c.h.b16 %v208
    %v723 = vunpack.c.l.b16 %v209
    %v724 = vunpack.c.h.b16 %v209
    %v725 = vunpack.c.l.b16 %v210
    %v726 = vunpack.c.h.b16 %v210
    %v727 = vunpack.c.l.b16 %v211
    %v728 = vunpack.c.h.b16 %v211
    %v729 = vunpack.c.l.b16 %v212
    %v730 = vunpack.c.h.b16 %v212
    %v731 = vunpack.c.l.b16 %v213
    %v732 = vunpack.c.h.b16 %v213
    %v733 = vunpack.c.l.b16 %v214
    %v734 = vunpack.c.h.b16 %v214
    %v735 = vunpack.c.l.b16 %v215
    %v736 = vunpack.c.h.b16 %v215
    %v737 = vunpack.c.l.b16 %v216
    %v738 = vunpack.c.h.b16 %v216
    %v739 = vunpack.c.l.b16 %v217
    %v740 = vunpack.c.h.b16 %v217
    %v741 = vunpack.c.l.b16 %v218
    %v742 = vunpack.c.h.b16 %v218
    %v743 = vunpack.c.l.b16 %v219
    %v744 = vunpack.c.h.b16 %v219
    %v745 = vunpack.c.l.b16 %v220
    %v746 = vunpack.c.h.b16 %v220
    %v747 = vunpack.c.l.b16 %v221
    %v748 = vunpack.c.h.b16 %v221
    %v749 = vunpack.c.l.b16 %v222
    %v750 = vunpack.c.h.b16 %v222
    %v751 = vunpack.c.l.b16 %v223
    %v752 = vunpack.c.h.b16 %v223
    %v753 = vunpack.c.l.b16 %v224
    %v754 = vunpack.c.h.b16 %v224
    %v755 = vunpack.c.l.b16 %v225
    %v756 = vunpack.c.h.b16 %v225
    %v757 = vunpack.c.l.b16 %v226
    %v758 = vunpack.c.h.b16 %v226
    %v759 = vunpack.c.l.b16 %v227
    %v760 = vunpack.c.h.b16 %v227
    %v761 = vunpack.c.l.b16 %v228
    %v762 = vunpack.c.h.b16 %v228
    %v763 = vunpack.c.l.b16 %v229
    %v764 = vunpack.c.h.b16 %v229
    %v765 = vunpack.c.l.b16 %v230
    %v766 = vunpack.c.h.b16 %v230
    %v767 = vunpack.c.l.b16 %v231
    %v768 = vunpack.c.h.b16 %v231
    %v769 = vunpack.c.l.b16 %v232
    %v770 = vunpack.c.h.b16 %v232
    %v771 = vunpack.c.l.b16 %v233
    %v772 = vunpack.c.h.b16 %v233
    %v773 = vunpack.c.l.b16 %v234
    %v774 = vunpack.c.h.b16 %v234
    %v775 = vunpack.c.l.b16 %v235
    %v776 = vunpack.c.h.b16 %v235
    %v777 = vunpack.c.l.b16 %v236
    %v778 = vunpack.c.h.b16 %v236
    %v779 = vunpack.c.l.b16 %v237
    %v780 = vunpack.c.h.b16 %v237
    %v781 = vunpack.c.l.b16 %v238
    %v782 = vunpack.c.h.b16 %v238
    %v783 = vunpack.c.l.b16 %v239
    %v784 = vunpack.c.h.b16 %v239
    %v785 = vunpack.c.l.b16 %v240
    %v786 = vunpack.c.h.b16 %v240
    %v787 = vunpack.c.l.b16 %v241
    %v788 = vunpack.c.h.b16 %v241
    %v789 = vunpack.c.l.b16 %v242
    %v790 = vunpack.c.h.b16 %v242
    %v791 = vunpack.c.l.b16 %v243
    %v792 = vunpack.c.h.b16 %v243
    %v793 = vunpack.c.l.b16 %v244
    %v794 = vunpack.c.h.b16 %v244
    %v795 = vunpack.c.l.b16 %v245
    %v796 = vunpack.c.h.b16 %v245
    %v797 = vunpack.c.l.b16 %v246
    %v798 = vunpack.c.h.b16 %v246
    %v799 = vunpack.c.l.b16 %v247
    %v800 = vunpack.c.h.b16 %v247
    %v801 = vunpack.c.l.b16 %v248
    %v802 = vunpack.c.h.b16 %v248
    %v803 = vunpack.c.l.b16 %v249
    %v804 = vunpack.c.h.b16 %v249
    %v805 = vunpack.c.l.b16 %v250
    %v806 = vunpack.c.h.b16 %v250
    %v807 = vunpack.c.l.b16 %v251
    %v808 = vunpack.c.h.b16 %v251
    %v809 = vunpack.c.l.b16 %v252
    %v810 = vunpack.c.h.b16 %v252
    %v811 = vunpack.c.l.b16 %v253
    %v812 = vunpack.c.h.b16 %v253
    %v813 = vunpack.c.l.b16 %v254
    %v814 = vunpack.c.h.b16 %v254
    %v815 = vunpack.c.l.b16 %v255
    %v816 = vunpack.c.h.b16 %v255
    %v817 = vunpack.c.l.b16 %v256
    %v818 = vunpack.c.h.b16 %v256
    %v819 = vunpack.c.l.b16 %v257
    %v820 = vunpack.c.h.b16 %v257
    %v821 = vunpack.c.l.b16 %v258
    %v822 = vunpack.c.h.b16 %v258
    %v823 = vunpack.c.l.b16 %v259
    %v824 = vunpack.c.h.b16 %v259
    %v825 = vunpack.c.l.b16 %v260
    %v826 = vunpack.c.h.b16 %v260
    %v827 = vunpack.c.l.b16 %v261
    %v828 = vunpack.c.h.b16 %v261
    %v829 = vunpack.c.l.b16 %v262
    %v830 = vunpack.c.h.b16 %v262
    %v831 = vunpack.c.l.b16 %v263
    %v832 = vunpack.c.h.b16 %v263
    %v833 = vunpack.c.l.b16 %v264
    %v834 = vunpack.c.h.b16 %v264
    %v835 = vunpack.c.l.b16 %v265
    %v836 = vunpack.c.h.b16 %v265
    %v837 = vunpack.c.l.b16 %v266
    %v838 = vunpack.c.h.b16 %v266
    %v839 = vunpack.c.l.b16 %v267
    %v840 = vunpack.c.h.b16 %v267
    %v841 = vunpack.c.l.b16 %v268
    %v842 = vunpack.c.h.b16 %v268
    %v843 = vunpack.c.l.b16 %v269
    %v844 = vunpack.c.h.b16 %v269
    %v845 = vunpack.c.l.b16 %v270
    %v846 = vunpack.c.h.b16 %v270
    %v847 = vunpack.c.l.b16 %v271
    %v848 = vunpack.c.h.b16 %v271
    %v849 = vunpack.c.l.b16 %v272
    %v850 = vunpack.c.h.b16 %v272
    %v851 = vunpack.c.l.b16 %v273
    %v852 = vunpack.c.h.b16 %v273
    %v853 = vunpack.c.l.b16 %v274
    %v854 = vunpack.c.h.b16 %v274
    %v855 = vunpack.c.l.b16 %v275
    %v856 = vunpack.c.h.b16 %v275
    %v857 = vunpack.c.l.b16 %v276
    %v858 = vunpack.c.h.b16 %v276
    %v859 = vunpack.c.l.b16 %v277
    %v860 = vunpack.c.h.b16 %v277
    %v861 = vunpack.c.l.b16 %v278
    %v862 = vunpack.c.h.b16 %v278
    %v863 = vunpack.c.l.b16 %v279
    %v864 = vunpack.c.h.b16 %v279
    %v865 = vunpack.c.l.b16 %v280
    %v866 = vunpack.c.h.b16 %v280
    %v867 = vunpack.c.l.b16 %v281
    %v868 = vunpack.c.h.b16 %v281
    %v869 = vunpack.c.l.b16 %v282
    %v870 = vunpack.c.h.b16 %v282
    %v871 = vunpack.c.l.b16 %v283
    %v872 = vunpack.c.h.b16 %v283
    %v873 = vunpack.c.l.b16 %v284
    %v874 = vunpack.c.h.b16 %v284
    %v875 = vunpack.c.l.b16 %v285
    %v876 = vunpack.c.h.b16 %v285
    %v877 = vunpack.c.l.b16 %v286
    %v878 = vunpack.c.h.b16 %v286
    %v879 = vunpack.c.l.b16 %v287
    %v880 = vunpack.c.h.b16 %v287
    %v881 = vunpack.c.l.b16 %v288
    %v882 = vunpack.c.h.b16 %v288
    %v883 = vunpack.c.l.b16 %v289
    %v884 = vunpack.c.h.b16 %v289
    %v885 = vunpack.c.l.b16 %v290
    %v886 = vunpack.c.h.b16 %v290
    %v887 = vunpack.c.l.b16 %v291
    %v888 = vunpack.c.h.b16 %v291
    %v889 = vunpack.c.l.b16 %v292
    %v890 = vunpack.c.h.b16 %v292
    %v891 = vpack.c.b16 %v511, %v507
    %v892 = vpack.c.b16 %v512, %v508
    %v893 = vpack.c.b16 %v513, %v509
    %v894 = vpack.c.b16 %v514, %v510
    %v895 = vpack.c.b16 %v519, %v515
    %v896 = vpack.c.b16 %v520, %v516
    %v897 = vpack.c.b16 %v521, %v517
    %v898 = vpack.c.b16 %v522, %v518
    %v899 = vpack.c.b16 %v527, %v523
    %v900 = vpack.c.b16 %v528, %v524
    %v901 = vpack.c.b16 %v529, %v525
    %v902 = vpack.c.b16 %v530, %v526
    %v903 = vpack.c.b16 %v535, %v531
    %v904 = vpack.c.b16 %v536, %v532
    %v905 = vpack.c.b16 %v537, %v533
    %v906 = vpack.c.b16 %v538, %v534
    %v907 = vpack.c.b16 %v543, %v539
    %v908 = vpack.c.b16 %v544, %v540
    %v909 = vpack.c.b16 %v545, %v541
    %v910 = vpack.c.b16 %v546, %v542
    %v911 = vpack.c.b16 %v551, %v547
    %v912 = vpack.c.b16 %v552, %v548
    %v913 = vpack.c.b16 %v553, %v549
    %v914 = vpack.c.b16 %v554, %v550
    %v915 = vpack.c.b16 %v559, %v555
    %v916 = vpack.c.b16 %v560, %v556
    %v917 = vpack.c.b16 %v561, %v557
    %v918 = vpack.c.b16 %v562, %v558
    %v919 = vpack.c.b16 %v567, %v563
    %v920 = vpack.c.b16 %v568, %v564
    %v921 = vpack.c.b16 %v569, %v565
    %v922 = vpack.c.b16 %v570, %v566
    %v923 = vpack.c.b16 %v575, %v571
    %v924 = vpack.c.b16 %v576, %v572
    %v925 = vpack.c.b16 %v577, %v573
    %v926 = vpack.c.b16 %v578, %v574
    %v927 = vpack.c.b16 %v583, %v579
    %v928 = vpack.c.b16 %v584, %v580
    %v929 = vpack.c.b16 %v585, %v581
    %v930 = vpack.c.b16 %v586, %v582
    %v931 = vpack.c.b16 %v591, %v587
    %v932 = vpack.c.b16 %v592, %v588
    %v933 = vpack.c.b16 %v593, %v589
    %v934 = vpack.c.b16 %v594, %v590
    %v935 = vpack.c.b16 %v599, %v595
    %v936 = vpack.c.b16 %v600, %v596
    %v937 = vpack.c.b16 %v601, %v597
    %v938 = vpack.c.b16 %v602, %v598
    %v939 = vpack.c.b16 %v607, %v603
    %v940 = vpack.c.b16 %v608, %v604
    %v941 = vpack.c.b16 %v609, %v605
    %v942 = vpack.c.b16 %v610, %v606
    %v943 = vpack.c.b16 %v615, %v611
    %v944 = vpack.c.b16 %v616, %v612
    %v945 = vpack.c.b16 %v617, %v613
    %v946 = vpack.c.b16 %v618, %v614
    %v947 = vpack.c.b16 %v623, %v619
    %v948 = vpack.c.b16 %v624, %v620
    %v949 = vpack.c.b16 %v625, %v621
    %v950 = vpack.c.b16 %v626, %v622
    %v951 = vpack.c.b16 %v631, %v627
    %v952 = vpack.c.b16 %v632, %v628
    %v953 = vpack.c.b16 %v633, %v629
    %v954 = vpack.c.b16 %v634, %v630
    %v955 = vpack.c.b16 %v639, %v635
    %v956 = vpack.c.b16 %v640, %v636
    %v957 = vpack.c.b16 %v641, %v637
    %v958 = vpack.c.b16 %v642, %v638
    %v959 = vpack.c.b16 %v647, %v643
    %v960 = vpack.c.b16 %v648, %v644
    %v961 = vpack.c.b16 %v649, %v645
    %v962 = vpack.c.b16 %v650, %v646
    %v963 = vpack.c.b16 %v655, %v651
    %v964 = vpack.c.b16 %v656, %v652
    %v965 = vpack.c.b16 %v657, %v653
    %v966 = vpack.c.b16 %v658, %v654
    %v967 = vpack.c.b16 %v663, %v659
    %v968 = vpack.c.b16 %v664, %v660
    %v969 = vpack.c.b16 %v665, %v661
    %v970 = vpack.c.b16 %v666, %v662
    %v971 = vpack.c.b16 %v671, %v667
    %v972 = vpack.c.b16 %v672, %v668
    %v973 = vpack.c.b16 %v673, %v669
    %v974 = vpack.c.b16 %v674, %v670
    %v975 = vpack.c.b16 %v679, %v675
    %v976 = vpack.c.b16 %v680, %v676
    %v977 = vpack.c.b16 %v681, %v677
    %v978 = vpack.c.b16 %v682, %v678
    %v979 = vpack.c.b16 %v687, %v683
    %v980 = vpack.c.b16 %v688, %v684
    %v981 = vpack.c.b16 %v689, %v685
    %v982 = vpack.c.b16 %v690, %v686
    %v983 = vpack.c.b16 %v695, %v691
    %v984 = vpack.c.b16 %v696, %v692
    %v985 = vpack.c.b16 %v697, %v693
    %v986 = vpack.c.b16 %v698, %v694
    %v987 = vpack.c.b16 %v703, %v699
    %v988 = vpack.c.b16 %v704, %v700
    %v989 = vpack.c.b16 %v705, %v701
    %v990 = vpack.c.b16 %v706, %v702
    %v991 = vpack.c.b16 %v711, %v707
    %v992 = vpack.c.b16 %v712, %v708
    %v993 = vpack.c.b16 %v713, %v709
    %v994 = vpack.c.b16 %v714, %v710
    %v995 = vpack.c.b16 %v719, %v715
    %v996 = vpack.c.b16 %v720, %v716
    %v997 = vpack.c.b16 %v721, %v717
    %v998 = vpack.c.b16 %v722, %v718
    %v999 = vpack.c.b16 %v727, %v723
    %v1000 = vpack.c.b16 %v728, %v724
    %v1001 = vpack.c.b16 %v729, %v725
    %v1002 = vpack.c.b16 %v730, %v726
    %v1003 = vpack.c.b16 %v735, %v731
    %v1004 = vpack.c.b16 %v736, %v732
    %v1005 = vpack.c.b16 %v737, %v733
    %v1006 = vpack.c.b16 %v738, %v734
    %v1007 = vpack.c.b16 %v743, %v739
    %v1008 = vpack.c.b16 %v744, %v740
    %v1009 = vpack.c.b16 %v745, %v741
    %v1010 = vpack.c.b16 %v746, %v742
    %v1011 = vpack.c.b16 %v751, %v747
    %v1012 = vpack.c.b16 %v752, %v748
    %v1013 = vpack.c.b16 %v753, %v749
    %v1014 = vpack.c.b16 %v754, %v750
    %v1015 = vpack.c.b16 %v759, %v755
    %v1016 = vpack.c.b16 %v760, %v756
    %v1017 = vpack.c.b16 %v761, %v757
    %v1018 = vpack.c.b16 %v762, %v758
    %v1019 = vpack.c.b16 %v767, %v763
    %v1020 = vpack.c.b16 %v768, %v764
    %v1021 = vpack.c.b16 %v769, %v765
    %v1022 = vpack.c.b16 %v770, %v766
    %v1023 = vpack.c.b16 %v775, %v771
    %v1024 = vpack.c.b16 %v776, %v772
    %v1025 = vpack.c.b16 %v777, %v773
    %v1026 = vpack.c.b16 %v778, %v774
    %v1027 = vpack.c.b16 %v783, %v779
    %v1028 = vpack.c.b16 %v784, %v780
    %v1029 = vpack.c.b16 %v785, %v781
    %v1030 = vpack.c.b16 %v786, %v782
    %v1031 = vpack.c.b16 %v791, %v787
    %v1032 = vpack.c.b16 %v792, %v788
    %v1033 = vpack.c.b16 %v793, %v789
    %v1034 = vpack.c.b16 %v794, %v790
    %v1035 = vpack.c.b16 %v799, %v795
    %v1036 = vpack.c.b16 %v800, %v796
    %v1037 = vpack.c.b16 %v801, %v797
    %v1038 = vpack.c.b16 %v802, %v798
    %v1039 = vpack.c.b16 %v807, %v803
    %v1040 = vpack.c.b16 %v808, %v804
    %v1041 = vpack.c.b16 %v809, %v805
    %v1042 = vpack.c.b16 %v810, %v806
    %v1043 = vpack.c.b16 %v815, %v811
    %v1044 = vpack.c.b16 %v816, %v812
    %v1045 = vpack.c.b16 %v817, %v813
    %v1046 = vpack.c.b16 %v818, %v814
    %v1047 = vpack.c.b16 %v823, %v819
    %v1048 = vpack.c.b16 %v824, %v820
    %v1049 = vpack.c.b16 %v825, %v821
    %v1050 = vpack.c.b16 %v826, %v822
    %v1051 = vpack.c.b16 %v831, %v827
    %v1052 = vpack.c.b16 %v832, %v828
    %v1053 = vpack.c.b16 %v833, %v829
    %v1054 = vpack.c.b16 %v834, %v830
    %v1055 = vpack.c.b16 %v839, %v835
    %v1056 = vpack.c.b16 %v840, %v836
    %v1057 = vpack.c.b16 %v841, %v837
    %v1058 = vpack.c.b16 %v842, %v838
    %v1059 = vpack.c.b16 %v847, %v843
    %v1060 = vpack.c.b16 %v848, %v844
    %v1061 = vpack.c.b16 %v849, %v845
    %v1062 = vpack.c.b16 %v850, %v846
    %v1063 = vpack.c.b16 %v855, %v851
    %v1064 = vpack.c.b16 %v856, %v852
    %v1065 = vpack.c.b16 %v857, %v853
    %v1066 = vpack.c.b16 %v858, %v854
    %v1067 = vpack.c.b16 %v863, %v859
    %v1068 = vpack.c.b16 %v864, %v860
    %v1069 = vpack.c.b16 %v865, %v861
    %v1070 = vpack.c.b16 %v866, %v862
    %v1071 = vpack.c.b16 %v871, %v867
    %v1072 = vpack.c.b16 %v872, %v868
    %v1073 = vpack.c.b16 %v873, %v869
    %v1074 = vpack.c.b16 %v874, %v870
    %v1075 = vpack.c.b16 %v879, %v875
    %v1076 = vpack.c.b16 %v880, %v876
    %v1077 = vpack.c.b16 %v881, %v877
    %v1078 = vpack.c.b16 %v882, %v878
    %v1079 = vpack.c.b16 %v887, %v883
    %v1080 = vpack.c.b16 %v888, %v884
    %v1081 = vpack.c.b16 %v889, %v885
    %v1082 = vpack.c.b16 %v890, %v886
    %1275 = vmatprep.subr.bf16.mxu0 %v892
    %1276 = vmatpush1.bf16.msra.mxu0 %v891
    %1277 = vmatprep.subr.bf16.mxu0 %v896
    %1278 = vmatpush1.bf16.msra.mxu0 %v895
    %1279 = vmatprep.subr.bf16.mxu0 %v900
    %1280 = vmatpush1.bf16.msra.mxu0 %v899
    %1281 = vmatprep.subr.bf16.mxu0 %v904
    %1282 = vmatpush1.bf16.msra.mxu0 %v903
    %1283 = vmatprep.subr.bf16.mxu0 %v908
    %1284 = vmatpush1.bf16.msra.mxu0 %v907
    %1285 = vmatprep.subr.bf16.mxu0 %v912
    %1286 = vmatpush1.bf16.msra.mxu0 %v911
    %1287 = vmatprep.subr.bf16.mxu0 %v916
    %1288 = vmatpush1.bf16.msra.mxu0 %v915
    %1289 = vmatprep.subr.bf16.mxu0 %v920
    %1290 = vmatpush1.bf16.msra.mxu0 %v919
    %1291 = vmatprep.subr.bf16.mxu0 %v924
    %1292 = vmatpush1.bf16.msra.mxu0 %v923
    %1293 = vmatprep.subr.bf16.mxu0 %v928
    %1294 = vmatpush1.bf16.msra.mxu0 %v927
    %1295 = vmatprep.subr.bf16.mxu0 %v932
    %1296 = vmatpush1.bf16.msra.mxu0 %v931
    %1297 = vmatprep.subr.bf16.mxu0 %v936
    %1298 = vmatpush1.bf16.msra.mxu0 %v935
    %1299 = vmatprep.subr.bf16.mxu0 %v940
    %1300 = vmatpush1.bf16.msra.mxu0 %v939
    %1301 = vmatprep.subr.bf16.mxu0 %v944
    %1302 = vmatpush1.bf16.msra.mxu0 %v943
    %1303 = vmatprep.subr.bf16.mxu0 %v948
    %1304 = vmatpush1.bf16.msra.mxu0 %v947
    %1305 = vmatprep.subr.bf16.mxu0 %v952
    %1306 = vmatpush1.bf16.msra.mxu0 %v951
    %1307 = vmatprep.mubr.bf16.mxu0 %v96
    %1308 = vmatmul.mubr.bf16.gmra.mrb[0].mxu0 %v95
    %v1309 = vpop.f32.mrb[0].mxu0
    %v1310 = vadd.f32 %v298, %v1309
    %v1311 = vpop.f32.mrb[0].mxu0
    %v1312 = vadd.f32 %v302, %v1311
    %v1313 = vpop.f32.mrb[0].mxu0
    %v1314 = vadd.f32 %v298, %v1313
    %v1315 = vpop.f32.mrb[0].mxu0
    %v1316 = vadd.f32 %v302, %v1315
    %1317 = vdwg.mxu0
    %1318 = vmatprep.subr.bf16.mxu0 %v956
    %1319 = vmatpush1.bf16.msra.mxu0 %v955
    %1320 = vmatprep.subr.bf16.mxu0 %v960
    %1321 = vmatpush1.bf16.msra.mxu0 %v959
    %1322 = vmatprep.subr.bf16.mxu0 %v964
    %1323 = vmatpush1.bf16.msra.mxu0 %v963
    %1324 = vmatprep.subr.bf16.mxu0 %v968
    %1325 = vmatpush1.bf16.msra.mxu0 %v967
    %1326 = vmatprep.subr.bf16.mxu0 %v972
    %1327 = vmatpush1.bf16.msra.mxu0 %v971
    %1328 = vmatprep.subr.bf16.mxu0 %v976
    %1329 = vmatpush1.bf16.msra.mxu0 %v975
    %1330 = vmatprep.subr.bf16.mxu0 %v980
    %1331 = vmatpush1.bf16.msra.mxu0 %v979
    %1332 = vmatprep.subr.bf16.mxu0 %v984
    %1333 = vmatpush1.bf16.msra.mxu0 %v983
    %1334 = vmatprep.subr.bf16.mxu0 %v988
    %1335 = vmatpush1.bf16.msra.mxu0 %v987
    %1336 = vmatprep.subr.bf16.mxu0 %v992
    %1337 = vmatpush1.bf16.msra.mxu0 %v991
    %1338 = vmatprep.subr.bf16.mxu0 %v996
    %1339 = vmatpush1.bf16.msra.mxu0 %v995
    %1340 = vmatprep.subr.bf16.mxu0 %v1000
    %1341 = vmatpush1.bf16.msra.mxu0 %v999
    %1342 = vmatprep.subr.bf16.mxu0 %v1004
    %1343 = vmatpush1.bf16.msra.mxu0 %v1003
    %1344 = vmatprep.subr.bf16.mxu0 %v1008
    %1345 = vmatpush1.bf16.msra.mxu0 %v1007
    %1346 = vmatprep.subr.bf16.mxu0 %v1012
    %1347 = vmatpush1.bf16.msra.mxu0 %v1011
    %1348 = vmatprep.subr.bf16.mxu0 %v1016
    %1349 = vmatpush1.bf16.msra.mxu0 %v1015
    %1350 = vmatprep.mubr.bf16.mxu0 %v98
    %1351 = vmatmul.mubr.bf16.gmra.mrb[0].mxu0 %v97
    %v1352 = vpop.f32.mrb[0].mxu0
    %v1353 = vadd.f32 %v1310, %v1352
    %v1354 = vpop.f32.mrb[0].mxu0
    %v1355 = vadd.f32 %v1312, %v1354
    %v1356 = vpop.f32.mrb[0].mxu0
    %v1357 = vadd.f32 %v1314, %v1356
    %v1358 = vpop.f32.mrb[0].mxu0
    %v1359 = vadd.f32 %v1316, %v1358
    %1360 = vdwg.mxu0
    %1361 = vmatprep.subr.bf16.mxu0 %v1020
    %1362 = vmatpush1.bf16.msra.mxu0 %v1019
    %1363 = vmatprep.subr.bf16.mxu0 %v1024
    %1364 = vmatpush1.bf16.msra.mxu0 %v1023
    %1365 = vmatprep.subr.bf16.mxu0 %v1028
    %1366 = vmatpush1.bf16.msra.mxu0 %v1027
    %1367 = vmatprep.subr.bf16.mxu0 %v1032
    %1368 = vmatpush1.bf16.msra.mxu0 %v1031
    %1369 = vmatprep.subr.bf16.mxu0 %v1036
    %1370 = vmatpush1.bf16.msra.mxu0 %v1035
    %1371 = vmatprep.subr.bf16.mxu0 %v1040
    %1372 = vmatpush1.bf16.msra.mxu0 %v1039
    %1373 = vmatprep.subr.bf16.mxu0 %v1044
    %1374 = vmatpush1.bf16.msra.mxu0 %v1043
    %1375 = vmatprep.subr.bf16.mxu0 %v1048
    %1376 = vmatpush1.bf16.msra.mxu0 %v1047
    %1377 = vmatprep.subr.bf16.mxu0 %v1052
    %1378 = vmatpush1.bf16.msra.mxu0 %v1051
    %1379 = vmatprep.subr.bf16.mxu0 %v1056
    %1380 = vmatpush1.bf16.msra.mxu0 %v1055
    %1381 = vmatprep.subr.bf16.mxu0 %v1060
    %1382 = vmatpush1.bf16.msra.mxu0 %v1059
    %1383 = vmatprep.subr.bf16.mxu0 %v1064
    %1384 = vmatpush1.bf16.msra.mxu0 %v1063
    %1385 = vmatprep.subr.bf16.mxu0 %v1068
    %1386 = vmatpush1.bf16.msra.mxu0 %v1067
    %1387 = vmatprep.subr.bf16.mxu0 %v1072
    %1388 = vmatpush1.bf16.msra.mxu0 %v1071
    %1389 = vmatprep.subr.bf16.mxu0 %v1076
    %1390 = vmatpush1.bf16.msra.mxu0 %v1075
    %1391 = vmatprep.subr.bf16.mxu0 %v1080
    %1392 = vmatpush1.bf16.msra.mxu0 %v1079
    %1393 = vmatprep.mubr.bf16.mxu0 %v100
    %1394 = vmatmul.mubr.bf16.gmra.mrb[0].mxu0 %v99
    %v1395 = vpop.f32.mrb[0].mxu0
    %v1396 = vadd.f32 %v1353, %v1395
    %v1397 = vpop.f32.mrb[0].mxu0
    %v1398 = vadd.f32 %v1355, %v1397
    %v1399 = vpop.f32.mrb[0].mxu0
    %v1400 = vadd.f32 %v1357, %v1399
    %v1401 = vpop.f32.mrb[0].mxu0
    %v1402 = vadd.f32 %v1359, %v1401
    %1403 = vdwg.mxu0
    %1404 = vmatprep.subr.bf16.mxu0 %v894
    %1405 = vmatpush1.bf16.msra.mxu0 %v893
    %1406 = vmatprep.subr.bf16.mxu0 %v898
    %1407 = vmatpush1.bf16.msra.mxu0 %v897
    %1408 = vmatprep.subr.bf16.mxu0 %v902
    %1409 = vmatpush1.bf16.msra.mxu0 %v901
    %1410 = vmatprep.subr.bf16.mxu0 %v906
    %1411 = vmatpush1.bf16.msra.mxu0 %v905
    %1412 = vmatprep.subr.bf16.mxu0 %v910
    %1413 = vmatpush1.bf16.msra.mxu0 %v909
    %1414 = vmatprep.subr.bf16.mxu0 %v914
    %1415 = vmatpush1.bf16.msra.mxu0 %v913
    %1416 = vmatprep.subr.bf16.mxu0 %v918
    %1417 = vmatpush1.bf16.msra.mxu0 %v917
    %1418 = vmatprep.subr.bf16.mxu0 %v922
    %1419 = vmatpush1.bf16.msra.mxu0 %v921
    %1420 = vmatprep.subr.bf16.mxu0 %v926
    %1421 = vmatpush1.bf16.msra.mxu0 %v925
    %1422 = vmatprep.subr.bf16.mxu0 %v930
    %1423 = vmatpush1.bf16.msra.mxu0 %v929
    %1424 = vmatprep.subr.bf16.mxu0 %v934
    %1425 = vmatpush1.bf16.msra.mxu0 %v933
    %1426 = vmatprep.subr.bf16.mxu0 %v938
    %1427 = vmatpush1.bf16.msra.mxu0 %v937
    %1428 = vmatprep.subr.bf16.mxu0 %v942
    %1429 = vmatpush1.bf16.msra.mxu0 %v941
    %1430 = vmatprep.subr.bf16.mxu0 %v946
    %1431 = vmatpush1.bf16.msra.mxu0 %v945
    %1432 = vmatprep.subr.bf16.mxu0 %v950
    %1433 = vmatpush1.bf16.msra.mxu0 %v949
    %1434 = vmatprep.subr.bf16.mxu0 %v954
    %1435 = vmatpush1.bf16.msra.mxu0 %v953
    %1436 = vmatprep.mubr.bf16.mxu0 %v96
    %1437 = vmatmul.mubr.bf16.gmra.mrb[0].mxu0 %v95
    %v1438 = vpop.f32.mrb[0].mxu0
    %v1439 = vadd.f32 %v306, %v1438
    %v1440 = vpop.f32.mrb[0].mxu0
    %v1441 = vadd.f32 %v310, %v1440
    %v1442 = vpop.f32.mrb[0].mxu0
    %v1443 = vadd.f32 %v306, %v1442
    %v1444 = vpop.f32.mrb[0].mxu0
    %v1445 = vadd.f32 %v310, %v1444
    %1446 = vdwg.mxu0
    %1447 = vmatprep.subr.bf16.mxu0 %v958
    %1448 = vmatpush1.bf16.msra.mxu0 %v957
    %1449 = vmatprep.subr.bf16.mxu0 %v962
    %1450 = vmatpush1.bf16.msra.mxu0 %v961
    %1451 = vmatprep.subr.bf16.mxu0 %v966
    %1452 = vmatpush1.bf16.msra.mxu0 %v965
    %1453 = vmatprep.subr.bf16.mxu0 %v970
    %1454 = vmatpush1.bf16.msra.mxu0 %v969
    %1455 = vmatprep.subr.bf16.mxu0 %v974
    %1456 = vmatpush1.bf16.msra.mxu0 %v973
    %1457 = vmatprep.subr.bf16.mxu0 %v978
    %1458 = vmatpush1.bf16.msra.mxu0 %v977
    %1459 = vmatprep.subr.bf16.mxu0 %v982
    %1460 = vmatpush1.bf16.msra.mxu0 %v981
    %1461 = vmatprep.subr.bf16.mxu0 %v986
    %1462 = vmatpush1.bf16.msra.mxu0 %v985
    %1463 = vmatprep.subr.bf16.mxu0 %v990
    %1464 = vmatpush1.bf16.msra.mxu0 %v989
    %1465 = vmatprep.subr.bf16.mxu0 %v994
    %1466 = vmatpush1.bf16.msra.mxu0 %v993
    %1467 = vmatprep.subr.bf16.mxu0 %v998
    %1468 = vmatpush1.bf16.msra.mxu0 %v997
    %1469 = vmatprep.subr.bf16.mxu0 %v1002
    %1470 = vmatpush1.bf16.msra.mxu0 %v1001
    %1471 = vmatprep.subr.bf16.mxu0 %v1006
    %1472 = vmatpush1.bf16.msra.mxu0 %v1005
    %1473 = vmatprep.subr.bf16.mxu0 %v1010
    %1474 = vmatpush1.bf16.msra.mxu0 %v1009
    %1475 = vmatprep.subr.bf16.mxu0 %v1014
    %1476 = vmatpush1.bf16.msra.mxu0 %v1013
    %1477 = vmatprep.subr.bf16.mxu0 %v1018
    %1478 = vmatpush1.bf16.msra.mxu0 %v1017
    %1479 = vmatprep.mubr.bf16.mxu0 %v98
    %1480 = vmatmul.mubr.bf16.gmra.mrb[0].mxu0 %v97
    %v1481 = vpop.f32.mrb[0].mxu0
    %v1482 = vadd.f32 %v1439, %v1481
    %v1483 = vpop.f32.mrb[0].mxu0
    %v1484 = vadd.f32 %v1441, %v1483
    %v1485 = vpop.f32.mrb[0].mxu0
    %v1486 = vadd.f32 %v1443, %v1485
    %v1487 = vpop.f32.mrb[0].mxu0
    %v1488 = vadd.f32 %v1445, %v1487
    %1489 = vdwg.mxu0
    %1490 = vmatprep.subr.bf16.mxu0 %v1022
    %1491 = vmatpush1.bf16.msra.mxu0 %v1021
    %1492 = vmatprep.subr.bf16.mxu0 %v1026
    %1493 = vmatpush1.bf16.msra.mxu0 %v1025
    %1494 = vmatprep.subr.bf16.mxu0 %v1030
    %1495 = vmatpush1.bf16.msra.mxu0 %v1029
    %1496 = vmatprep.subr.bf16.mxu0 %v1034
    %1497 = vmatpush1.bf16.msra.mxu0 %v1033
    %1498 = vmatprep.subr.bf16.mxu0 %v1038
    %1499 = vmatpush1.bf16.msra.mxu0 %v1037
    %1500 = vmatprep.subr.bf16.mxu0 %v1042
    %1501 = vmatpush1.bf16.msra.mxu0 %v1041
    %1502 = vmatprep.subr.bf16.mxu0 %v1046
    %1503 = vmatpush1.bf16.msra.mxu0 %v1045
    %1504 = vmatprep.subr.bf16.mxu0 %v1050
    %1505 = vmatpush1.bf16.msra.mxu0 %v1049
    %1506 = vmatprep.subr.bf16.mxu0 %v1054
    %1507 = vmatpush1.bf16.msra.mxu0 %v1053
    %1508 = vmatprep.subr.bf16.mxu0 %v1058
    %1509 = vmatpush1.bf16.msra.mxu0 %v1057
    %1510 = vmatprep.subr.bf16.mxu0 %v1062
    %1511 = vmatpush1.bf16.msra.mxu0 %v1061
    %1512 = vmatprep.subr.bf16.mxu0 %v1066
    %1513 = vmatpush1.bf16.msra.mxu0 %v1065
    %1514 = vmatprep.subr.bf16.mxu0 %v1070
    %1515 = vmatpush1.bf16.msra.mxu0 %v1069
    %1516 = vmatprep.subr.bf16.mxu0 %v1074
    %1517 = vmatpush1.bf16.msra.mxu0 %v1073
    %1518 = vmatprep.subr.bf16.mxu0 %v1078
    %1519 = vmatpush1.bf16.msra.mxu0 %v1077
    %1520 = vmatprep.subr.bf16.mxu0 %v1082
    %1521 = vmatpush1.bf16.msra.mxu0 %v1081
    %1522 = vmatprep.mubr.bf16.mxu0 %v100
    %1523 = vmatmul.mubr.bf16.gmra.mrb[0].mxu0 %v99
    %v1524 = vpop.f32.mrb[0].mxu0
    %v1525 = vadd.f32 %v1482, %v1524
    %v1526 = vpop.f32.mrb[0].mxu0
    %v1527 = vadd.f32 %v1484, %v1526
    %v1528 = vpop.f32.mrb[0].mxu0
    %v1529 = vadd.f32 %v1486, %v1528
    %v1530 = vpop.f32.mrb[0].mxu0
    %v1531 = vadd.f32 %v1488, %v1530
    %1532 = vdwg.mxu0
    %v1533 = vmax.f32 %v1396, 0.0
    %v1534 = vmax.f32 %v1398, 0.0
    %v1535 = vmax.f32 %v1525, 0.0
    %v1536 = vmax.f32 %v1527, 0.0
    %v1537 = vmax.f32 %v1400, 0.0
    %v1538 = vmax.f32 %v1402, 0.0
    %v1539 = vmax.f32 %v1529, 0.0
    %v1540 = vmax.f32 %v1531, 0.0
    %v1541 = vpack.c.bf16 %v1537, %v1533
    %v1542 = vpack.c.bf16 %v1538, %v1534
    %v1543 = vpack.c.bf16 %v1539, %v1535
    %v1544 = vpack.c.bf16 %v1540, %v1536
    %v1545 = vld [vmem:[#allocation7] sm:$0xf]
    %v1546 = vld [vmem:[#allocation7 + $0x4] sm:$0xf]
    %v1547 = vld [vmem:[#allocation7 + $0x8] sm:$0xf]
    %v1548 = vld [vmem:[#allocation7 + $0xc] sm:$0xf]
    %v1549 = vld [vmem:[#allocation7 + $0x10] sm:$0xf]
    %v1550 = vld [vmem:[#allocation7 + $0x14] sm:$0xf]
    %v1551 = vld [vmem:[#allocation7 + $0x18] sm:$0xf]
    %v1552 = vld [vmem:[#allocation7 + $0x1c] sm:$0xf]
    %v1553 = vld [vmem:[#allocation7 + $0x20] sm:$0xf]
    %v1554 = vld [vmem:[#allocation7 + $0x24] sm:$0xf]
    %v1555 = vld [vmem:[#allocation7 + $0x28] sm:$0xf]
    %v1556 = vld [vmem:[#allocation7 + $0x2c] sm:$0xf]
    %v1557 = vld [vmem:[#allocation7 + $0x30] sm:$0xf]
    %v1558 = vld [vmem:[#allocation7 + $0x34] sm:$0xf]
    %v1559 = vld [vmem:[#allocation7 + $0x38] sm:$0xf]
    %v1560 = vld [vmem:[#allocation7 + $0x3c] sm:$0xf]
    %v1561 = vld [vmem:[#allocation7 + $0x40] sm:$0xf]
    %v1562 = vld [vmem:[#allocation7 + $0x44] sm:$0xf]
    %v1563 = vld [vmem:[#allocation7 + $0x48] sm:$0xf]
    %v1564 = vld [vmem:[#allocation7 + $0x4c] sm:$0xf]
    %v1565 = vld [vmem:[#allocation7 + $0x50] sm:$0xf]
    %v1566 = vld [vmem:[#allocation7 + $0x54] sm:$0xf]
    %v1567 = vld [vmem:[#allocation7 + $0x58] sm:$0xf]
    %v1568 = vld [vmem:[#allocation7 + $0x5c] sm:$0xf]
    %v1569 = vld [vmem:[#allocation7 + $0x60] sm:$0xf]
    %v1570 = vld [vmem:[#allocation7 + $0x64] sm:$0xf]
    %v1571 = vld [vmem:[#allocation7 + $0x68] sm:$0xf]
    %v1572 = vld [vmem:[#allocation7 + $0x6c] sm:$0xf]
    %v1573 = vld [vmem:[#allocation7 + $0x70] sm:$0xf]
    %v1574 = vld [vmem:[#allocation7 + $0x74] sm:$0xf]
    %v1575 = vld [vmem:[#allocation7 + $0x78] sm:$0xf]
    %v1576 = vld [vmem:[#allocation7 + $0x7c] sm:$0xf]
    %v1577 = vld [vmem:[#allocation7 + $0x80] sm:$0xf]
    %v1578 = vld [vmem:[#allocation7 + $0x84] sm:$0xf]
    %v1579 = vld [vmem:[#allocation7 + $0x88] sm:$0xf]
    %v1580 = vld [vmem:[#allocation7 + $0x8c] sm:$0xf]
    %v1581 = vld [vmem:[#allocation7 + $0x90] sm:$0xf]
    %v1582 = vld [vmem:[#allocation7 + $0x94] sm:$0xf]
    %v1583 = vld [vmem:[#allocation7 + $0x98] sm:$0xf]
    %v1584 = vld [vmem:[#allocation7 + $0x9c] sm:$0xf]
    %v1585 = vld [vmem:[#allocation7 + $0xa0] sm:$0xf]
    %v1586 = vld [vmem:[#allocation7 + $0xa4] sm:$0xf]
    %v1587 = vld [vmem:[#allocation7 + $0xa8] sm:$0xf]
    %v1588 = vld [vmem:[#allocation7 + $0xac] sm:$0xf]
    %v1589 = vld [vmem:[#allocation7 + $0xb0] sm:$0xf]
    %v1590 = vld [vmem:[#allocation7 + $0xb4] sm:$0xf]
    %v1591 = vld [vmem:[#allocation7 + $0xb8] sm:$0xf]
    %v1592 = vld [vmem:[#allocation7 + $0xbc] sm:$0xf]
    %v1593 = vld [vmem:[#allocation7 + $0xc0] sm:$0xf]
    %v1594 = vld [vmem:[#allocation7 + $0xc4] sm:$0xf]
    %v1595 = vld [vmem:[#allocation7 + $0xc8] sm:$0xf]
    %v1596 = vld [vmem:[#allocation7 + $0xcc] sm:$0xf]
    %v1597 = vld [vmem:[#allocation7 + $0xd0] sm:$0xf]
    %v1598 = vld [vmem:[#allocation7 + $0xd4] sm:$0xf]
    %v1599 = vld [vmem:[#allocation7 + $0xd8] sm:$0xf]
    %v1600 = vld [vmem:[#allocation7 + $0xdc] sm:$0xf]
    %v1601 = vld [vmem:[#allocation7 + $0xe0] sm:$0xf]
    %v1602 = vld [vmem:[#allocation7 + $0xe4] sm:$0xf]
    %v1603 = vld [vmem:[#allocation7 + $0xe8] sm:$0xf]
    %v1604 = vld [vmem:[#allocation7 + $0xec] sm:$0xf]
    %v1605 = vld [vmem:[#allocation7 + $0xf0] sm:$0xf]
    %v1606 = vld [vmem:[#allocation7 + $0xf4] sm:$0xf]
    %v1607 = vld [vmem:[#allocation7 + $0xf8] sm:$0xf]
    %v1608 = vld [vmem:[#allocation7 + $0xfc] sm:$0xf]
    %v1609 = vld [vmem:[%s4] sm:$0x1]
    %v1611 = vlaneseq
    %v1612 = vshrl.u32 %v1611, 7
    %v1613 = vsub.s32 0, %v1612
    %v1614 = vrot.slane %v1609, %v1613
    %v1680 = vunpack.c.l.b16 %v1545
    %v1681 = vunpack.c.l.b16 %v1546
    %v1682 = vunpack.c.l.b16 %v1547
    %v1683 = vunpack.c.l.b16 %v1548
    %v1684 = vunpack.c.l.b16 %v1549
    %v1685 = vunpack.c.l.b16 %v1550
    %v1686 = vunpack.c.l.b16 %v1551
    %v1687 = vunpack.c.l.b16 %v1552
    %v1688 = vunpack.c.l.b16 %v1553
    %v1689 = vunpack.c.l.b16 %v1554
    %v1690 = vunpack.c.l.b16 %v1555
    %v1691 = vunpack.c.l.b16 %v1556
    %v1692 = vunpack.c.l.b16 %v1557
    %v1693 = vunpack.c.l.b16 %v1558
    %v1694 = vunpack.c.l.b16 %v1559
    %v1695 = vunpack.c.l.b16 %v1560
    %v1696 = vunpack.c.l.b16 %v1561
    %v1697 = vunpack.c.l.b16 %v1562
    %v1698 = vunpack.c.l.b16 %v1563
    %v1699 = vunpack.c.l.b16 %v1564
    %v1700 = vunpack.c.l.b16 %v1565
    %v1701 = vunpack.c.l.b16 %v1566
    %v1702 = vunpack.c.l.b16 %v1567
    %v1703 = vunpack.c.l.b16 %v1568
    %v1704 = vunpack.c.l.b16 %v1569
    %v1705 = vunpack.c.l.b16 %v1570
    %v1706 = vunpack.c.l.b16 %v1571
    %v1707 = vunpack.c.l.b16 %v1572
    %v1708 = vunpack.c.l.b16 %v1573
    %v1709 = vunpack.c.l.b16 %v1574
    %v1710 = vunpack.c.l.b16 %v1575
    %v1711 = vunpack.c.l.b16 %v1576
    %v1712 = vunpack.c.l.b16 %v1577
    %v1713 = vunpack.c.l.b16 %v1578
    %v1714 = vunpack.c.l.b16 %v1579
    %v1715 = vunpack.c.l.b16 %v1580
    %v1716 = vunpack.c.l.b16 %v1581
    %v1717 = vunpack.c.l.b16 %v1582
    %v1718 = vunpack.c.l.b16 %v1583
    %v1719 = vunpack.c.l.b16 %v1584
    %v1720 = vunpack.c.l.b16 %v1585
    %v1721 = vunpack.c.l.b16 %v1586
    %v1722 = vunpack.c.l.b16 %v1587
    %v1723 = vunpack.c.l.b16 %v1588
    %v1724 = vunpack.c.l.b16 %v1589
    %v1725 = vunpack.c.l.b16 %v1590
    %v1726 = vunpack.c.l.b16 %v1591
    %v1727 = vunpack.c.l.b16 %v1592
    %v1728 = vunpack.c.l.b16 %v1593
    %v1729 = vunpack.c.l.b16 %v1594
    %v1730 = vunpack.c.l.b16 %v1595
    %v1731 = vunpack.c.l.b16 %v1596
    %v1732 = vunpack.c.l.b16 %v1597
    %v1733 = vunpack.c.l.b16 %v1598
    %v1734 = vunpack.c.l.b16 %v1599
    %v1735 = vunpack.c.l.b16 %v1600
    %v1736 = vunpack.c.l.b16 %v1601
    %v1737 = vunpack.c.l.b16 %v1602
    %v1738 = vunpack.c.l.b16 %v1603
    %v1739 = vunpack.c.l.b16 %v1604
    %v1740 = vunpack.c.l.b16 %v1605
    %v1741 = vunpack.c.l.b16 %v1606
    %v1742 = vunpack.c.l.b16 %v1607
    %v1743 = vunpack.c.l.b16 %v1608
    %v1744 = vpack.c.b16 %v1681, %v1680
    %v1745 = vpack.c.b16 %v1683, %v1682
    %v1746 = vpack.c.b16 %v1685, %v1684
    %v1747 = vpack.c.b16 %v1687, %v1686
    %v1748 = vpack.c.b16 %v1689, %v1688
    %v1749 = vpack.c.b16 %v1691, %v1690
    %v1750 = vpack.c.b16 %v1693, %v1692
    %v1751 = vpack.c.b16 %v1695, %v1694
    %v1752 = vpack.c.b16 %v1697, %v1696
    %v1753 = vpack.c.b16 %v1699, %v1698
    %v1754 = vpack.c.b16 %v1701, %v1700
    %v1755 = vpack.c.b16 %v1703, %v1702
    %v1756 = vpack.c.b16 %v1705, %v1704
    %v1757 = vpack.c.b16 %v1707, %v1706
    %v1758 = vpack.c.b16 %v1709, %v1708
    %v1759 = vpack.c.b16 %v1711, %v1710
    %v1760 = vpack.c.b16 %v1713, %v1712
    %v1761 = vpack.c.b16 %v1715, %v1714
    %v1762 = vpack.c.b16 %v1717, %v1716
    %v1763 = vpack.c.b16 %v1719, %v1718
    %v1764 = vpack.c.b16 %v1721, %v1720
    %v1765 = vpack.c.b16 %v1723, %v1722
    %v1766 = vpack.c.b16 %v1725, %v1724
    %v1767 = vpack.c.b16 %v1727, %v1726
    %v1768 = vpack.c.b16 %v1729, %v1728
    %v1769 = vpack.c.b16 %v1731, %v1730
    %v1770 = vpack.c.b16 %v1733, %v1732
    %v1771 = vpack.c.b16 %v1735, %v1734
    %v1772 = vpack.c.b16 %v1737, %v1736
    %v1773 = vpack.c.b16 %v1739, %v1738
    %v1774 = vpack.c.b16 %v1741, %v1740
    %v1775 = vpack.c.b16 %v1743, %v1742
    %1808 = vmatprep.subr.bf16.mxu0 0
    %1809 = vmatpush1.bf16.msra.mxu0 %v1744
    %1810 = vmatprep.subr.bf16.mxu0 0
    %1811 = vmatpush1.bf16.msra.mxu0 %v1745
    %1812 = vmatprep.subr.bf16.mxu0 0
    %1813 = vmatpush1.bf16.msra.mxu0 %v1746
    %1814 = vmatprep.subr.bf16.mxu0 0
    %1815 = vmatpush1.bf16.msra.mxu0 %v1747
    %1816 = vmatprep.subr.bf16.mxu0 0
    %1817 = vmatpush1.bf16.msra.mxu0 %v1748
    %1818 = vmatprep.subr.bf16.mxu0 0
    %1819 = vmatpush1.bf16.msra.mxu0 %v1749
    %1820 = vmatprep.subr.bf16.mxu0 0
    %1821 = vmatpush1.bf16.msra.mxu0 %v1750
    %1822 = vmatprep.subr.bf16.mxu0 0
    %1823 = vmatpush1.bf16.msra.mxu0 %v1751
    %1824 = vmatprep.subr.bf16.mxu0 0
    %1825 = vmatpush1.bf16.msra.mxu0 %v1752
    %1826 = vmatprep.subr.bf16.mxu0 0
    %1827 = vmatpush1.bf16.msra.mxu0 %v1753
    %1828 = vmatprep.subr.bf16.mxu0 0
    %1829 = vmatpush1.bf16.msra.mxu0 %v1754
    %1830 = vmatprep.subr.bf16.mxu0 0
    %1831 = vmatpush1.bf16.msra.mxu0 %v1755
    %1832 = vmatprep.subr.bf16.mxu0 0
    %1833 = vmatpush1.bf16.msra.mxu0 %v1756
    %1834 = vmatprep.subr.bf16.mxu0 0
    %1835 = vmatpush1.bf16.msra.mxu0 %v1757
    %1836 = vmatprep.subr.bf16.mxu0 0
    %1837 = vmatpush1.bf16.msra.mxu0 %v1758
    %1838 = vmatprep.subr.bf16.mxu0 0
    %1839 = vmatpush1.bf16.msra.mxu0 %v1759
    %1840 = vmatprep.mubr.bf16.mxu0 %v1542
    %1841 = vmatmul.mubr.bf16.gmra.mrb[0].mxu0 %v1541
    %v1842 = vpop.f32.mrb[0].mxu0
    %v1843 = vadd.f32 %v1614, %v1842
    %v1844 = vpop.f32.mrb[0].mxu0
    %v1845 = vpop.f32.mrb[0].mxu0
    %v1846 = vadd.f32 %v1614, %v1845
    %v1847 = vpop.f32.mrb[0].mxu0
    %1848 = vdwg.mxu0
    %1849 = vmatprep.subr.bf16.mxu0 0
    %1850 = vmatpush1.bf16.msra.mxu0 %v1760
    %1851 = vmatprep.subr.bf16.mxu0 0
    %1852 = vmatpush1.bf16.msra.mxu0 %v1761
    %1853 = vmatprep.subr.bf16.mxu0 0
    %1854 = vmatpush1.bf16.msra.mxu0 %v1762
    %1855 = vmatprep.subr.bf16.mxu0 0
    %1856 = vmatpush1.bf16.msra.mxu0 %v1763
    %1857 = vmatprep.subr.bf16.mxu0 0
    %1858 = vmatpush1.bf16.msra.mxu0 %v1764
    %1859 = vmatprep.subr.bf16.mxu0 0
    %1860 = vmatpush1.bf16.msra.mxu0 %v1765
    %1861 = vmatprep.subr.bf16.mxu0 0
    %1862 = vmatpush1.bf16.msra.mxu0 %v1766
    %1863 = vmatprep.subr.bf16.mxu0 0
    %1864 = vmatpush1.bf16.msra.mxu0 %v1767
    %1865 = vmatprep.subr.bf16.mxu0 0
    %1866 = vmatpush1.bf16.msra.mxu0 %v1768
    %1867 = vmatprep.subr.bf16.mxu0 0
    %1868 = vmatpush1.bf16.msra.mxu0 %v1769
    %1869 = vmatprep.subr.bf16.mxu0 0
    %1870 = vmatpush1.bf16.msra.mxu0 %v1770
    %1871 = vmatprep.subr.bf16.mxu0 0
    %1872 = vmatpush1.bf16.msra.mxu0 %v1771
    %1873 = vmatprep.subr.bf16.mxu0 0
    %1874 = vmatpush1.bf16.msra.mxu0 %v1772
    %1875 = vmatprep.subr.bf16.mxu0 0
    %1876 = vmatpush1.bf16.msra.mxu0 %v1773
    %1877 = vmatprep.subr.bf16.mxu0 0
    %1878 = vmatpush1.bf16.msra.mxu0 %v1774
    %1879 = vmatprep.subr.bf16.mxu0 0
    %1880 = vmatpush1.bf16.msra.mxu0 %v1775
    %1881 = vmatprep.mubr.bf16.mxu0 %v1544
    %1882 = vmatmul.mubr.bf16.gmra.mrb[0].mxu0 %v1543
    %v1883 = vpop.f32.mrb[0].mxu0
    %v1884 = vadd.f32 %v1843, %v1883
    %v1885 = vpop.f32.mrb[0].mxu0
    %v1886 = vpop.f32.mrb[0].mxu0
    %v1887 = vadd.f32 %v1846, %v1886
    %v1888 = vpop.f32.mrb[0].mxu0
    %1889 = vdwg.mxu0
    %v1890 = vmax.f32 %v1884, 0.0
    %v1891 = vmax.f32 %v1887, 0.0
    %v1892 = vpack.c.bf16 %v1891, %v1890
    %v1893 = vld [vmem:[#allocation8] sm:$0xf]
    %v1894 = vld [vmem:[#allocation8 + $0x4] sm:$0xf]
    %v1895 = vld [vmem:[#allocation8 + $0x8] sm:$0xf]
    %v1896 = vld [vmem:[#allocation8 + $0xc] sm:$0xf]
    %v1897 = vld [vmem:[#allocation8 + $0x10] sm:$0xf]
    %v1898 = vld [vmem:[#allocation8 + $0x14] sm:$0xf]
    %v1899 = vld [vmem:[#allocation8 + $0x18] sm:$0xf]
    %v1900 = vld [vmem:[#allocation8 + $0x1c] sm:$0xf]
    %v1901 = vld [vmem:[#allocation8 + $0x20] sm:$0xf]
    %v1902 = vld [vmem:[#allocation8 + $0x24] sm:$0xf]
    %v1903 = vld [vmem:[#allocation8 + $0x28] sm:$0xf]
    %v1904 = vld [vmem:[#allocation8 + $0x2c] sm:$0xf]
    %v1905 = vld [vmem:[#allocation8 + $0x30] sm:$0xf]
    %v1906 = vld [vmem:[#allocation8 + $0x34] sm:$0xf]
    %v1907 = vld [vmem:[#allocation8 + $0x38] sm:$0xf]
    %v1908 = vld [vmem:[#allocation8 + $0x3c] sm:$0xf]
    %v1909 = vld [vmem:[%s6] sm:$0x1]
    %v1911 = vlaneseq
    %v1912 = vshrl.u32 %v1911, 7
    %v1913 = vsub.s32 0, %v1912
    %v1914 = vrot.slane %v1909, %v1913
    %v1932 = vunpack.c.l.b16 %v1893
    %v1933 = vunpack.c.l.b16 %v1894
    %v1934 = vunpack.c.l.b16 %v1895
    %v1935 = vunpack.c.l.b16 %v1896
    %v1936 = vunpack.c.l.b16 %v1897
    %v1937 = vunpack.c.l.b16 %v1898
    %v1938 = vunpack.c.l.b16 %v1899
    %v1939 = vunpack.c.l.b16 %v1900
    %v1940 = vunpack.c.l.b16 %v1901
    %v1941 = vunpack.c.l.b16 %v1902
    %v1942 = vunpack.c.l.b16 %v1903
    %v1943 = vunpack.c.l.b16 %v1904
    %v1944 = vunpack.c.l.b16 %v1905
    %v1945 = vunpack.c.l.b16 %v1906
    %v1946 = vunpack.c.l.b16 %v1907
    %v1947 = vunpack.c.l.b16 %v1908
    %v1948 = vpack.c.b16 %v1933, %v1932
    %v1949 = vpack.c.b16 %v1935, %v1934
    %v1950 = vpack.c.b16 %v1937, %v1936
    %v1951 = vpack.c.b16 %v1939, %v1938
    %v1952 = vpack.c.b16 %v1941, %v1940
    %v1953 = vpack.c.b16 %v1943, %v1942
    %v1954 = vpack.c.b16 %v1945, %v1944
    %v1955 = vpack.c.b16 %v1947, %v1946
    %1964 = vmatprep.subr.bf16.mxu0 0
    %1965 = vmatpush1.bf16.msra.mxu0 %v1948
    %1966 = vmatprep.subr.bf16.mxu0 0
    %1967 = vmatpush1.bf16.msra.mxu0 %v1949
    %1968 = vmatprep.subr.bf16.mxu0 0
    %1969 = vmatpush1.bf16.msra.mxu0 %v1950
    %1970 = vmatprep.subr.bf16.mxu0 0
    %1971 = vmatpush1.bf16.msra.mxu0 %v1951
    %1972 = vmatprep.subr.bf16.mxu0 0
    %1973 = vmatpush1.bf16.msra.mxu0 %v1952
    %1974 = vmatprep.subr.bf16.mxu0 0
    %1975 = vmatpush1.bf16.msra.mxu0 %v1953
    %1976 = vmatprep.subr.bf16.mxu0 0
    %1977 = vmatpush1.bf16.msra.mxu0 %v1954
    %1978 = vmatprep.subr.bf16.mxu0 0
    %1979 = vmatpush1.bf16.msra.mxu0 %v1955
    %1980 = vmatprep.subr.bf16.mxu0 0
    %1981 = vmatpush1.bf16.msra.mxu0 0
    %1982 = vmatprep.subr.bf16.mxu0 0
    %1983 = vmatpush1.bf16.msra.mxu0 0
    %1984 = vmatprep.subr.bf16.mxu0 0
    %1985 = vmatpush1.bf16.msra.mxu0 0
    %1986 = vmatprep.subr.bf16.mxu0 0
    %1987 = vmatpush1.bf16.msra.mxu0 0
    %1988 = vmatprep.subr.bf16.mxu0 0
    %1989 = vmatpush1.bf16.msra.mxu0 0
    %1990 = vmatprep.subr.bf16.mxu0 0
    %1991 = vmatpush1.bf16.msra.mxu0 0
    %1992 = vmatprep.subr.bf16.mxu0 0
    %1993 = vmatpush1.bf16.msra.mxu0 0
    %1994 = vmatprep.subr.bf16.mxu0 0
    %1995 = vmatpush1.bf16.msra.mxu0 0
    %1996 = vmatprep.mubr.bf16.mxu0 0
    %1997 = vmatmul.mubr.bf16.gmra.mrb[0].mxu0 %v1892
    %v1998 = vpop.f32.mrb[0].mxu0
    %v1999 = vadd.f32 %v1914, %v1998
    %v2000 = vpop.f32.mrb[0].mxu0
    %v2001 = vpop.f32.mrb[0].mxu0
    %v2002 = vadd.f32 %v1914, %v2001
    %v2003 = vpop.f32.mrb[0].mxu0
    %2004 = vdwg.mxu0
    %v2005 = vmax.f32 %v1999, 0.0
    %v2006 = vmax.f32 %v2002, 0.0
    %2007 = vst [vmem:[#allocation10] sm:$0xff] %v2005
    %2008 = vst [vmem:[#allocation10 + $0x8] sm:$0xff] %v2006
    // Predicated region
    $region46: #{tpu_custom_call.1} parent=1 // pred_check
      _
    $region47: #{tpu_custom_call.1} parent=1 // pred_check_branch
      %2010 = sbr.rel (0) target = $region49
    $region48: #{tpu_custom_call.1} parent=1 // pred_region
      %s2012 = ssub.s32 256, 128
      %2013 = vsyncadd [#allocation4], %s2012
      %s2014 = sshll.u32 [#allocation10], 4
      %s2015 = int_to_ptr.vmem [resolvable:$true] %s2014
      %2020 = dma.vmem_to_hbm [thread:$0]  %s2015, 128, %s7, [#allocation4], 128, 128, 8
    $region49: #{tpu_custom_call.1} parent=1 // pred_fallthru
      _
    // Predicated region
    $region50: #{tpu_custom_call.1} parent=1 // pred_check
      _
    $region51: #{tpu_custom_call.1} parent=1 // pred_check_branch
      %2022 = sbr.rel (0) target = $region53
    $region52: #{tpu_custom_call.1} parent=1 // pred_region
      %2023 = dma.done [#allocation4], 256
    $region53: #{tpu_custom_call.1} parent=1 // pred_fallthru
      _
    %2024 = vsyncpa [#allocation3], 1
    %2025 = vsyncpa [#allocation6], 1
    %2026 = vsyncpa [#allocation9], 1
    %2027 = vsyncpa [#allocation4], 1

</llo_original>
